<compile_context>
chip_gen: v6e
topology: v6e:2x2x1
jax: 0.10.0
libtpu: 0.0.40
codegen_flags: <defaults>
</compile_context>

<pallas_src>
import functools
import math

import jax
import jax.numpy as jnp
from jax.experimental import pallas as pl
from jax.experimental.pallas import tpu as pltpu


_VMEM_LIMIT_BYTES = 48 * 1024 * 1024   # < v7x 64 MiB physical (headroom), >> 16/32 MiB scoped defaults
_UNROLL = 8                            # bounded unroll depth inside the time loop


def _round_up(x, m):
    return (x + m - 1) // m * m


def _gru_recurrence_kernel(gi_ref, whh_ref, bhn_ref, out_ref, h_scratch,
                           *, t_chunk, h_pad):
    """One (batch_block, time_chunk) grid step of the GRU recurrence.

    gi_ref : (T_chunk, B_blk, 3*H_pad) bf16  precomputed x@W_ih^T + merged biases (time-major)
    whh_ref: (H_pad, 3*H_pad)          bf16  W_hh^T, gate-padded (r|z|n), resident
    bhn_ref: (1, H_pad)                f32   b_hn (only bias that can't be pre-merged)
    out_ref: (T_chunk, B_blk, H_pad)         hidden state for every step (time-major)
    h_scratch: (B_blk, H_pad) f32            hidden state carried across time chunks
    """
    c = pl.program_id(1)

    @pl.when(c == 0)
    def _():
        h_scratch[...] = jnp.zeros_like(h_scratch)

    b_blk = h_scratch.shape[0]
    whh = whh_ref[...]                                          # bf16, loop-invariant
    # Hoist the b_hn broadcast out of the time loop (JAX does not CSE broadcast_in_dim).
    bhn_b = jnp.broadcast_to(bhn_ref[...], (b_blk, h_pad))      # f32 (B_blk, H_pad)

    h = h_scratch[...]                                          # f32, carried in vregs

    # Bounded-unroll time loop: fori_loop over groups of _UNROLL steps, each group
    # statically unrolled.  Keeps the MXU fed without spilling the 64-vreg file.
    # TODO(synk): for tiny batch, drive the MXU explicitly (matmul_push_rhs once per
    # chunk + matmul_acc_lhs/matmul_pop per step) to avoid re-pushing W_hh every step.
    def group(g, h):
        base = pl.multiple_of(g * _UNROLL, _UNROLL)
        for u in range(_UNROLL):
            t = base + u
            gi_t = gi_ref[t].astype(jnp.float32)                # (B_blk, 3*H_pad) contiguous
            gh = jnp.dot(h.astype(jnp.bfloat16), whh,           # bf16 x bf16 -> f32 on MXU
                         preferred_element_type=jnp.float32)
            r = jax.nn.sigmoid(gi_t[:, :h_pad] + gh[:, :h_pad])
            z = jax.nn.sigmoid(gi_t[:, h_pad:2 * h_pad] + gh[:, h_pad:2 * h_pad])
            n = jnp.tanh(gi_t[:, 2 * h_pad:] + r * (gh[:, 2 * h_pad:] + bhn_b))
            h = n + z * (h - n)                                 # == (1-z)*n + z*h
            out_ref[t] = h.astype(out_ref.dtype)                # contiguous (B_blk, H_pad) store
        return h

    h = jax.lax.fori_loop(0, t_chunk // _UNROLL, group, h)
    h_scratch[...] = h


def gru_forward(x, w_ih, w_hh, b_ih, b_hh, *, t_chunk=64, batch_block=None):
    """Single-layer, unidirectional, batch_first GRU with h0 = 0.

    x: (B, S, I) float32
    w_ih: (3H, I), w_hh: (3H, H), b_ih/b_hh: (3H,)  (PyTorch gate order r, z, n)
    Returns (out (B, S, H), h_n (1, B, H)) — same as nn.GRU(batch_first=True).
    """
    B, S, I = x.shape
    H = w_hh.shape[1]
    out_dtype = x.dtype
    h_pad = _round_up(H, 128)            # each gate occupies full 128-lane tiles
    G = 3 * h_pad
    # TODO(synk): for H << 128, pack the 3 gates into one shared 128-lane tile
    # instead of padding each gate to 128 (4x less zero traffic at H=32).

    # ---------- gate-padded weight / bias layout (bf16 operands) ----------
    def pad_cols(w):                     # (., H) -> (., h_pad)
        return jnp.pad(w, ((0, 0), (0, h_pad - H)))

    def pad_vec(b):                      # (H,) -> (h_pad,)
        return jnp.pad(b, (0, h_pad - H))

    w_ir, w_iz, w_in = w_ih[:H], w_ih[H:2 * H], w_ih[2 * H:]
    w_hr, w_hz, w_hn = w_hh[:H], w_hh[H:2 * H], w_hh[2 * H:]

    w_ih_t = jnp.concatenate(
        [pad_cols(w_ir.T), pad_cols(w_iz.T), pad_cols(w_in.T)],
        axis=1).astype(jnp.bfloat16)                                      # (I, G)
    w_hh_t = jnp.concatenate(
        [pad_cols(w_hr.T), pad_cols(w_hz.T), pad_cols(w_hn.T)], axis=1)   # (H, G)
    w_hh_t = jnp.pad(w_hh_t, ((0, h_pad - H), (0, 0))).astype(jnp.bfloat16)  # (h_pad, G)

    # b_ir+b_hr and b_iz+b_hz are merged into the precomputed input projection;
    # b_hn must stay inside r * ( . ) and is added in the kernel (f32).
    gi_bias = jnp.concatenate([pad_vec(b_ih[:H] + b_hh[:H]),
                               pad_vec(b_ih[H:2 * H] + b_hh[H:2 * H]),
                               pad_vec(b_ih[2 * H:])]).astype(jnp.float32)   # (G,)
    b_hn = pad_vec(b_hh[2 * H:]).astype(jnp.float32).reshape(1, h_pad)

    # ---------- batch blocking (grid axis 0, "parallel") ----------
    if batch_block is None:
        # B < 16: one block (single-TC chips / tiny batch).  B >= 16: two blocks so
        # the "parallel" axis actually feeds both TensorCores on v7x.
        b_blk = B if B < 16 else _round_up(pl.cdiv(B, 2), 8)
    else:
        b_blk = batch_block
    n_b = pl.cdiv(B, b_blk)
    b_pad = n_b * b_blk

    # ---------- time chunking (grid axis 1, "arbitrary"), sized from VMEM ----------
    out_itemsize = jnp.dtype(out_dtype).itemsize
    weight_bytes = 2 * (h_pad * G + h_pad) * 2          # worst case: double-buffered bf16 weights
    per_step_bytes = 2 * b_blk * (G * 2 + h_pad * out_itemsize)   # gi(bf16)+out, double-buffered
    budget = int(0.75 * _VMEM_LIMIT_BYTES) - weight_bytes
    max_tc = max(_UNROLL, (budget // max(per_step_bytes, 1)) // _UNROLL * _UNROLL)
    tc = _round_up(min(t_chunk, S, max_tc), _UNROLL)
    s_pad = _round_up(S, tc)
    n_c = s_pad // tc

    # ---------- hoisted input projection: one big bf16 matmul, time-major ----------
    x_t = jnp.swapaxes(x, 0, 1).reshape(S * B, I)                       # (S*B, I)
    gi = jnp.dot(x_t.astype(jnp.bfloat16), w_ih_t,
                 preferred_element_type=jnp.float32) + gi_bias           # f32 accumulate
    gi = gi.reshape(S, B, G).astype(jnp.bfloat16)                        # bf16 transfer
    gi = jnp.pad(gi, ((0, s_pad - S), (0, b_pad - B), (0, 0)))           # (s_pad, b_pad, G)

    kernel = functools.partial(_gru_recurrence_kernel, t_chunk=tc, h_pad=h_pad)

    def build(single_buffer_weights):
        resident = {"pipeline_mode": pl.Buffered(1)} if single_buffer_weights else {}
        return pl.pallas_call(
            kernel,
            out_shape=jax.ShapeDtypeStruct((s_pad, b_pad, h_pad), out_dtype),
            grid_spec=pltpu.PrefetchScalarGridSpec(
                num_scalar_prefetch=0,
                grid=(n_b, n_c),                                        # (batch blocks, time chunks)
                in_specs=[
                    pl.BlockSpec((tc, b_blk, G), lambda b, c: (c, b, 0)),          # gi chunk
                    pl.BlockSpec((h_pad, G), lambda b, c: (0, 0), **resident),     # W_hh^T resident
                    pl.BlockSpec((1, h_pad), lambda b, c: (0, 0), **resident),     # b_hn resident
                ],
                out_specs=pl.BlockSpec((tc, b_blk, h_pad), lambda b, c: (c, b, 0)),
                scratch_shapes=[pltpu.VMEM((b_blk, h_pad), jnp.float32)],  # carried hidden state
            ),
            compiler_params=pltpu.CompilerParams(
                # batch axis independent (sharded across TCs on v7x);
                # time-chunk axis carries the recurrence -> sequential.
                dimension_semantics=("parallel", "arbitrary"),
                vmem_limit_bytes=_VMEM_LIMIT_BYTES,
            ),
        )

    try:
        out_pad = build(True)(gi, w_hh_t, b_hn)
    except Exception:
        # pipeline_mode=pl.Buffered(1) not supported by this jax/Mosaic version:
        # fall back to default double-buffered resident weights (same semantics).
        out_pad = build(False)(gi, w_hh_t, b_hn)

    out_tm = out_pad[:S, :B, :H]          # (S, B, H) time-major (padded steps/rows dropped)
    out = jnp.swapaxes(out_tm, 0, 1)      # (B, S, H) batch_first
    h_n = out_tm[S - 1][None]             # (1, B, H): hidden state after last real step
    return out, h_n


def _gru_reference(x, w_ih, w_hh, b_ih, b_hh):
    """Pure-JAX f32 reference (same math as nn.GRU, batch_first)."""
    B, S, I = x.shape
    H = w_hh.shape[1]

    def step(h, x_t):
        gi = x_t @ w_ih.T + b_ih
        gh = h @ w_hh.T + b_hh
        i_r, i_z, i_n = gi[:, :H], gi[:, H:2 * H], gi[:, 2 * H:]
        h_r, h_z, h_nn = gh[:, :H], gh[:, H:2 * H], gh[:, 2 * H:]
        r = jax.nn.sigmoid(i_r + h_r)
        z = jax.nn.sigmoid(i_z + h_z)
        n = jnp.tanh(i_n + r * h_nn)
        h_new = (1.0 - z) * n + z * h
        return h_new, h_new

    h0 = jnp.zeros((B, H), x.dtype)
    h_last, out = jax.lax.scan(step, h0, jnp.transpose(x, (1, 0, 2)))
    return jnp.transpose(out, (1, 0, 2)), h_last[None]


if __name__ == "__main__":
    # Module: GRU(input_num, hidden_num) -> nn.GRU(input_size, hidden_size, batch_first=True)
    B, S, I, H = 2, 8, 4, 32

    key = jax.random.PRNGKey(0)
    k_x, k1, k2, k3, k4 = jax.random.split(key, 5)

    stdv = 1.0 / math.sqrt(H)  # PyTorch default uniform(-1/sqrt(H), 1/sqrt(H))
    w_ih = jax.random.uniform(k1, (3 * H, I), jnp.float32, -stdv, stdv)
    w_hh = jax.random.uniform(k2, (3 * H, H), jnp.float32, -stdv, stdv)
    b_ih = jax.random.uniform(k3, (3 * H,), jnp.float32, -stdv, stdv)
    b_hh = jax.random.uniform(k4, (3 * H,), jnp.float32, -stdv, stdv)

    x = jax.random.normal(k_x, (B, S, I), jnp.float32)

    out, h_n = jax.block_until_ready(gru_forward(x, w_ih, w_hh, b_ih, b_hh))

    out_ref, h_ref = _gru_reference(x, w_ih, w_hh, b_ih, b_hh)
    assert out.shape == (B, S, H) and h_n.shape == (1, B, H)
    # bf16 MXU operands (f32 accumulation / gate math) -> relaxed tolerance vs f32 reference.
    assert jnp.allclose(out, out_ref, rtol=2e-2, atol=2e-2)
    assert jnp.allclose(h_n, h_ref, rtol=2e-2, atol=2e-2)

    print("KERNEL_OK")
</pallas_src>

<mosaic_0001>
module attributes {stable_mosaic.version = 11 : i64} {
  func.func @_gru_recurrence_kernel(%arg0: i32, %arg1: i32, %arg2: memref<8x2x384xbf16, #tpu.memory_space<vmem>>, %arg3: memref<128x384xbf16, #tpu.memory_space<vmem>>, %arg4: memref<1x128xf32, #tpu.memory_space<vmem>>, %arg5: memref<8x2x128xf32, #tpu.memory_space<vmem>>, %arg6: memref<2x128xf32, #tpu.memory_space<vmem>>) attributes {dimension_semantics = [#tpu.dimension_semantics<parallel>, #tpu.dimension_semantics<arbitrary>], iteration_bounds = array<i64: 1, 1>, scalar_prefetch = 0 : i64, scratch_operands = 1 : i64, tpu.core_type = #tpu.core_type<tc>, window_params = [{transform_indices = @transform_0, window_bounds = array<i64: 8, 2, 384>}, {pipeline_mode = #tpu.pipeline_mode<synchronous>, transform_indices = @transform_1, window_bounds = array<i64: 128, 384>}, {pipeline_mode = #tpu.pipeline_mode<synchronous>, transform_indices = @transform_2, window_bounds = array<i64: 1, 128>}, {transform_indices = @transform_3, window_bounds = array<i64: 8, 2, 128>}]} {
    %c0_i32 = arith.constant 0 : i32
    %0 = arith.cmpi eq, %arg1, %c0_i32 : i32
    %1 = arith.extui %0 : i1 to i32
    %c0_i32_0 = arith.constant 0 : i32
    %2 = arith.cmpi ne, %1, %c0_i32_0 : i32
    scf.if %2 {
      %cst_66 = arith.constant 0.000000e+00 : f32
      %299 = vector.broadcast %cst_66 : f32 to vector<2x128xf32>
      %c0_67 = arith.constant 0 : index
      %c0_68 = arith.constant 0 : index
      %300 = vector.load %arg6[%c0_67, %c0_68] : memref<2x128xf32, #tpu.memory_space<vmem>>, vector<2x128xf32>
      tpu.vector_store %arg6[%c0_67, %c0_68], %299 {strides = array<i32>} : memref<2x128xf32, #tpu.memory_space<vmem>>, vector<2x128xf32>,
    } else {
    }
    %c0 = arith.constant 0 : index
    %c0_1 = arith.constant 0 : index
    %3 = vector.load %arg3[%c0, %c0_1] : memref<128x384xbf16, #tpu.memory_space<vmem>>, vector<128x384xbf16>
    %c0_2 = arith.constant 0 : index
    %c0_3 = arith.constant 0 : index
    %4 = vector.load %arg4[%c0_2, %c0_3] : memref<1x128xf32, #tpu.memory_space<vmem>>, vector<1x128xf32>
    %5 = vector.shape_cast %4 : vector<1x128xf32> to vector<1x128xf32>
    %6 = vector.broadcast %5 : vector<1x128xf32> to vector<2x128xf32>
    %c0_4 = arith.constant 0 : index
    %c0_5 = arith.constant 0 : index
    %7 = vector.load %arg6[%c0_4, %c0_5] : memref<2x128xf32, #tpu.memory_space<vmem>>, vector<2x128xf32>
    %c0_i32_6 = arith.constant 0 : i32
    %c8_i32 = arith.constant 8 : i32
    %8 = arith.muli %c0_i32_6, %c8_i32 : i32
    %9 = tpu.assume_multiple %8, 8 : i32
    %c0_i32_7 = arith.constant 0 : i32
    %10 = arith.addi %9, %c0_i32_7 : i32
    %11 = arith.index_cast %10 : i32 to index
    %c0_8 = arith.constant 0 : index
    %c0_9 = arith.constant 0 : index
    %12 = vector.load %arg2[%11, %c0_8, %c0_9] : memref<8x2x384xbf16, #tpu.memory_space<vmem>>, vector<1x2x384xbf16>
    %13 = vector.shape_cast %12 : vector<1x2x384xbf16> to vector<2x384xbf16>
    %14 = arith.extf %13 : vector<2x384xbf16> to vector<2x384xf32>
    %15 = arith.truncf %7 : vector<2x128xf32> to vector<2x128xbf16>
    %cst = arith.constant dense<0.000000e+00> : vector<2x384xf32>
    %16 = tpu.matmul %15, %3, %cst {dimension_numbers = #tpu.dot_dimension_numbers<[1], [0], [0], [1], [0, 0, 1, 1], [], []>} : vector<2x128xbf16>, vector<128x384xbf16>, vector<2x384xf32> -> vector<2x384xf32>
    %17 = vector.extract_strided_slice %14 {offsets = [0, 0], sizes = [2, 128], strides = [1, 1]} : vector<2x384xf32> to vector<2x128xf32>
    %18 = vector.extract_strided_slice %16 {offsets = [0, 0], sizes = [2, 128], strides = [1, 1]} : vector<2x384xf32> to vector<2x128xf32>
    %19 = arith.addf %17, %18 : vector<2x128xf32>
    %20 = arith.negf %19 : vector<2x128xf32>
    %21 = math.exp %20 : vector<2x128xf32>
    %cst_10 = arith.constant 1.000000e+00 : f32
    %22 = vector.broadcast %cst_10 : f32 to vector<2x128xf32>
    %23 = arith.addf %22, %21 : vector<2x128xf32>
    %24 = arith.divf %22, %23 : vector<2x128xf32>
    %25 = vector.extract_strided_slice %14 {offsets = [0, 128], sizes = [2, 128], strides = [1, 1]} : vector<2x384xf32> to vector<2x128xf32>
    %26 = vector.extract_strided_slice %16 {offsets = [0, 128], sizes = [2, 128], strides = [1, 1]} : vector<2x384xf32> to vector<2x128xf32>
    %27 = arith.addf %25, %26 : vector<2x128xf32>
    %28 = arith.negf %27 : vector<2x128xf32>
    %29 = math.exp %28 : vector<2x128xf32>
    %cst_11 = arith.constant 1.000000e+00 : f32
    %30 = vector.broadcast %cst_11 : f32 to vector<2x128xf32>
    %31 = arith.addf %30, %29 : vector<2x128xf32>
    %32 = arith.divf %30, %31 : vector<2x128xf32>
    %33 = vector.extract_strided_slice %14 {offsets = [0, 256], sizes = [2, 128], strides = [1, 1]} : vector<2x384xf32> to vector<2x128xf32>
    %34 = vector.extract_strided_slice %16 {offsets = [0, 256], sizes = [2, 128], strides = [1, 1]} : vector<2x384xf32> to vector<2x128xf32>
    %35 = arith.addf %34, %6 : vector<2x128xf32>
    %36 = arith.mulf %24, %35 : vector<2x128xf32>
    %37 = arith.addf %33, %36 : vector<2x128xf32>
    %38 = math.tanh %37 : vector<2x128xf32>
    %39 = arith.subf %7, %38 : vector<2x128xf32>
    %40 = arith.mulf %32, %39 : vector<2x128xf32>
    %41 = arith.addf %38, %40 : vector<2x128xf32>
    %42 = arith.index_cast %10 : i32 to index
    %c0_12 = arith.constant 0 : index
    %c0_13 = arith.constant 0 : index
    %43 = vector.load %arg5[%42, %c0_12, %c0_13] : memref<8x2x128xf32, #tpu.memory_space<vmem>>, vector<1x2x128xf32>
    %44 = vector.shape_cast %43 : vector<1x2x128xf32> to vector<2x128xf32>
    %45 = vector.shape_cast %41 : vector<2x128xf32> to vector<1x2x128xf32>
    tpu.vector_store %arg5[%42, %c0_12, %c0_13], %45 {strides = array<i32>} : memref<8x2x128xf32, #tpu.memory_space<vmem>>, vector<1x2x128xf32>,
    %c1_i32 = arith.constant 1 : i32
    %46 = arith.addi %9, %c1_i32 : i32
    %47 = arith.index_cast %46 : i32 to index
    %c0_14 = arith.constant 0 : index
    %c0_15 = arith.constant 0 : index
    %48 = vector.load %arg2[%47, %c0_14, %c0_15] : memref<8x2x384xbf16, #tpu.memory_space<vmem>>, vector<1x2x384xbf16>
    %49 = vector.shape_cast %48 : vector<1x2x384xbf16> to vector<2x384xbf16>
    %50 = arith.extf %49 : vector<2x384xbf16> to vector<2x384xf32>
    %51 = arith.truncf %41 : vector<2x128xf32> to vector<2x128xbf16>
    %cst_16 = arith.constant dense<0.000000e+00> : vector<2x384xf32>
    %52 = tpu.matmul %51, %3, %cst_16 {dimension_numbers = #tpu.dot_dimension_numbers<[1], [0], [0], [1], [0, 0, 1, 1], [], []>} : vector<2x128xbf16>, vector<128x384xbf16>, vector<2x384xf32> -> vector<2x384xf32>
    %53 = vector.extract_strided_slice %50 {offsets = [0, 0], sizes = [2, 128], strides = [1, 1]} : vector<2x384xf32> to vector<2x128xf32>
    %54 = vector.extract_strided_slice %52 {offsets = [0, 0], sizes = [2, 128], strides = [1, 1]} : vector<2x384xf32> to vector<2x128xf32>
    %55 = arith.addf %53, %54 : vector<2x128xf32>
    %56 = arith.negf %55 : vector<2x128xf32>
    %57 = math.exp %56 : vector<2x128xf32>
    %cst_17 = arith.constant 1.000000e+00 : f32
    %58 = vector.broadcast %cst_17 : f32 to vector<2x128xf32>
    %59 = arith.addf %58, %57 : vector<2x128xf32>
    %60 = arith.divf %58, %59 : vector<2x128xf32>
    %61 = vector.extract_strided_slice %50 {offsets = [0, 128], sizes = [2, 128], strides = [1, 1]} : vector<2x384xf32> to vector<2x128xf32>
    %62 = vector.extract_strided_slice %52 {offsets = [0, 128], sizes = [2, 128], strides = [1, 1]} : vector<2x384xf32> to vector<2x128xf32>
    %63 = arith.addf %61, %62 : vector<2x128xf32>
    %64 = arith.negf %63 : vector<2x128xf32>
    %65 = math.exp %64 : vector<2x128xf32>
    %cst_18 = arith.constant 1.000000e+00 : f32
    %66 = vector.broadcast %cst_18 : f32 to vector<2x128xf32>
    %67 = arith.addf %66, %65 : vector<2x128xf32>
    %68 = arith.divf %66, %67 : vector<2x128xf32>
    %69 = vector.extract_strided_slice %50 {offsets = [0, 256], sizes = [2, 128], strides = [1, 1]} : vector<2x384xf32> to vector<2x128xf32>
    %70 = vector.extract_strided_slice %52 {offsets = [0, 256], sizes = [2, 128], strides = [1, 1]} : vector<2x384xf32> to vector<2x128xf32>
    %71 = arith.addf %70, %6 : vector<2x128xf32>
    %72 = arith.mulf %60, %71 : vector<2x128xf32>
    %73 = arith.addf %69, %72 : vector<2x128xf32>
    %74 = math.tanh %73 : vector<2x128xf32>
    %75 = arith.subf %41, %74 : vector<2x128xf32>
    %76 = arith.mulf %68, %75 : vector<2x128xf32>
    %77 = arith.addf %74, %76 : vector<2x128xf32>
    %78 = arith.index_cast %46 : i32 to index
    %c0_19 = arith.constant 0 : index
    %c0_20 = arith.constant 0 : index
    %79 = vector.load %arg5[%78, %c0_19, %c0_20] : memref<8x2x128xf32, #tpu.memory_space<vmem>>, vector<1x2x128xf32>
    %80 = vector.shape_cast %79 : vector<1x2x128xf32> to vector<2x128xf32>
    %81 = vector.shape_cast %77 : vector<2x128xf32> to vector<1x2x128xf32>
    tpu.vector_store %arg5[%78, %c0_19, %c0_20], %81 {strides = array<i32>} : memref<8x2x128xf32, #tpu.memory_space<vmem>>, vector<1x2x128xf32>,
    %c2_i32 = arith.constant 2 : i32
    %82 = arith.addi %9, %c2_i32 : i32
    %83 = arith.index_cast %82 : i32 to index
    %c0_21 = arith.constant 0 : index
    %c0_22 = arith.constant 0 : index
    %84 = vector.load %arg2[%83, %c0_21, %c0_22] : memref<8x2x384xbf16, #tpu.memory_space<vmem>>, vector<1x2x384xbf16>
    %85 = vector.shape_cast %84 : vector<1x2x384xbf16> to vector<2x384xbf16>
    %86 = arith.extf %85 : vector<2x384xbf16> to vector<2x384xf32>
    %87 = arith.truncf %77 : vector<2x128xf32> to vector<2x128xbf16>
    %cst_23 = arith.constant dense<0.000000e+00> : vector<2x384xf32>
    %88 = tpu.matmul %87, %3, %cst_23 {dimension_numbers = #tpu.dot_dimension_numbers<[1], [0], [0], [1], [0, 0, 1, 1], [], []>} : vector<2x128xbf16>, vector<128x384xbf16>, vector<2x384xf32> -> vector<2x384xf32>
    %89 = vector.extract_strided_slice %86 {offsets = [0, 0], sizes = [2, 128], strides = [1, 1]} : vector<2x384xf32> to vector<2x128xf32>
    %90 = vector.extract_strided_slice %88 {offsets = [0, 0], sizes = [2, 128], strides = [1, 1]} : vector<2x384xf32> to vector<2x128xf32>
    %91 = arith.addf %89, %90 : vector<2x128xf32>
    %92 = arith.negf %91 : vector<2x128xf32>
    %93 = math.exp %92 : vector<2x128xf32>
    %cst_24 = arith.constant 1.000000e+00 : f32
    %94 = vector.broadcast %cst_24 : f32 to vector<2x128xf32>
    %95 = arith.addf %94, %93 : vector<2x128xf32>
    %96 = arith.divf %94, %95 : vector<2x128xf32>
    %97 = vector.extract_strided_slice %86 {offsets = [0, 128], sizes = [2, 128], strides = [1, 1]} : vector<2x384xf32> to vector<2x128xf32>
    %98 = vector.extract_strided_slice %88 {offsets = [0, 128], sizes = [2, 128], strides = [1, 1]} : vector<2x384xf32> to vector<2x128xf32>
    %99 = arith.addf %97, %98 : vector<2x128xf32>
    %100 = arith.negf %99 : vector<2x128xf32>
    %101 = math.exp %100 : vector<2x128xf32>
    %cst_25 = arith.constant 1.000000e+00 : f32
    %102 = vector.broadcast %cst_25 : f32 to vector<2x128xf32>
    %103 = arith.addf %102, %101 : vector<2x128xf32>
    %104 = arith.divf %102, %103 : vector<2x128xf32>
    %105 = vector.extract_strided_slice %86 {offsets = [0, 256], sizes = [2, 128], strides = [1, 1]} : vector<2x384xf32> to vector<2x128xf32>
    %106 = vector.extract_strided_slice %88 {offsets = [0, 256], sizes = [2, 128], strides = [1, 1]} : vector<2x384xf32> to vector<2x128xf32>
    %107 = arith.addf %106, %6 : vector<2x128xf32>
    %108 = arith.mulf %96, %107 : vector<2x128xf32>
    %109 = arith.addf %105, %108 : vector<2x128xf32>
    %110 = math.tanh %109 : vector<2x128xf32>
    %111 = arith.subf %77, %110 : vector<2x128xf32>
    %112 = arith.mulf %104, %111 : vector<2x128xf32>
    %113 = arith.addf %110, %112 : vector<2x128xf32>
    %114 = arith.index_cast %82 : i32 to index
    %c0_26 = arith.constant 0 : index
    %c0_27 = arith.constant 0 : index
    %115 = vector.load %arg5[%114, %c0_26, %c0_27] : memref<8x2x128xf32, #tpu.memory_space<vmem>>, vector<1x2x128xf32>
    %116 = vector.shape_cast %115 : vector<1x2x128xf32> to vector<2x128xf32>
    %117 = vector.shape_cast %113 : vector<2x128xf32> to vector<1x2x128xf32>
    tpu.vector_store %arg5[%114, %c0_26, %c0_27], %117 {strides = array<i32>} : memref<8x2x128xf32, #tpu.memory_space<vmem>>, vector<1x2x128xf32>,
    %c3_i32 = arith.constant 3 : i32
    %118 = arith.addi %9, %c3_i32 : i32
    %119 = arith.index_cast %118 : i32 to index
    %c0_28 = arith.constant 0 : index
    %c0_29 = arith.constant 0 : index
    %120 = vector.load %arg2[%119, %c0_28, %c0_29] : memref<8x2x384xbf16, #tpu.memory_space<vmem>>, vector<1x2x384xbf16>
    %121 = vector.shape_cast %120 : vector<1x2x384xbf16> to vector<2x384xbf16>
    %122 = arith.extf %121 : vector<2x384xbf16> to vector<2x384xf32>
    %123 = arith.truncf %113 : vector<2x128xf32> to vector<2x128xbf16>
    %cst_30 = arith.constant dense<0.000000e+00> : vector<2x384xf32>
    %124 = tpu.matmul %123, %3, %cst_30 {dimension_numbers = #tpu.dot_dimension_numbers<[1], [0], [0], [1], [0, 0, 1, 1], [], []>} : vector<2x128xbf16>, vector<128x384xbf16>, vector<2x384xf32> -> vector<2x384xf32>
    %125 = vector.extract_strided_slice %122 {offsets = [0, 0], sizes = [2, 128], strides = [1, 1]} : vector<2x384xf32> to vector<2x128xf32>
    %126 = vector.extract_strided_slice %124 {offsets = [0, 0], sizes = [2, 128], strides = [1, 1]} : vector<2x384xf32> to vector<2x128xf32>
    %127 = arith.addf %125, %126 : vector<2x128xf32>
    %128 = arith.negf %127 : vector<2x128xf32>
    %129 = math.exp %128 : vector<2x128xf32>
    %cst_31 = arith.constant 1.000000e+00 : f32
    %130 = vector.broadcast %cst_31 : f32 to vector<2x128xf32>
    %131 = arith.addf %130, %129 : vector<2x128xf32>
    %132 = arith.divf %130, %131 : vector<2x128xf32>
    %133 = vector.extract_strided_slice %122 {offsets = [0, 128], sizes = [2, 128], strides = [1, 1]} : vector<2x384xf32> to vector<2x128xf32>
    %134 = vector.extract_strided_slice %124 {offsets = [0, 128], sizes = [2, 128], strides = [1, 1]} : vector<2x384xf32> to vector<2x128xf32>
    %135 = arith.addf %133, %134 : vector<2x128xf32>
    %136 = arith.negf %135 : vector<2x128xf32>
    %137 = math.exp %136 : vector<2x128xf32>
    %cst_32 = arith.constant 1.000000e+00 : f32
    %138 = vector.broadcast %cst_32 : f32 to vector<2x128xf32>
    %139 = arith.addf %138, %137 : vector<2x128xf32>
    %140 = arith.divf %138, %139 : vector<2x128xf32>
    %141 = vector.extract_strided_slice %122 {offsets = [0, 256], sizes = [2, 128], strides = [1, 1]} : vector<2x384xf32> to vector<2x128xf32>
    %142 = vector.extract_strided_slice %124 {offsets = [0, 256], sizes = [2, 128], strides = [1, 1]} : vector<2x384xf32> to vector<2x128xf32>
    %143 = arith.addf %142, %6 : vector<2x128xf32>
    %144 = arith.mulf %132, %143 : vector<2x128xf32>
    %145 = arith.addf %141, %144 : vector<2x128xf32>
    %146 = math.tanh %145 : vector<2x128xf32>
    %147 = arith.subf %113, %146 : vector<2x128xf32>
    %148 = arith.mulf %140, %147 : vector<2x128xf32>
    %149 = arith.addf %146, %148 : vector<2x128xf32>
    %150 = arith.index_cast %118 : i32 to index
    %c0_33 = arith.constant 0 : index
    %c0_34 = arith.constant 0 : index
    %151 = vector.load %arg5[%150, %c0_33, %c0_34] : memref<8x2x128xf32, #tpu.memory_space<vmem>>, vector<1x2x128xf32>
    %152 = vector.shape_cast %151 : vector<1x2x128xf32> to vector<2x128xf32>
    %153 = vector.shape_cast %149 : vector<2x128xf32> to vector<1x2x128xf32>
    tpu.vector_store %arg5[%150, %c0_33, %c0_34], %153 {strides = array<i32>} : memref<8x2x128xf32, #tpu.memory_space<vmem>>, vector<1x2x128xf32>,
    %c4_i32 = arith.constant 4 : i32
    %154 = arith.addi %9, %c4_i32 : i32
    %155 = arith.index_cast %154 : i32 to index
    %c0_35 = arith.constant 0 : index
    %c0_36 = arith.constant 0 : index
    %156 = vector.load %arg2[%155, %c0_35, %c0_36] : memref<8x2x384xbf16, #tpu.memory_space<vmem>>, vector<1x2x384xbf16>
    %157 = vector.shape_cast %156 : vector<1x2x384xbf16> to vector<2x384xbf16>
    %158 = arith.extf %157 : vector<2x384xbf16> to vector<2x384xf32>
    %159 = arith.truncf %149 : vector<2x128xf32> to vector<2x128xbf16>
    %cst_37 = arith.constant dense<0.000000e+00> : vector<2x384xf32>
    %160 = tpu.matmul %159, %3, %cst_37 {dimension_numbers = #tpu.dot_dimension_numbers<[1], [0], [0], [1], [0, 0, 1, 1], [], []>} : vector<2x128xbf16>, vector<128x384xbf16>, vector<2x384xf32> -> vector<2x384xf32>
    %161 = vector.extract_strided_slice %158 {offsets = [0, 0], sizes = [2, 128], strides = [1, 1]} : vector<2x384xf32> to vector<2x128xf32>
    %162 = vector.extract_strided_slice %160 {offsets = [0, 0], sizes = [2, 128], strides = [1, 1]} : vector<2x384xf32> to vector<2x128xf32>
    %163 = arith.addf %161, %162 : vector<2x128xf32>
    %164 = arith.negf %163 : vector<2x128xf32>
    %165 = math.exp %164 : vector<2x128xf32>
    %cst_38 = arith.constant 1.000000e+00 : f32
    %166 = vector.broadcast %cst_38 : f32 to vector<2x128xf32>
    %167 = arith.addf %166, %165 : vector<2x128xf32>
    %168 = arith.divf %166, %167 : vector<2x128xf32>
    %169 = vector.extract_strided_slice %158 {offsets = [0, 128], sizes = [2, 128], strides = [1, 1]} : vector<2x384xf32> to vector<2x128xf32>
    %170 = vector.extract_strided_slice %160 {offsets = [0, 128], sizes = [2, 128], strides = [1, 1]} : vector<2x384xf32> to vector<2x128xf32>
    %171 = arith.addf %169, %170 : vector<2x128xf32>
    %172 = arith.negf %171 : vector<2x128xf32>
    %173 = math.exp %172 : vector<2x128xf32>
    %cst_39 = arith.constant 1.000000e+00 : f32
    %174 = vector.broadcast %cst_39 : f32 to vector<2x128xf32>
    %175 = arith.addf %174, %173 : vector<2x128xf32>
    %176 = arith.divf %174, %175 : vector<2x128xf32>
    %177 = vector.extract_strided_slice %158 {offsets = [0, 256], sizes = [2, 128], strides = [1, 1]} : vector<2x384xf32> to vector<2x128xf32>
    %178 = vector.extract_strided_slice %160 {offsets = [0, 256], sizes = [2, 128], strides = [1, 1]} : vector<2x384xf32> to vector<2x128xf32>
    %179 = arith.addf %178, %6 : vector<2x128xf32>
    %180 = arith.mulf %168, %179 : vector<2x128xf32>
    %181 = arith.addf %177, %180 : vector<2x128xf32>
    %182 = math.tanh %181 : vector<2x128xf32>
    %183 = arith.subf %149, %182 : vector<2x128xf32>
    %184 = arith.mulf %176, %183 : vector<2x128xf32>
    %185 = arith.addf %182, %184 : vector<2x128xf32>
    %186 = arith.index_cast %154 : i32 to index
    %c0_40 = arith.constant 0 : index
    %c0_41 = arith.constant 0 : index
    %187 = vector.load %arg5[%186, %c0_40, %c0_41] : memref<8x2x128xf32, #tpu.memory_space<vmem>>, vector<1x2x128xf32>
    %188 = vector.shape_cast %187 : vector<1x2x128xf32> to vector<2x128xf32>
    %189 = vector.shape_cast %185 : vector<2x128xf32> to vector<1x2x128xf32>
    tpu.vector_store %arg5[%186, %c0_40, %c0_41], %189 {strides = array<i32>} : memref<8x2x128xf32, #tpu.memory_space<vmem>>, vector<1x2x128xf32>,
    %c5_i32 = arith.constant 5 : i32
    %190 = arith.addi %9, %c5_i32 : i32
    %191 = arith.index_cast %190 : i32 to index
    %c0_42 = arith.constant 0 : index
    %c0_43 = arith.constant 0 : index
    %192 = vector.load %arg2[%191, %c0_42, %c0_43] : memref<8x2x384xbf16, #tpu.memory_space<vmem>>, vector<1x2x384xbf16>
    %193 = vector.shape_cast %192 : vector<1x2x384xbf16> to vector<2x384xbf16>
    %194 = arith.extf %193 : vector<2x384xbf16> to vector<2x384xf32>
    %195 = arith.truncf %185 : vector<2x128xf32> to vector<2x128xbf16>
    %cst_44 = arith.constant dense<0.000000e+00> : vector<2x384xf32>
    %196 = tpu.matmul %195, %3, %cst_44 {dimension_numbers = #tpu.dot_dimension_numbers<[1], [0], [0], [1], [0, 0, 1, 1], [], []>} : vector<2x128xbf16>, vector<128x384xbf16>, vector<2x384xf32> -> vector<2x384xf32>
    %197 = vector.extract_strided_slice %194 {offsets = [0, 0], sizes = [2, 128], strides = [1, 1]} : vector<2x384xf32> to vector<2x128xf32>
    %198 = vector.extract_strided_slice %196 {offsets = [0, 0], sizes = [2, 128], strides = [1, 1]} : vector<2x384xf32> to vector<2x128xf32>
    %199 = arith.addf %197, %198 : vector<2x128xf32>
    %200 = arith.negf %199 : vector<2x128xf32>
    %201 = math.exp %200 : vector<2x128xf32>
    %cst_45 = arith.constant 1.000000e+00 : f32
    %202 = vector.broadcast %cst_45 : f32 to vector<2x128xf32>
    %203 = arith.addf %202, %201 : vector<2x128xf32>
    %204 = arith.divf %202, %203 : vector<2x128xf32>
    %205 = vector.extract_strided_slice %194 {offsets = [0, 128], sizes = [2, 128], strides = [1, 1]} : vector<2x384xf32> to vector<2x128xf32>
    %206 = vector.extract_strided_slice %196 {offsets = [0, 128], sizes = [2, 128], strides = [1, 1]} : vector<2x384xf32> to vector<2x128xf32>
    %207 = arith.addf %205, %206 : vector<2x128xf32>
    %208 = arith.negf %207 : vector<2x128xf32>
    %209 = math.exp %208 : vector<2x128xf32>
    %cst_46 = arith.constant 1.000000e+00 : f32
    %210 = vector.broadcast %cst_46 : f32 to vector<2x128xf32>
    %211 = arith.addf %210, %209 : vector<2x128xf32>
    %212 = arith.divf %210, %211 : vector<2x128xf32>
    %213 = vector.extract_strided_slice %194 {offsets = [0, 256], sizes = [2, 128], strides = [1, 1]} : vector<2x384xf32> to vector<2x128xf32>
    %214 = vector.extract_strided_slice %196 {offsets = [0, 256], sizes = [2, 128], strides = [1, 1]} : vector<2x384xf32> to vector<2x128xf32>
    %215 = arith.addf %214, %6 : vector<2x128xf32>
    %216 = arith.mulf %204, %215 : vector<2x128xf32>
    %217 = arith.addf %213, %216 : vector<2x128xf32>
    %218 = math.tanh %217 : vector<2x128xf32>
    %219 = arith.subf %185, %218 : vector<2x128xf32>
    %220 = arith.mulf %212, %219 : vector<2x128xf32>
    %221 = arith.addf %218, %220 : vector<2x128xf32>
    %222 = arith.index_cast %190 : i32 to index
    %c0_47 = arith.constant 0 : index
    %c0_48 = arith.constant 0 : index
    %223 = vector.load %arg5[%222, %c0_47, %c0_48] : memref<8x2x128xf32, #tpu.memory_space<vmem>>, vector<1x2x128xf32>
    %224 = vector.shape_cast %223 : vector<1x2x128xf32> to vector<2x128xf32>
    %225 = vector.shape_cast %221 : vector<2x128xf32> to vector<1x2x128xf32>
    tpu.vector_store %arg5[%222, %c0_47, %c0_48], %225 {strides = array<i32>} : memref<8x2x128xf32, #tpu.memory_space<vmem>>, vector<1x2x128xf32>,
    %c6_i32 = arith.constant 6 : i32
    %226 = arith.addi %9, %c6_i32 : i32
    %227 = arith.index_cast %226 : i32 to index
    %c0_49 = arith.constant 0 : index
    %c0_50 = arith.constant 0 : index
    %228 = vector.load %arg2[%227, %c0_49, %c0_50] : memref<8x2x384xbf16, #tpu.memory_space<vmem>>, vector<1x2x384xbf16>
    %229 = vector.shape_cast %228 : vector<1x2x384xbf16> to vector<2x384xbf16>
    %230 = arith.extf %229 : vector<2x384xbf16> to vector<2x384xf32>
    %231 = arith.truncf %221 : vector<2x128xf32> to vector<2x128xbf16>
    %cst_51 = arith.constant dense<0.000000e+00> : vector<2x384xf32>
    %232 = tpu.matmul %231, %3, %cst_51 {dimension_numbers = #tpu.dot_dimension_numbers<[1], [0], [0], [1], [0, 0, 1, 1], [], []>} : vector<2x128xbf16>, vector<128x384xbf16>, vector<2x384xf32> -> vector<2x384xf32>
    %233 = vector.extract_strided_slice %230 {offsets = [0, 0], sizes = [2, 128], strides = [1, 1]} : vector<2x384xf32> to vector<2x128xf32>
    %234 = vector.extract_strided_slice %232 {offsets = [0, 0], sizes = [2, 128], strides = [1, 1]} : vector<2x384xf32> to vector<2x128xf32>
    %235 = arith.addf %233, %234 : vector<2x128xf32>
    %236 = arith.negf %235 : vector<2x128xf32>
    %237 = math.exp %236 : vector<2x128xf32>
    %cst_52 = arith.constant 1.000000e+00 : f32
    %238 = vector.broadcast %cst_52 : f32 to vector<2x128xf32>
    %239 = arith.addf %238, %237 : vector<2x128xf32>
    %240 = arith.divf %238, %239 : vector<2x128xf32>
    %241 = vector.extract_strided_slice %230 {offsets = [0, 128], sizes = [2, 128], strides = [1, 1]} : vector<2x384xf32> to vector<2x128xf32>
    %242 = vector.extract_strided_slice %232 {offsets = [0, 128], sizes = [2, 128], strides = [1, 1]} : vector<2x384xf32> to vector<2x128xf32>
    %243 = arith.addf %241, %242 : vector<2x128xf32>
    %244 = arith.negf %243 : vector<2x128xf32>
    %245 = math.exp %244 : vector<2x128xf32>
    %cst_53 = arith.constant 1.000000e+00 : f32
    %246 = vector.broadcast %cst_53 : f32 to vector<2x128xf32>
    %247 = arith.addf %246, %245 : vector<2x128xf32>
    %248 = arith.divf %246, %247 : vector<2x128xf32>
    %249 = vector.extract_strided_slice %230 {offsets = [0, 256], sizes = [2, 128], strides = [1, 1]} : vector<2x384xf32> to vector<2x128xf32>
    %250 = vector.extract_strided_slice %232 {offsets = [0, 256], sizes = [2, 128], strides = [1, 1]} : vector<2x384xf32> to vector<2x128xf32>
    %251 = arith.addf %250, %6 : vector<2x128xf32>
    %252 = arith.mulf %240, %251 : vector<2x128xf32>
    %253 = arith.addf %249, %252 : vector<2x128xf32>
    %254 = math.tanh %253 : vector<2x128xf32>
    %255 = arith.subf %221, %254 : vector<2x128xf32>
    %256 = arith.mulf %248, %255 : vector<2x128xf32>
    %257 = arith.addf %254, %256 : vector<2x128xf32>
    %258 = arith.index_cast %226 : i32 to index
    %c0_54 = arith.constant 0 : index
    %c0_55 = arith.constant 0 : index
    %259 = vector.load %arg5[%258, %c0_54, %c0_55] : memref<8x2x128xf32, #tpu.memory_space<vmem>>, vector<1x2x128xf32>
    %260 = vector.shape_cast %259 : vector<1x2x128xf32> to vector<2x128xf32>
    %261 = vector.shape_cast %257 : vector<2x128xf32> to vector<1x2x128xf32>
    tpu.vector_store %arg5[%258, %c0_54, %c0_55], %261 {strides = array<i32>} : memref<8x2x128xf32, #tpu.memory_space<vmem>>, vector<1x2x128xf32>,
    %c7_i32 = arith.constant 7 : i32
    %262 = arith.addi %9, %c7_i32 : i32
    %263 = arith.index_cast %262 : i32 to index
    %c0_56 = arith.constant 0 : index
    %c0_57 = arith.constant 0 : index
    %264 = vector.load %arg2[%263, %c0_56, %c0_57] : memref<8x2x384xbf16, #tpu.memory_space<vmem>>, vector<1x2x384xbf16>
    %265 = vector.shape_cast %264 : vector<1x2x384xbf16> to vector<2x384xbf16>
    %266 = arith.extf %265 : vector<2x384xbf16> to vector<2x384xf32>
    %267 = arith.truncf %257 : vector<2x128xf32> to vector<2x128xbf16>
    %cst_58 = arith.constant dense<0.000000e+00> : vector<2x384xf32>
    %268 = tpu.matmul %267, %3, %cst_58 {dimension_numbers = #tpu.dot_dimension_numbers<[1], [0], [0], [1], [0, 0, 1, 1], [], []>} : vector<2x128xbf16>, vector<128x384xbf16>, vector<2x384xf32> -> vector<2x384xf32>
    %269 = vector.extract_strided_slice %266 {offsets = [0, 0], sizes = [2, 128], strides = [1, 1]} : vector<2x384xf32> to vector<2x128xf32>
    %270 = vector.extract_strided_slice %268 {offsets = [0, 0], sizes = [2, 128], strides = [1, 1]} : vector<2x384xf32> to vector<2x128xf32>
    %271 = arith.addf %269, %270 : vector<2x128xf32>
    %272 = arith.negf %271 : vector<2x128xf32>
    %273 = math.exp %272 : vector<2x128xf32>
    %cst_59 = arith.constant 1.000000e+00 : f32
    %274 = vector.broadcast %cst_59 : f32 to vector<2x128xf32>
    %275 = arith.addf %274, %273 : vector<2x128xf32>
    %276 = arith.divf %274, %275 : vector<2x128xf32>
    %277 = vector.extract_strided_slice %266 {offsets = [0, 128], sizes = [2, 128], strides = [1, 1]} : vector<2x384xf32> to vector<2x128xf32>
    %278 = vector.extract_strided_slice %268 {offsets = [0, 128], sizes = [2, 128], strides = [1, 1]} : vector<2x384xf32> to vector<2x128xf32>
    %279 = arith.addf %277, %278 : vector<2x128xf32>
    %280 = arith.negf %279 : vector<2x128xf32>
    %281 = math.exp %280 : vector<2x128xf32>
    %cst_60 = arith.constant 1.000000e+00 : f32
    %282 = vector.broadcast %cst_60 : f32 to vector<2x128xf32>
    %283 = arith.addf %282, %281 : vector<2x128xf32>
    %284 = arith.divf %282, %283 : vector<2x128xf32>
    %285 = vector.extract_strided_slice %266 {offsets = [0, 256], sizes = [2, 128], strides = [1, 1]} : vector<2x384xf32> to vector<2x128xf32>
    %286 = vector.extract_strided_slice %268 {offsets = [0, 256], sizes = [2, 128], strides = [1, 1]} : vector<2x384xf32> to vector<2x128xf32>
    %287 = arith.addf %286, %6 : vector<2x128xf32>
    %288 = arith.mulf %276, %287 : vector<2x128xf32>
    %289 = arith.addf %285, %288 : vector<2x128xf32>
    %290 = math.tanh %289 : vector<2x128xf32>
    %291 = arith.subf %257, %290 : vector<2x128xf32>
    %292 = arith.mulf %284, %291 : vector<2x128xf32>
    %293 = arith.addf %290, %292 : vector<2x128xf32>
    %294 = arith.index_cast %262 : i32 to index
    %c0_61 = arith.constant 0 : index
    %c0_62 = arith.constant 0 : index
    %295 = vector.load %arg5[%294, %c0_61, %c0_62] : memref<8x2x128xf32, #tpu.memory_space<vmem>>, vector<1x2x128xf32>
    %296 = vector.shape_cast %295 : vector<1x2x128xf32> to vector<2x128xf32>
    %297 = vector.shape_cast %293 : vector<2x128xf32> to vector<1x2x128xf32>
    tpu.vector_store %arg5[%294, %c0_61, %c0_62], %297 {strides = array<i32>} : memref<8x2x128xf32, #tpu.memory_space<vmem>>, vector<1x2x128xf32>,
    %c1_i32_63 = arith.constant 1 : i32
    %c0_64 = arith.constant 0 : index
    %c0_65 = arith.constant 0 : index
    %298 = vector.load %arg6[%c0_64, %c0_65] : memref<2x128xf32, #tpu.memory_space<vmem>>, vector<2x128xf32>
    tpu.vector_store %arg6[%c0_64, %c0_65], %293 {strides = array<i32>} : memref<2x128xf32, #tpu.memory_space<vmem>>, vector<2x128xf32>,
    return
  }
  func.func @transform_0(%arg0: i32, %arg1: i32) -> (i32, i32, i32) {
    %c0_i32 = arith.constant 0 : i32
    %c0_i32_0 = arith.constant 0 : i32
    return %arg1, %arg0, %c0_i32 : i32, i32, i32
  }
  func.func @transform_1(%arg0: i32, %arg1: i32) -> (i32, i32) {
    %c0_i32 = arith.constant 0 : i32
    %c0_i32_0 = arith.constant 0 : i32
    %c0_i32_1 = arith.constant 0 : i32
    return %c0_i32, %c0_i32_0 : i32, i32
  }
  func.func @transform_2(%arg0: i32, %arg1: i32) -> (i32, i32) {
    %c0_i32 = arith.constant 0 : i32
    %c0_i32_0 = arith.constant 0 : i32
    %c0_i32_1 = arith.constant 0 : i32
    return %c0_i32, %c0_i32_0 : i32, i32
  }
  func.func @transform_3(%arg0: i32, %arg1: i32) -> (i32, i32, i32) {
    %c0_i32 = arith.constant 0 : i32
    %c0_i32_0 = arith.constant 0 : i32
    return %arg1, %arg0, %c0_i32 : i32, i32, i32
  }
}

module attributes {stable_mosaic.version = 11 : i64} {
  func.func @_gru_recurrence_kernel(%arg0: i32, %arg1: i32, %arg2: memref<8x2x384xbf16, #tpu.memory_space<vmem>>, %arg3: memref<128x384xbf16, #tpu.memory_space<vmem>>, %arg4: memref<1x128xf32, #tpu.memory_space<vmem>>, %arg5: memref<8x2x128xf32, #tpu.memory_space<vmem>>, %arg6: memref<2x128xf32, #tpu.memory_space<vmem>>) attributes {dimension_semantics = [#tpu.dimension_semantics<parallel>, #tpu.dimension_semantics<arbitrary>], iteration_bounds = array<i64: 1, 1>, scalar_prefetch = 0 : i64, scratch_operands = 1 : i64, tpu.core_type = #tpu.core_type<tc>, window_params = [{transform_indices = @transform_0, window_bounds = array<i64: 8, 2, 384>}, {pipeline_mode = #tpu.pipeline_mode<synchronous>, transform_indices = @transform_1, window_bounds = array<i64: 128, 384>}, {pipeline_mode = #tpu.pipeline_mode<synchronous>, transform_indices = @transform_2, window_bounds = array<i64: 1, 128>}, {transform_indices = @transform_3, window_bounds = array<i64: 8, 2, 128>}]} {
    %c0_i32 = arith.constant 0 : i32
    %0 = arith.cmpi eq, %arg1, %c0_i32 : i32
    %1 = arith.extui %0 : i1 to i32
    %c0_i32_0 = arith.constant 0 : i32
    %2 = arith.cmpi ne, %1, %c0_i32_0 : i32
    scf.if %2 {
      %cst_66 = arith.constant 0.000000e+00 : f32
      %299 = vector.broadcast %cst_66 : f32 to vector<2x128xf32>
      %c0_67 = arith.constant 0 : index
      %c0_68 = arith.constant 0 : index
      %300 = vector.load %arg6[%c0_67, %c0_68] : memref<2x128xf32, #tpu.memory_space<vmem>>, vector<2x128xf32>
      tpu.vector_store %arg6[%c0_67, %c0_68], %299 {strides = array<i32>} : memref<2x128xf32, #tpu.memory_space<vmem>>, vector<2x128xf32>,
    } else {
    }
    %c0 = arith.constant 0 : index
    %c0_1 = arith.constant 0 : index
    %3 = vector.load %arg3[%c0, %c0_1] : memref<128x384xbf16, #tpu.memory_space<vmem>>, vector<128x384xbf16>
    %c0_2 = arith.constant 0 : index
    %c0_3 = arith.constant 0 : index
    %4 = vector.load %arg4[%c0_2, %c0_3] : memref<1x128xf32, #tpu.memory_space<vmem>>, vector<1x128xf32>
    %5 = vector.shape_cast %4 : vector<1x128xf32> to vector<1x128xf32>
    %6 = vector.broadcast %5 : vector<1x128xf32> to vector<2x128xf32>
    %c0_4 = arith.constant 0 : index
    %c0_5 = arith.constant 0 : index
    %7 = vector.load %arg6[%c0_4, %c0_5] : memref<2x128xf32, #tpu.memory_space<vmem>>, vector<2x128xf32>
    %c0_i32_6 = arith.constant 0 : i32
    %c8_i32 = arith.constant 8 : i32
    %8 = arith.muli %c0_i32_6, %c8_i32 : i32
    %9 = tpu.assume_multiple %8, 8 : i32
    %c0_i32_7 = arith.constant 0 : i32
    %10 = arith.addi %9, %c0_i32_7 : i32
    %11 = arith.index_cast %10 : i32 to index
    %c0_8 = arith.constant 0 : index
    %c0_9 = arith.constant 0 : index
    %12 = vector.load %arg2[%11, %c0_8, %c0_9] : memref<8x2x384xbf16, #tpu.memory_space<vmem>>, vector<1x2x384xbf16>
    %13 = vector.shape_cast %12 : vector<1x2x384xbf16> to vector<2x384xbf16>
    %14 = arith.extf %13 : vector<2x384xbf16> to vector<2x384xf32>
    %15 = arith.truncf %7 : vector<2x128xf32> to vector<2x128xbf16>
    %cst = arith.constant dense<0.000000e+00> : vector<2x384xf32>
    %16 = tpu.matmul %15, %3, %cst {dimension_numbers = #tpu.dot_dimension_numbers<[1], [0], [0], [1], [0, 0, 1, 1], [], []>} : vector<2x128xbf16>, vector<128x384xbf16>, vector<2x384xf32> -> vector<2x384xf32>
    %17 = vector.extract_strided_slice %14 {offsets = [0, 0], sizes = [2, 128], strides = [1, 1]} : vector<2x384xf32> to vector<2x128xf32>
    %18 = vector.extract_strided_slice %16 {offsets = [0, 0], sizes = [2, 128], strides = [1, 1]} : vector<2x384xf32> to vector<2x128xf32>
    %19 = arith.addf %17, %18 : vector<2x128xf32>
    %20 = arith.negf %19 : vector<2x128xf32>
    %21 = math.exp %20 : vector<2x128xf32>
    %cst_10 = arith.constant 1.000000e+00 : f32
    %22 = vector.broadcast %cst_10 : f32 to vector<2x128xf32>
    %23 = arith.addf %22, %21 : vector<2x128xf32>
    %24 = arith.divf %22, %23 : vector<2x128xf32>
    %25 = vector.extract_strided_slice %14 {offsets = [0, 128], sizes = [2, 128], strides = [1, 1]} : vector<2x384xf32> to vector<2x128xf32>
    %26 = vector.extract_strided_slice %16 {offsets = [0, 128], sizes = [2, 128], strides = [1, 1]} : vector<2x384xf32> to vector<2x128xf32>
    %27 = arith.addf %25, %26 : vector<2x128xf32>
    %28 = arith.negf %27 : vector<2x128xf32>
    %29 = math.exp %28 : vector<2x128xf32>
    %cst_11 = arith.constant 1.000000e+00 : f32
    %30 = vector.broadcast %cst_11 : f32 to vector<2x128xf32>
    %31 = arith.addf %30, %29 : vector<2x128xf32>
    %32 = arith.divf %30, %31 : vector<2x128xf32>
    %33 = vector.extract_strided_slice %14 {offsets = [0, 256], sizes = [2, 128], strides = [1, 1]} : vector<2x384xf32> to vector<2x128xf32>
    %34 = vector.extract_strided_slice %16 {offsets = [0, 256], sizes = [2, 128], strides = [1, 1]} : vector<2x384xf32> to vector<2x128xf32>
    %35 = arith.addf %34, %6 : vector<2x128xf32>
    %36 = arith.mulf %24, %35 : vector<2x128xf32>
    %37 = arith.addf %33, %36 : vector<2x128xf32>
    %38 = math.tanh %37 : vector<2x128xf32>
    %39 = arith.subf %7, %38 : vector<2x128xf32>
    %40 = arith.mulf %32, %39 : vector<2x128xf32>
    %41 = arith.addf %38, %40 : vector<2x128xf32>
    %42 = arith.index_cast %10 : i32 to index
    %c0_12 = arith.constant 0 : index
    %c0_13 = arith.constant 0 : index
    %43 = vector.load %arg5[%42, %c0_12, %c0_13] : memref<8x2x128xf32, #tpu.memory_space<vmem>>, vector<1x2x128xf32>
    %44 = vector.shape_cast %43 : vector<1x2x128xf32> to vector<2x128xf32>
    %45 = vector.shape_cast %41 : vector<2x128xf32> to vector<1x2x128xf32>
    tpu.vector_store %arg5[%42, %c0_12, %c0_13], %45 {strides = array<i32>} : memref<8x2x128xf32, #tpu.memory_space<vmem>>, vector<1x2x128xf32>,
    %c1_i32 = arith.constant 1 : i32
    %46 = arith.addi %9, %c1_i32 : i32
    %47 = arith.index_cast %46 : i32 to index
    %c0_14 = arith.constant 0 : index
    %c0_15 = arith.constant 0 : index
    %48 = vector.load %arg2[%47, %c0_14, %c0_15] : memref<8x2x384xbf16, #tpu.memory_space<vmem>>, vector<1x2x384xbf16>
    %49 = vector.shape_cast %48 : vector<1x2x384xbf16> to vector<2x384xbf16>
    %50 = arith.extf %49 : vector<2x384xbf16> to vector<2x384xf32>
    %51 = arith.truncf %41 : vector<2x128xf32> to vector<2x128xbf16>
    %cst_16 = arith.constant dense<0.000000e+00> : vector<2x384xf32>
    %52 = tpu.matmul %51, %3, %cst_16 {dimension_numbers = #tpu.dot_dimension_numbers<[1], [0], [0], [1], [0, 0, 1, 1], [], []>} : vector<2x128xbf16>, vector<128x384xbf16>, vector<2x384xf32> -> vector<2x384xf32>
    %53 = vector.extract_strided_slice %50 {offsets = [0, 0], sizes = [2, 128], strides = [1, 1]} : vector<2x384xf32> to vector<2x128xf32>
    %54 = vector.extract_strided_slice %52 {offsets = [0, 0], sizes = [2, 128], strides = [1, 1]} : vector<2x384xf32> to vector<2x128xf32>
    %55 = arith.addf %53, %54 : vector<2x128xf32>
    %56 = arith.negf %55 : vector<2x128xf32>
    %57 = math.exp %56 : vector<2x128xf32>
    %cst_17 = arith.constant 1.000000e+00 : f32
    %58 = vector.broadcast %cst_17 : f32 to vector<2x128xf32>
    %59 = arith.addf %58, %57 : vector<2x128xf32>
    %60 = arith.divf %58, %59 : vector<2x128xf32>
    %61 = vector.extract_strided_slice %50 {offsets = [0, 128], sizes = [2, 128], strides = [1, 1]} : vector<2x384xf32> to vector<2x128xf32>
    %62 = vector.extract_strided_slice %52 {offsets = [0, 128], sizes = [2, 128], strides = [1, 1]} : vector<2x384xf32> to vector<2x128xf32>
    %63 = arith.addf %61, %62 : vector<2x128xf32>
    %64 = arith.negf %63 : vector<2x128xf32>
    %65 = math.exp %64 : vector<2x128xf32>
    %cst_18 = arith.constant 1.000000e+00 : f32
    %66 = vector.broadcast %cst_18 : f32 to vector<2x128xf32>
    %67 = arith.addf %66, %65 : vector<2x128xf32>
    %68 = arith.divf %66, %67 : vector<2x128xf32>
    %69 = vector.extract_strided_slice %50 {offsets = [0, 256], sizes = [2, 128], strides = [1, 1]} : vector<2x384xf32> to vector<2x128xf32>
    %70 = vector.extract_strided_slice %52 {offsets = [0, 256], sizes = [2, 128], strides = [1, 1]} : vector<2x384xf32> to vector<2x128xf32>
    %71 = arith.addf %70, %6 : vector<2x128xf32>
    %72 = arith.mulf %60, %71 : vector<2x128xf32>
    %73 = arith.addf %69, %72 : vector<2x128xf32>
    %74 = math.tanh %73 : vector<2x128xf32>
    %75 = arith.subf %41, %74 : vector<2x128xf32>
    %76 = arith.mulf %68, %75 : vector<2x128xf32>
    %77 = arith.addf %74, %76 : vector<2x128xf32>
    %78 = arith.index_cast %46 : i32 to index
    %c0_19 = arith.constant 0 : index
    %c0_20 = arith.constant 0 : index
    %79 = vector.load %arg5[%78, %c0_19, %c0_20] : memref<8x2x128xf32, #tpu.memory_space<vmem>>, vector<1x2x128xf32>
    %80 = vector.shape_cast %79 : vector<1x2x128xf32> to vector<2x128xf32>
    %81 = vector.shape_cast %77 : vector<2x128xf32> to vector<1x2x128xf32>
    tpu.vector_store %arg5[%78, %c0_19, %c0_20], %81 {strides = array<i32>} : memref<8x2x128xf32, #tpu.memory_space<vmem>>, vector<1x2x128xf32>,
    %c2_i32 = arith.constant 2 : i32
    %82 = arith.addi %9, %c2_i32 : i32
    %83 = arith.index_cast %82 : i32 to index
    %c0_21 = arith.constant 0 : index
    %c0_22 = arith.constant 0 : index
    %84 = vector.load %arg2[%83, %c0_21, %c0_22] : memref<8x2x384xbf16, #tpu.memory_space<vmem>>, vector<1x2x384xbf16>
    %85 = vector.shape_cast %84 : vector<1x2x384xbf16> to vector<2x384xbf16>
    %86 = arith.extf %85 : vector<2x384xbf16> to vector<2x384xf32>
    %87 = arith.truncf %77 : vector<2x128xf32> to vector<2x128xbf16>
    %cst_23 = arith.constant dense<0.000000e+00> : vector<2x384xf32>
    %88 = tpu.matmul %87, %3, %cst_23 {dimension_numbers = #tpu.dot_dimension_numbers<[1], [0], [0], [1], [0, 0, 1, 1], [], []>} : vector<2x128xbf16>, vector<128x384xbf16>, vector<2x384xf32> -> vector<2x384xf32>
    %89 = vector.extract_strided_slice %86 {offsets = [0, 0], sizes = [2, 128], strides = [1, 1]} : vector<2x384xf32> to vector<2x128xf32>
    %90 = vector.extract_strided_slice %88 {offsets = [0, 0], sizes = [2, 128], strides = [1, 1]} : vector<2x384xf32> to vector<2x128xf32>
    %91 = arith.addf %89, %90 : vector<2x128xf32>
    %92 = arith.negf %91 : vector<2x128xf32>
    %93 = math.exp %92 : vector<2x128xf32>
    %cst_24 = arith.constant 1.000000e+00 : f32
    %94 = vector.broadcast %cst_24 : f32 to vector<2x128xf32>
    %95 = arith.addf %94, %93 : vector<2x128xf32>
    %96 = arith.divf %94, %95 : vector<2x128xf32>
    %97 = vector.extract_strided_slice %86 {offsets = [0, 128], sizes = [2, 128], strides = [1, 1]} : vector<2x384xf32> to vector<2x128xf32>
    %98 = vector.extract_strided_slice %88 {offsets = [0, 128], sizes = [2, 128], strides = [1, 1]} : vector<2x384xf32> to vector<2x128xf32>
    %99 = arith.addf %97, %98 : vector<2x128xf32>
    %100 = arith.negf %99 : vector<2x128xf32>
    %101 = math.exp %100 : vector<2x128xf32>
    %cst_25 = arith.constant 1.000000e+00 : f32
    %102 = vector.broadcast %cst_25 : f32 to vector<2x128xf32>
    %103 = arith.addf %102, %101 : vector<2x128xf32>
    %104 = arith.divf %102, %103 : vector<2x128xf32>
    %105 = vector.extract_strided_slice %86 {offsets = [0, 256], sizes = [2, 128], strides = [1, 1]} : vector<2x384xf32> to vector<2x128xf32>
    %106 = vector.extract_strided_slice %88 {offsets = [0, 256], sizes = [2, 128], strides = [1, 1]} : vector<2x384xf32> to vector<2x128xf32>
    %107 = arith.addf %106, %6 : vector<2x128xf32>
    %108 = arith.mulf %96, %107 : vector<2x128xf32>
    %109 = arith.addf %105, %108 : vector<2x128xf32>
    %110 = math.tanh %109 : vector<2x128xf32>
    %111 = arith.subf %77, %110 : vector<2x128xf32>
    %112 = arith.mulf %104, %111 : vector<2x128xf32>
    %113 = arith.addf %110, %112 : vector<2x128xf32>
    %114 = arith.index_cast %82 : i32 to index
    %c0_26 = arith.constant 0 : index
    %c0_27 = arith.constant 0 : index
    %115 = vector.load %arg5[%114, %c0_26, %c0_27] : memref<8x2x128xf32, #tpu.memory_space<vmem>>, vector<1x2x128xf32>
    %116 = vector.shape_cast %115 : vector<1x2x128xf32> to vector<2x128xf32>
    %117 = vector.shape_cast %113 : vector<2x128xf32> to vector<1x2x128xf32>
    tpu.vector_store %arg5[%114, %c0_26, %c0_27], %117 {strides = array<i32>} : memref<8x2x128xf32, #tpu.memory_space<vmem>>, vector<1x2x128xf32>,
    %c3_i32 = arith.constant 3 : i32
    %118 = arith.addi %9, %c3_i32 : i32
    %119 = arith.index_cast %118 : i32 to index
    %c0_28 = arith.constant 0 : index
    %c0_29 = arith.constant 0 : index
    %120 = vector.load %arg2[%119, %c0_28, %c0_29] : memref<8x2x384xbf16, #tpu.memory_space<vmem>>, vector<1x2x384xbf16>
    %121 = vector.shape_cast %120 : vector<1x2x384xbf16> to vector<2x384xbf16>
    %122 = arith.extf %121 : vector<2x384xbf16> to vector<2x384xf32>
    %123 = arith.truncf %113 : vector<2x128xf32> to vector<2x128xbf16>
    %cst_30 = arith.constant dense<0.000000e+00> : vector<2x384xf32>
    %124 = tpu.matmul %123, %3, %cst_30 {dimension_numbers = #tpu.dot_dimension_numbers<[1], [0], [0], [1], [0, 0, 1, 1], [], []>} : vector<2x128xbf16>, vector<128x384xbf16>, vector<2x384xf32> -> vector<2x384xf32>
    %125 = vector.extract_strided_slice %122 {offsets = [0, 0], sizes = [2, 128], strides = [1, 1]} : vector<2x384xf32> to vector<2x128xf32>
    %126 = vector.extract_strided_slice %124 {offsets = [0, 0], sizes = [2, 128], strides = [1, 1]} : vector<2x384xf32> to vector<2x128xf32>
    %127 = arith.addf %125, %126 : vector<2x128xf32>
    %128 = arith.negf %127 : vector<2x128xf32>
    %129 = math.exp %128 : vector<2x128xf32>
    %cst_31 = arith.constant 1.000000e+00 : f32
    %130 = vector.broadcast %cst_31 : f32 to vector<2x128xf32>
    %131 = arith.addf %130, %129 : vector<2x128xf32>
    %132 = arith.divf %130, %131 : vector<2x128xf32>
    %133 = vector.extract_strided_slice %122 {offsets = [0, 128], sizes = [2, 128], strides = [1, 1]} : vector<2x384xf32> to vector<2x128xf32>
    %134 = vector.extract_strided_slice %124 {offsets = [0, 128], sizes = [2, 128], strides = [1, 1]} : vector<2x384xf32> to vector<2x128xf32>
    %135 = arith.addf %133, %134 : vector<2x128xf32>
    %136 = arith.negf %135 : vector<2x128xf32>
    %137 = math.exp %136 : vector<2x128xf32>
    %cst_32 = arith.constant 1.000000e+00 : f32
    %138 = vector.broadcast %cst_32 : f32 to vector<2x128xf32>
    %139 = arith.addf %138, %137 : vector<2x128xf32>
    %140 = arith.divf %138, %139 : vector<2x128xf32>
    %141 = vector.extract_strided_slice %122 {offsets = [0, 256], sizes = [2, 128], strides = [1, 1]} : vector<2x384xf32> to vector<2x128xf32>
    %142 = vector.extract_strided_slice %124 {offsets = [0, 256], sizes = [2, 128], strides = [1, 1]} : vector<2x384xf32> to vector<2x128xf32>
    %143 = arith.addf %142, %6 : vector<2x128xf32>
    %144 = arith.mulf %132, %143 : vector<2x128xf32>
    %145 = arith.addf %141, %144 : vector<2x128xf32>
    %146 = math.tanh %145 : vector<2x128xf32>
    %147 = arith.subf %113, %146 : vector<2x128xf32>
    %148 = arith.mulf %140, %147 : vector<2x128xf32>
    %149 = arith.addf %146, %148 : vector<2x128xf32>
    %150 = arith.index_cast %118 : i32 to index
    %c0_33 = arith.constant 0 : index
    %c0_34 = arith.constant 0 : index
    %151 = vector.load %arg5[%150, %c0_33, %c0_34] : memref<8x2x128xf32, #tpu.memory_space<vmem>>, vector<1x2x128xf32>
    %152 = vector.shape_cast %151 : vector<1x2x128xf32> to vector<2x128xf32>
    %153 = vector.shape_cast %149 : vector<2x128xf32> to vector<1x2x128xf32>
    tpu.vector_store %arg5[%150, %c0_33, %c0_34], %153 {strides = array<i32>} : memref<8x2x128xf32, #tpu.memory_space<vmem>>, vector<1x2x128xf32>,
    %c4_i32 = arith.constant 4 : i32
    %154 = arith.addi %9, %c4_i32 : i32
    %155 = arith.index_cast %154 : i32 to index
    %c0_35 = arith.constant 0 : index
    %c0_36 = arith.constant 0 : index
    %156 = vector.load %arg2[%155, %c0_35, %c0_36] : memref<8x2x384xbf16, #tpu.memory_space<vmem>>, vector<1x2x384xbf16>
    %157 = vector.shape_cast %156 : vector<1x2x384xbf16> to vector<2x384xbf16>
    %158 = arith.extf %157 : vector<2x384xbf16> to vector<2x384xf32>
    %159 = arith.truncf %149 : vector<2x128xf32> to vector<2x128xbf16>
    %cst_37 = arith.constant dense<0.000000e+00> : vector<2x384xf32>
    %160 = tpu.matmul %159, %3, %cst_37 {dimension_numbers = #tpu.dot_dimension_numbers<[1], [0], [0], [1], [0, 0, 1, 1], [], []>} : vector<2x128xbf16>, vector<128x384xbf16>, vector<2x384xf32> -> vector<2x384xf32>
    %161 = vector.extract_strided_slice %158 {offsets = [0, 0], sizes = [2, 128], strides = [1, 1]} : vector<2x384xf32> to vector<2x128xf32>
    %162 = vector.extract_strided_slice %160 {offsets = [0, 0], sizes = [2, 128], strides = [1, 1]} : vector<2x384xf32> to vector<2x128xf32>
    %163 = arith.addf %161, %162 : vector<2x128xf32>
    %164 = arith.negf %163 : vector<2x128xf32>
    %165 = math.exp %164 : vector<2x128xf32>
    %cst_38 = arith.constant 1.000000e+00 : f32
    %166 = vector.broadcast %cst_38 : f32 to vector<2x128xf32>
    %167 = arith.addf %166, %165 : vector<2x128xf32>
    %168 = arith.divf %166, %167 : vector<2x128xf32>
    %169 = vector.extract_strided_slice %158 {offsets = [0, 128], sizes = [2, 128], strides = [1, 1]} : vector<2x384xf32> to vector<2x128xf32>
    %170 = vector.extract_strided_slice %160 {offsets = [0, 128], sizes = [2, 128], strides = [1, 1]} : vector<2x384xf32> to vector<2x128xf32>
    %171 = arith.addf %169, %170 : vector<2x128xf32>
    %172 = arith.negf %171 : vector<2x128xf32>
    %173 = math.exp %172 : vector<2x128xf32>
    %cst_39 = arith.constant 1.000000e+00 : f32
    %174 = vector.broadcast %cst_39 : f32 to vector<2x128xf32>
    %175 = arith.addf %174, %173 : vector<2x128xf32>
    %176 = arith.divf %174, %175 : vector<2x128xf32>
    %177 = vector.extract_strided_slice %158 {offsets = [0, 256], sizes = [2, 128], strides = [1, 1]} : vector<2x384xf32> to vector<2x128xf32>
    %178 = vector.extract_strided_slice %160 {offsets = [0, 256], sizes = [2, 128], strides = [1, 1]} : vector<2x384xf32> to vector<2x128xf32>
    %179 = arith.addf %178, %6 : vector<2x128xf32>
    %180 = arith.mulf %168, %179 : vector<2x128xf32>
    %181 = arith.addf %177, %180 : vector<2x128xf32>
    %182 = math.tanh %181 : vector<2x128xf32>
    %183 = arith.subf %149, %182 : vector<2x128xf32>
    %184 = arith.mulf %176, %183 : vector<2x128xf32>
    %185 = arith.addf %182, %184 : vector<2x128xf32>
    %186 = arith.index_cast %154 : i32 to index
    %c0_40 = arith.constant 0 : index
    %c0_41 = arith.constant 0 : index
    %187 = vector.load %arg5[%186, %c0_40, %c0_41] : memref<8x2x128xf32, #tpu.memory_space<vmem>>, vector<1x2x128xf32>
    %188 = vector.shape_cast %187 : vector<1x2x128xf32> to vector<2x128xf32>
    %189 = vector.shape_cast %185 : vector<2x128xf32> to vector<1x2x128xf32>
    tpu.vector_store %arg5[%186, %c0_40, %c0_41], %189 {strides = array<i32>} : memref<8x2x128xf32, #tpu.memory_space<vmem>>, vector<1x2x128xf32>,
    %c5_i32 = arith.constant 5 : i32
    %190 = arith.addi %9, %c5_i32 : i32
    %191 = arith.index_cast %190 : i32 to index
    %c0_42 = arith.constant 0 : index
    %c0_43 = arith.constant 0 : index
    %192 = vector.load %arg2[%191, %c0_42, %c0_43] : memref<8x2x384xbf16, #tpu.memory_space<vmem>>, vector<1x2x384xbf16>
    %193 = vector.shape_cast %192 : vector<1x2x384xbf16> to vector<2x384xbf16>
    %194 = arith.extf %193 : vector<2x384xbf16> to vector<2x384xf32>
    %195 = arith.truncf %185 : vector<2x128xf32> to vector<2x128xbf16>
    %cst_44 = arith.constant dense<0.000000e+00> : vector<2x384xf32>
    %196 = tpu.matmul %195, %3, %cst_44 {dimension_numbers = #tpu.dot_dimension_numbers<[1], [0], [0], [1], [0, 0, 1, 1], [], []>} : vector<2x128xbf16>, vector<128x384xbf16>, vector<2x384xf32> -> vector<2x384xf32>
    %197 = vector.extract_strided_slice %194 {offsets = [0, 0], sizes = [2, 128], strides = [1, 1]} : vector<2x384xf32> to vector<2x128xf32>
    %198 = vector.extract_strided_slice %196 {offsets = [0, 0], sizes = [2, 128], strides = [1, 1]} : vector<2x384xf32> to vector<2x128xf32>
    %199 = arith.addf %197, %198 : vector<2x128xf32>
    %200 = arith.negf %199 : vector<2x128xf32>
    %201 = math.exp %200 : vector<2x128xf32>
    %cst_45 = arith.constant 1.000000e+00 : f32
    %202 = vector.broadcast %cst_45 : f32 to vector<2x128xf32>
    %203 = arith.addf %202, %201 : vector<2x128xf32>
    %204 = arith.divf %202, %203 : vector<2x128xf32>
    %205 = vector.extract_strided_slice %194 {offsets = [0, 128], sizes = [2, 128], strides = [1, 1]} : vector<2x384xf32> to vector<2x128xf32>
    %206 = vector.extract_strided_slice %196 {offsets = [0, 128], sizes = [2, 128], strides = [1, 1]} : vector<2x384xf32> to vector<2x128xf32>
    %207 = arith.addf %205, %206 : vector<2x128xf32>
    %208 = arith.negf %207 : vector<2x128xf32>
    %209 = math.exp %208 : vector<2x128xf32>
    %cst_46 = arith.constant 1.000000e+00 : f32
    %210 = vector.broadcast %cst_46 : f32 to vector<2x128xf32>
    %211 = arith.addf %210, %209 : vector<2x128xf32>
    %212 = arith.divf %210, %211 : vector<2x128xf32>
    %213 = vector.extract_strided_slice %194 {offsets = [0, 256], sizes = [2, 128], strides = [1, 1]} : vector<2x384xf32> to vector<2x128xf32>
    %214 = vector.extract_strided_slice %196 {offsets = [0, 256], sizes = [2, 128], strides = [1, 1]} : vector<2x384xf32> to vector<2x128xf32>
    %215 = arith.addf %214, %6 : vector<2x128xf32>
    %216 = arith.mulf %204, %215 : vector<2x128xf32>
    %217 = arith.addf %213, %216 : vector<2x128xf32>
    %218 = math.tanh %217 : vector<2x128xf32>
    %219 = arith.subf %185, %218 : vector<2x128xf32>
    %220 = arith.mulf %212, %219 : vector<2x128xf32>
    %221 = arith.addf %218, %220 : vector<2x128xf32>
    %222 = arith.index_cast %190 : i32 to index
    %c0_47 = arith.constant 0 : index
    %c0_48 = arith.constant 0 : index
    %223 = vector.load %arg5[%222, %c0_47, %c0_48] : memref<8x2x128xf32, #tpu.memory_space<vmem>>, vector<1x2x128xf32>
    %224 = vector.shape_cast %223 : vector<1x2x128xf32> to vector<2x128xf32>
    %225 = vector.shape_cast %221 : vector<2x128xf32> to vector<1x2x128xf32>
    tpu.vector_store %arg5[%222, %c0_47, %c0_48], %225 {strides = array<i32>} : memref<8x2x128xf32, #tpu.memory_space<vmem>>, vector<1x2x128xf32>,
    %c6_i32 = arith.constant 6 : i32
    %226 = arith.addi %9, %c6_i32 : i32
    %227 = arith.index_cast %226 : i32 to index
    %c0_49 = arith.constant 0 : index
    %c0_50 = arith.constant 0 : index
    %228 = vector.load %arg2[%227, %c0_49, %c0_50] : memref<8x2x384xbf16, #tpu.memory_space<vmem>>, vector<1x2x384xbf16>
    %229 = vector.shape_cast %228 : vector<1x2x384xbf16> to vector<2x384xbf16>
    %230 = arith.extf %229 : vector<2x384xbf16> to vector<2x384xf32>
    %231 = arith.truncf %221 : vector<2x128xf32> to vector<2x128xbf16>
    %cst_51 = arith.constant dense<0.000000e+00> : vector<2x384xf32>
    %232 = tpu.matmul %231, %3, %cst_51 {dimension_numbers = #tpu.dot_dimension_numbers<[1], [0], [0], [1], [0, 0, 1, 1], [], []>} : vector<2x128xbf16>, vector<128x384xbf16>, vector<2x384xf32> -> vector<2x384xf32>
    %233 = vector.extract_strided_slice %230 {offsets = [0, 0], sizes = [2, 128], strides = [1, 1]} : vector<2x384xf32> to vector<2x128xf32>
    %234 = vector.extract_strided_slice %232 {offsets = [0, 0], sizes = [2, 128], strides = [1, 1]} : vector<2x384xf32> to vector<2x128xf32>
    %235 = arith.addf %233, %234 : vector<2x128xf32>
    %236 = arith.negf %235 : vector<2x128xf32>
    %237 = math.exp %236 : vector<2x128xf32>
    %cst_52 = arith.constant 1.000000e+00 : f32
    %238 = vector.broadcast %cst_52 : f32 to vector<2x128xf32>
    %239 = arith.addf %238, %237 : vector<2x128xf32>
    %240 = arith.divf %238, %239 : vector<2x128xf32>
    %241 = vector.extract_strided_slice %230 {offsets = [0, 128], sizes = [2, 128], strides = [1, 1]} : vector<2x384xf32> to vector<2x128xf32>
    %242 = vector.extract_strided_slice %232 {offsets = [0, 128], sizes = [2, 128], strides = [1, 1]} : vector<2x384xf32> to vector<2x128xf32>
    %243 = arith.addf %241, %242 : vector<2x128xf32>
    %244 = arith.negf %243 : vector<2x128xf32>
    %245 = math.exp %244 : vector<2x128xf32>
    %cst_53 = arith.constant 1.000000e+00 : f32
    %246 = vector.broadcast %cst_53 : f32 to vector<2x128xf32>
    %247 = arith.addf %246, %245 : vector<2x128xf32>
    %248 = arith.divf %246, %247 : vector<2x128xf32>
    %249 = vector.extract_strided_slice %230 {offsets = [0, 256], sizes = [2, 128], strides = [1, 1]} : vector<2x384xf32> to vector<2x128xf32>
    %250 = vector.extract_strided_slice %232 {offsets = [0, 256], sizes = [2, 128], strides = [1, 1]} : vector<2x384xf32> to vector<2x128xf32>
    %251 = arith.addf %250, %6 : vector<2x128xf32>
    %252 = arith.mulf %240, %251 : vector<2x128xf32>
    %253 = arith.addf %249, %252 : vector<2x128xf32>
    %254 = math.tanh %253 : vector<2x128xf32>
    %255 = arith.subf %221, %254 : vector<2x128xf32>
    %256 = arith.mulf %248, %255 : vector<2x128xf32>
    %257 = arith.addf %254, %256 : vector<2x128xf32>
    %258 = arith.index_cast %226 : i32 to index
    %c0_54 = arith.constant 0 : index
    %c0_55 = arith.constant 0 : index
    %259 = vector.load %arg5[%258, %c0_54, %c0_55] : memref<8x2x128xf32, #tpu.memory_space<vmem>>, vector<1x2x128xf32>
    %260 = vector.shape_cast %259 : vector<1x2x128xf32> to vector<2x128xf32>
    %261 = vector.shape_cast %257 : vector<2x128xf32> to vector<1x2x128xf32>
    tpu.vector_store %arg5[%258, %c0_54, %c0_55], %261 {strides = array<i32>} : memref<8x2x128xf32, #tpu.memory_space<vmem>>, vector<1x2x128xf32>,
    %c7_i32 = arith.constant 7 : i32
    %262 = arith.addi %9, %c7_i32 : i32
    %263 = arith.index_cast %262 : i32 to index
    %c0_56 = arith.constant 0 : index
    %c0_57 = arith.constant 0 : index
    %264 = vector.load %arg2[%263, %c0_56, %c0_57] : memref<8x2x384xbf16, #tpu.memory_space<vmem>>, vector<1x2x384xbf16>
    %265 = vector.shape_cast %264 : vector<1x2x384xbf16> to vector<2x384xbf16>
    %266 = arith.extf %265 : vector<2x384xbf16> to vector<2x384xf32>
    %267 = arith.truncf %257 : vector<2x128xf32> to vector<2x128xbf16>
    %cst_58 = arith.constant dense<0.000000e+00> : vector<2x384xf32>
    %268 = tpu.matmul %267, %3, %cst_58 {dimension_numbers = #tpu.dot_dimension_numbers<[1], [0], [0], [1], [0, 0, 1, 1], [], []>} : vector<2x128xbf16>, vector<128x384xbf16>, vector<2x384xf32> -> vector<2x384xf32>
    %269 = vector.extract_strided_slice %266 {offsets = [0, 0], sizes = [2, 128], strides = [1, 1]} : vector<2x384xf32> to vector<2x128xf32>
    %270 = vector.extract_strided_slice %268 {offsets = [0, 0], sizes = [2, 128], strides = [1, 1]} : vector<2x384xf32> to vector<2x128xf32>
    %271 = arith.addf %269, %270 : vector<2x128xf32>
    %272 = arith.negf %271 : vector<2x128xf32>
    %273 = math.exp %272 : vector<2x128xf32>
    %cst_59 = arith.constant 1.000000e+00 : f32
    %274 = vector.broadcast %cst_59 : f32 to vector<2x128xf32>
    %275 = arith.addf %274, %273 : vector<2x128xf32>
    %276 = arith.divf %274, %275 : vector<2x128xf32>
    %277 = vector.extract_strided_slice %266 {offsets = [0, 128], sizes = [2, 128], strides = [1, 1]} : vector<2x384xf32> to vector<2x128xf32>
    %278 = vector.extract_strided_slice %268 {offsets = [0, 128], sizes = [2, 128], strides = [1, 1]} : vector<2x384xf32> to vector<2x128xf32>
    %279 = arith.addf %277, %278 : vector<2x128xf32>
    %280 = arith.negf %279 : vector<2x128xf32>
    %281 = math.exp %280 : vector<2x128xf32>
    %cst_60 = arith.constant 1.000000e+00 : f32
    %282 = vector.broadcast %cst_60 : f32 to vector<2x128xf32>
    %283 = arith.addf %282, %281 : vector<2x128xf32>
    %284 = arith.divf %282, %283 : vector<2x128xf32>
    %285 = vector.extract_strided_slice %266 {offsets = [0, 256], sizes = [2, 128], strides = [1, 1]} : vector<2x384xf32> to vector<2x128xf32>
    %286 = vector.extract_strided_slice %268 {offsets = [0, 256], sizes = [2, 128], strides = [1, 1]} : vector<2x384xf32> to vector<2x128xf32>
    %287 = arith.addf %286, %6 : vector<2x128xf32>
    %288 = arith.mulf %276, %287 : vector<2x128xf32>
    %289 = arith.addf %285, %288 : vector<2x128xf32>
    %290 = math.tanh %289 : vector<2x128xf32>
    %291 = arith.subf %257, %290 : vector<2x128xf32>
    %292 = arith.mulf %284, %291 : vector<2x128xf32>
    %293 = arith.addf %290, %292 : vector<2x128xf32>
    %294 = arith.index_cast %262 : i32 to index
    %c0_61 = arith.constant 0 : index
    %c0_62 = arith.constant 0 : index
    %295 = vector.load %arg5[%294, %c0_61, %c0_62] : memref<8x2x128xf32, #tpu.memory_space<vmem>>, vector<1x2x128xf32>
    %296 = vector.shape_cast %295 : vector<1x2x128xf32> to vector<2x128xf32>
    %297 = vector.shape_cast %293 : vector<2x128xf32> to vector<1x2x128xf32>
    tpu.vector_store %arg5[%294, %c0_61, %c0_62], %297 {strides = array<i32>} : memref<8x2x128xf32, #tpu.memory_space<vmem>>, vector<1x2x128xf32>,
    %c1_i32_63 = arith.constant 1 : i32
    %c0_64 = arith.constant 0 : index
    %c0_65 = arith.constant 0 : index
    %298 = vector.load %arg6[%c0_64, %c0_65] : memref<2x128xf32, #tpu.memory_space<vmem>>, vector<2x128xf32>
    tpu.vector_store %arg6[%c0_64, %c0_65], %293 {strides = array<i32>} : memref<2x128xf32, #tpu.memory_space<vmem>>, vector<2x128xf32>,
    return
  }
  func.func @transform_0(%arg0: i32, %arg1: i32) -> (i32, i32, i32) {
    %c0_i32 = arith.constant 0 : i32
    %c0_i32_0 = arith.constant 0 : i32
    return %arg1, %arg0, %c0_i32 : i32, i32, i32
  }
  func.func @transform_1(%arg0: i32, %arg1: i32) -> (i32, i32) {
    %c0_i32 = arith.constant 0 : i32
    %c0_i32_0 = arith.constant 0 : i32
    %c0_i32_1 = arith.constant 0 : i32
    return %c0_i32, %c0_i32_0 : i32, i32
  }
  func.func @transform_2(%arg0: i32, %arg1: i32) -> (i32, i32) {
    %c0_i32 = arith.constant 0 : i32
    %c0_i32_0 = arith.constant 0 : i32
    %c0_i32_1 = arith.constant 0 : i32
    return %c0_i32, %c0_i32_0 : i32, i32
  }
  func.func @transform_3(%arg0: i32, %arg1: i32) -> (i32, i32, i32) {
    %c0_i32 = arith.constant 0 : i32
    %c0_i32_0 = arith.constant 0 : i32
    return %arg1, %arg0, %c0_i32 : i32, i32, i32
  }
}

</mosaic_0001>

<llo_original>
// kernel: tpu_custom_call.1
$region0: #{tpu_custom_call.1}
  #allocation0 [shape = 'u32[]', space=smem, size = 0x4, offset = 0x4, fixed_abs, tag = 'smem constant byte address 0x4 - core index']
  #allocation1 [shape = 'u32[144,128]{1,0:T(1,128)}', space=vmem, size = 0x12000, scoped, tag = 'internal scratch']
  #allocation2 [shape = 'f32[2,128]{1,0:T(2,128)}', space=vmem, size = 0x400, scoped, tag = 'scratch operand']
  %s0 = inlined_call_operand.hbm [shape: bf16[8,2,384], index: 0, kind: input, shape index: {}]
  %s1 = inlined_call_operand.hbm [shape: bf16[128,384], index: 1, kind: input, shape index: {}]
  %s2 = inlined_call_operand.vmem [shape: f32[1,128], index: 2, kind: input, shape index: {}]
  %s3 = inlined_call_operand.hbm [shape: f32[8,2,128], index: 3, kind: output, shape index: {}]
  %s4 = sld [smem:[#allocation0]]
  $region34: #{tpu_custom_call.1} parent=0
    _
  %s6 = ssub.s32 1, %s4
  %s7 = scalar_select 0, %s6, %s4
  $region1: #{tpu_custom_call.1} parent=0
    #allocation3 [shape = 'u8[12288]{0}', space=vmem, size = 0x3000, scoped, tag = 'input window, operand 0, single buffered']
    #allocation4 [shape = 's32[1]{0}', space=sflag, size = 0x4, scoped, tag = 'scoped memory for tpu_custom_call.1']
    #allocation5 [shape = 's32[1]{0}', space=sflag, size = 0x4, scoped, tag = 'scoped memory for tpu_custom_call.1']
    #allocation6 [shape = 'u8[98304]{0}', space=vmem, size = 0x18000, scoped, tag = 'input window, operand 1, single buffered']
    #allocation7 [shape = 's32[1]{0}', space=sflag, size = 0x4, scoped, tag = 'scoped memory for tpu_custom_call.1']
    #allocation8 [shape = 'u8[8192]{0}', space=vmem, size = 0x2000, scoped, tag = 'output window, operand 0, single buffered']
    %8 = vsyncpa [#allocation4], 0
    %9 = vsyncpa [#allocation7], 0
    %10 = vsyncpa [#allocation5], 0
    // Predicated region
    $region2: #{tpu_custom_call.1} parent=1 // pred_check
      _
    $region3: #{tpu_custom_call.1} parent=1 // pred_check_branch
      %12 = sbr.rel (0) target = $region5
    $region4: #{tpu_custom_call.1} parent=1 // pred_region
      %s14 = ssub.s32 384, 384
      %15 = vsyncadd [#allocation4], %s14
      %s16 = sshll.u32 [#allocation3], 4
      %s17 = int_to_ptr.vmem [resolvable:$true] %s16
      %22 = dma.hbm_to_vmem [thread:$0]  %s0, 384, %s17, [#allocation4], 48, 48, 3
    $region5: #{tpu_custom_call.1} parent=1 // pred_fallthru
      _
    // Predicated region
    $region6: #{tpu_custom_call.1} parent=1 // pred_check
      _
    $region7: #{tpu_custom_call.1} parent=1 // pred_check_branch
      %24 = sbr.rel (0) target = $region9
    $region8: #{tpu_custom_call.1} parent=1 // pred_region
      %s26 = ssub.s32 3072, 3072
      %27 = vsyncadd [#allocation7], %s26
      %s28 = sshll.u32 [#allocation6], 4
      %s29 = int_to_ptr.vmem [resolvable:$true] %s28
      %34 = dma.hbm_to_vmem [thread:$0]  %s1, 3072, %s29, [#allocation7], 192, 192, 12
    $region9: #{tpu_custom_call.1} parent=1 // pred_fallthru
      _
    // Predicated region
    $region10: #{tpu_custom_call.1} parent=1 // pred_check
      _
    $region11: #{tpu_custom_call.1} parent=1 // pred_check_branch
      %36 = sbr.rel (0) target = $region13
    $region12: #{tpu_custom_call.1} parent=1 // pred_region
      _
    $region13: #{tpu_custom_call.1} parent=1 // pred_fallthru
      _
    // Predicated region
    $region14: #{tpu_custom_call.1} parent=1 // pred_check
      _
    $region15: #{tpu_custom_call.1} parent=1 // pred_check_branch
      %38 = sbr.rel (0) target = $region17
    $region16: #{tpu_custom_call.1} parent=1 // pred_region
      %39 = dma.done [#allocation4], 384
    $region17: #{tpu_custom_call.1} parent=1 // pred_fallthru
      _
    // Predicated region
    $region18: #{tpu_custom_call.1} parent=1 // pred_check
      _
    $region19: #{tpu_custom_call.1} parent=1 // pred_check_branch
      %41 = sbr.rel (0) target = $region21
    $region20: #{tpu_custom_call.1} parent=1 // pred_region
      %42 = dma.done [#allocation7], 3072
    $region21: #{tpu_custom_call.1} parent=1 // pred_fallthru
      _
    %p44 = scmp.eq.s32.totalorder 0, 0
    // Predicated region
    $region22: #{tpu_custom_call.1} parent=1 // pred_check
      %p45 = pneg %p44
    $region23: #{tpu_custom_call.1} parent=1 // pred_check_branch
      %47 = sbr.rel (%p45) target = $region25
    $region24: #{tpu_custom_call.1} parent=1 // pred_region
      %48 = vst [vmem:[#allocation2] sm:$0x3] 0.0
    $region25: #{tpu_custom_call.1} parent=1 // pred_fallthru
      _
    %v49 = vld [vmem:[#allocation6] sm:$0xff]
    %v50 = vld [vmem:[#allocation6 + $0x8] sm:$0xf]
    %v51 = vld [vmem:[#allocation6 + $0xc] sm:$0xff]
    %v52 = vld [vmem:[#allocation6 + $0x14] sm:$0xf]
    %v53 = vld [vmem:[#allocation6 + $0x18] sm:$0xff]
    %v54 = vld [vmem:[#allocation6 + $0x20] sm:$0xf]
    %v55 = vld [vmem:[#allocation6 + $0x24] sm:$0xff]
    %v56 = vld [vmem:[#allocation6 + $0x2c] sm:$0xf]
    %v57 = vld [vmem:[#allocation6 + $0x30] sm:$0xff]
    %v58 = vld [vmem:[#allocation6 + $0x38] sm:$0xf]
    %v59 = vld [vmem:[#allocation6 + $0x3c] sm:$0xff]
    %v60 = vld [vmem:[#allocation6 + $0x44] sm:$0xf]
    %v61 = vld [vmem:[#allocation6 + $0x48] sm:$0xff]
    %v62 = vld [vmem:[#allocation6 + $0x50] sm:$0xf]
    %v63 = vld [vmem:[#allocation6 + $0x54] sm:$0xff]
    %v64 = vld [vmem:[#allocation6 + $0x5c] sm:$0xf]
    %v65 = vld [vmem:[#allocation6 + $0x60] sm:$0xff]
    %v66 = vld [vmem:[#allocation6 + $0x68] sm:$0xf]
    %v67 = vld [vmem:[#allocation6 + $0x6c] sm:$0xff]
    %v68 = vld [vmem:[#allocation6 + $0x74] sm:$0xf]
    %v69 = vld [vmem:[#allocation6 + $0x78] sm:$0xff]
    %v70 = vld [vmem:[#allocation6 + $0x80] sm:$0xf]
    %v71 = vld [vmem:[#allocation6 + $0x84] sm:$0xff]
    %v72 = vld [vmem:[#allocation6 + $0x8c] sm:$0xf]
    %v73 = vld [vmem:[#allocation6 + $0x90] sm:$0xff]
    %v74 = vld [vmem:[#allocation6 + $0x98] sm:$0xf]
    %v75 = vld [vmem:[#allocation6 + $0x9c] sm:$0xff]
    %v76 = vld [vmem:[#allocation6 + $0xa4] sm:$0xf]
    %v77 = vld [vmem:[#allocation6 + $0xa8] sm:$0xff]
    %v78 = vld [vmem:[#allocation6 + $0xb0] sm:$0xf]
    %v79 = vld [vmem:[#allocation6 + $0xb4] sm:$0xff]
    %v80 = vld [vmem:[#allocation6 + $0xbc] sm:$0xf]
    %v81 = vld [vmem:[%s2] sm:$0x1]
    %v83 = vlaneseq
    %v84 = vshrl.u32 %v83, 7
    %v85 = vsub.s32 0, %v84
    %v86 = vrot.slane %v81, %v85
    %v88 = vld [vmem:[#allocation2] sm:$0x3]
    %s89 = smul.u32 0, 3
    %s90 = scalar_lea.vmem [#allocation3], %s89
    %v91 = vld [vmem:[%s90] sm:$0x7]
    %v92 = vunpack.c.l.bf16 %v91
    %v93 = vpack.c.bf16 %v88, %v88
    %v126 = vunpack.c.l.b16 %v49
    %v127 = vunpack.c.h.b16 %v49
    %v128 = vunpack.c.l.b16 %v50
    %v129 = vunpack.c.l.b16 %v51
    %v130 = vunpack.c.h.b16 %v51
    %v131 = vunpack.c.l.b16 %v52
    %v132 = vunpack.c.l.b16 %v53
    %v133 = vunpack.c.h.b16 %v53
    %v134 = vunpack.c.l.b16 %v54
    %v135 = vunpack.c.l.b16 %v55
    %v136 = vunpack.c.h.b16 %v55
    %v137 = vunpack.c.l.b16 %v56
    %v138 = vunpack.c.l.b16 %v57
    %v139 = vunpack.c.h.b16 %v57
    %v140 = vunpack.c.l.b16 %v58
    %v141 = vunpack.c.l.b16 %v59
    %v142 = vunpack.c.h.b16 %v59
    %v143 = vunpack.c.l.b16 %v60
    %v144 = vunpack.c.l.b16 %v61
    %v145 = vunpack.c.h.b16 %v61
    %v146 = vunpack.c.l.b16 %v62
    %v147 = vunpack.c.l.b16 %v63
    %v148 = vunpack.c.h.b16 %v63
    %v149 = vunpack.c.l.b16 %v64
    %v150 = vunpack.c.l.b16 %v65
    %v151 = vunpack.c.h.b16 %v65
    %v152 = vunpack.c.l.b16 %v66
    %v153 = vunpack.c.l.b16 %v67
    %v154 = vunpack.c.h.b16 %v67
    %v155 = vunpack.c.l.b16 %v68
    %v156 = vunpack.c.l.b16 %v69
    %v157 = vunpack.c.h.b16 %v69
    %v158 = vunpack.c.l.b16 %v70
    %v159 = vunpack.c.l.b16 %v71
    %v160 = vunpack.c.h.b16 %v71
    %v161 = vunpack.c.l.b16 %v72
    %v162 = vunpack.c.l.b16 %v73
    %v163 = vunpack.c.h.b16 %v73
    %v164 = vunpack.c.l.b16 %v74
    %v165 = vunpack.c.l.b16 %v75
    %v166 = vunpack.c.h.b16 %v75
    %v167 = vunpack.c.l.b16 %v76
    %v168 = vunpack.c.l.b16 %v77
    %v169 = vunpack.c.h.b16 %v77
    %v170 = vunpack.c.l.b16 %v78
    %v171 = vunpack.c.l.b16 %v79
    %v172 = vunpack.c.h.b16 %v79
    %v173 = vunpack.c.l.b16 %v80
    %v174 = vpack.c.b16 %v129, %v126
    %v175 = vpack.c.b16 %v130, %v127
    %v176 = vpack.c.b16 %v131, %v128
    %v177 = vpack.c.b16 %v135, %v132
    %v178 = vpack.c.b16 %v136, %v133
    %v179 = vpack.c.b16 %v137, %v134
    %v180 = vpack.c.b16 %v141, %v138
    %v181 = vpack.c.b16 %v142, %v139
    %v182 = vpack.c.b16 %v143, %v140
    %v183 = vpack.c.b16 %v147, %v144
    %v184 = vpack.c.b16 %v148, %v145
    %v185 = vpack.c.b16 %v149, %v146
    %v186 = vpack.c.b16 %v153, %v150
    %v187 = vpack.c.b16 %v154, %v151
    %v188 = vpack.c.b16 %v155, %v152
    %v189 = vpack.c.b16 %v159, %v156
    %v190 = vpack.c.b16 %v160, %v157
    %v191 = vpack.c.b16 %v161, %v158
    %v192 = vpack.c.b16 %v165, %v162
    %v193 = vpack.c.b16 %v166, %v163
    %v194 = vpack.c.b16 %v167, %v164
    %v195 = vpack.c.b16 %v171, %v168
    %v196 = vpack.c.b16 %v172, %v169
    %v197 = vpack.c.b16 %v173, %v170
    %222 = vmatprep.subr.bf16.mxu0 %v196
    %223 = vmatpush1.bf16.msra.mxu0 %v195
    %224 = vmatprep.subr.bf16.mxu0 %v193
    %225 = vmatpush1.bf16.msra.mxu0 %v192
    %226 = vmatprep.subr.bf16.mxu0 %v190
    %227 = vmatpush1.bf16.msra.mxu0 %v189
    %228 = vmatprep.subr.bf16.mxu0 %v187
    %229 = vmatpush1.bf16.msra.mxu0 %v186
    %230 = vmatprep.subr.bf16.mxu0 %v184
    %231 = vmatpush1.bf16.msra.mxu0 %v183
    %232 = vmatprep.subr.bf16.mxu0 %v181
    %233 = vmatpush1.bf16.msra.mxu0 %v180
    %234 = vmatprep.subr.bf16.mxu0 %v178
    %235 = vmatpush1.bf16.msra.mxu0 %v177
    %236 = vmatprep.subr.bf16.mxu0 %v175
    %237 = vmatpush1.bf16.msra.mxu0 %v174
    %238 = vmatprep.subr.bf16.mxu0 0
    %239 = vmatpush2.bf16.msra.mxu0 0
    %240 = vmatprep.subr.bf16.mxu0 0
    %241 = vmatpush2.bf16.msra.mxu0 0
    %242 = vmatprep.subr.bf16.mxu0 0
    %243 = vmatpush2.bf16.msra.mxu0 0
    %244 = vmatprep.subr.bf16.mxu0 0
    %245 = vmatpush2.bf16.msra.mxu0 0
    %246 = vmatprep.subr.bf16.mxu0 0
    %247 = vmatpush2.bf16.msra.mxu0 0
    %248 = vmatprep.subr.bf16.mxu0 0
    %249 = vmatpush2.bf16.msra.mxu0 0
    %250 = vmatprep.subr.bf16.mxu0 0
    %251 = vmatpush2.bf16.msra.mxu0 0
    %252 = vmatprep.subr.bf16.mxu0 0
    %253 = vmatpush2.bf16.msra.mxu0 0
    %254 = vmatprep.mubr.bf16.mxu0 0
    %255 = vmatmul.mubr.bf16.gmra.mxu0 %v93
    %v256 = vpop.f32.mrf.mxu0
    %v257 = vadd.f32 0.0, %v256
    %v258 = vpop.f32.mrf.mxu0
    %v259 = vadd.f32 0.0, %v258
    %v260 = vpop.f32.mrf.mxu0
    %v261 = vpop.f32.mrf.mxu0
    %262 = vdwg.mxu0
    %263 = vmatprep.subr.bf16.mxu0 0
    %264 = vmatpush1.bf16.msra.mxu0 %v197
    %265 = vmatprep.subr.bf16.mxu0 0
    %266 = vmatpush1.bf16.msra.mxu0 %v194
    %267 = vmatprep.subr.bf16.mxu0 0
    %268 = vmatpush1.bf16.msra.mxu0 %v191
    %269 = vmatprep.subr.bf16.mxu0 0
    %270 = vmatpush1.bf16.msra.mxu0 %v188
    %271 = vmatprep.subr.bf16.mxu0 0
    %272 = vmatpush1.bf16.msra.mxu0 %v185
    %273 = vmatprep.subr.bf16.mxu0 0
    %274 = vmatpush1.bf16.msra.mxu0 %v182
    %275 = vmatprep.subr.bf16.mxu0 0
    %276 = vmatpush1.bf16.msra.mxu0 %v179
    %277 = vmatprep.subr.bf16.mxu0 0
    %278 = vmatpush1.bf16.msra.mxu0 %v176
    %279 = vmatprep.subr.bf16.mxu0 0
    %280 = vmatpush2.bf16.msra.mxu0 0
    %281 = vmatprep.subr.bf16.mxu0 0
    %282 = vmatpush2.bf16.msra.mxu0 0
    %283 = vmatprep.subr.bf16.mxu0 0
    %284 = vmatpush2.bf16.msra.mxu0 0
    %285 = vmatprep.subr.bf16.mxu0 0
    %286 = vmatpush2.bf16.msra.mxu0 0
    %287 = vmatprep.subr.bf16.mxu0 0
    %288 = vmatpush2.bf16.msra.mxu0 0
    %289 = vmatprep.subr.bf16.mxu0 0
    %290 = vmatpush2.bf16.msra.mxu0 0
    %291 = vmatprep.subr.bf16.mxu0 0
    %292 = vmatpush2.bf16.msra.mxu0 0
    %293 = vmatprep.subr.bf16.mxu0 0
    %294 = vmatpush2.bf16.msra.mxu0 0
    %295 = vmatprep.mubr.bf16.mxu0 0
    %296 = vmatmul.mubr.bf16.gmra.mxu0 %v93
    %v297 = vpop.f32.mrf.mxu0
    %v298 = vadd.f32 0.0, %v297
    %v299 = vpop.f32.mrf.mxu0
    %v300 = vpop.f32.mrf.mxu0
    %v301 = vpop.f32.mrf.mxu0
    %302 = vdwg.mxu0
    %v303 = vadd.f32 %v92, %v257
    %v304 = vxor.u32 %v303, 2147483648
    %v305 = vmul.f32 %v304, 1.442695
    %v306 = vpow.pop %v305
    %v307 = vadd.f32 %v306, 1.0
    %v308 = vrcp.pop %v307
    %v309 = vmul.f32 1.0, %v308
    %v311 = vrot.slane %v92, 2
    %v313 = vadd.f32 %v311, %v259
    %v314 = vxor.u32 %v313, 2147483648
    %v315 = vmul.f32 %v314, 1.442695
    %v316 = vpow.pop %v315
    %v317 = vadd.f32 %v316, 1.0
    %v318 = vrcp.pop %v317
    %v319 = vmul.f32 1.0, %v318
    %v320 = vadd.f32 %v298, %v86
    %v321 = vmul.f32 %v309, %v320
    %v322 = vrot.slane %v92, 4
    %v324 = vadd.f32 %v322, %v321
    %v325 = vtanh.pop %v324
    %v326 = vsub.f32 %v88, %v325
    %v327 = vmul.f32 %v319, %v326
    %v328 = vadd.f32 %v325, %v327
    %s329 = smul.u32 0, 2
    %s330 = scalar_lea.vmem [#allocation8], %s329
    %331 = vst [vmem:[%s330] sm:$0x3] %v328
    %s332 = sadd.s32 0, 1
    %s333 = smul.u32 %s332, 3
    %s334 = scalar_lea.vmem [#allocation3], %s333
    %v335 = vld [vmem:[%s334] sm:$0x7]
    %v336 = vunpack.c.l.bf16 %v335
    %v337 = vpack.c.bf16 %v328, %v328
    %338 = vmatprep.subr.bf16.mxu0 %v196
    %339 = vmatpush1.bf16.msra.mxu0 %v195
    %340 = vmatprep.subr.bf16.mxu0 %v193
    %341 = vmatpush1.bf16.msra.mxu0 %v192
    %342 = vmatprep.subr.bf16.mxu0 %v190
    %343 = vmatpush1.bf16.msra.mxu0 %v189
    %344 = vmatprep.subr.bf16.mxu0 %v187
    %345 = vmatpush1.bf16.msra.mxu0 %v186
    %346 = vmatprep.subr.bf16.mxu0 %v184
    %347 = vmatpush1.bf16.msra.mxu0 %v183
    %348 = vmatprep.subr.bf16.mxu0 %v181
    %349 = vmatpush1.bf16.msra.mxu0 %v180
    %350 = vmatprep.subr.bf16.mxu0 %v178
    %351 = vmatpush1.bf16.msra.mxu0 %v177
    %352 = vmatprep.subr.bf16.mxu0 %v175
    %353 = vmatpush1.bf16.msra.mxu0 %v174
    %354 = vmatprep.subr.bf16.mxu0 0
    %355 = vmatpush2.bf16.msra.mxu0 0
    %356 = vmatprep.subr.bf16.mxu0 0
    %357 = vmatpush2.bf16.msra.mxu0 0
    %358 = vmatprep.subr.bf16.mxu0 0
    %359 = vmatpush2.bf16.msra.mxu0 0
    %360 = vmatprep.subr.bf16.mxu0 0
    %361 = vmatpush2.bf16.msra.mxu0 0
    %362 = vmatprep.subr.bf16.mxu0 0
    %363 = vmatpush2.bf16.msra.mxu0 0
    %364 = vmatprep.subr.bf16.mxu0 0
    %365 = vmatpush2.bf16.msra.mxu0 0
    %366 = vmatprep.subr.bf16.mxu0 0
    %367 = vmatpush2.bf16.msra.mxu0 0
    %368 = vmatprep.subr.bf16.mxu0 0
    %369 = vmatpush2.bf16.msra.mxu0 0
    %370 = vmatprep.mubr.bf16.mxu0 0
    %371 = vmatmul.mubr.bf16.gmra.mxu0 %v337
    %v372 = vpop.f32.mrf.mxu0
    %v373 = vadd.f32 0.0, %v372
    %v374 = vpop.f32.mrf.mxu0
    %v375 = vadd.f32 0.0, %v374
    %v376 = vpop.f32.mrf.mxu0
    %v377 = vpop.f32.mrf.mxu0
    %378 = vdwg.mxu0
    %379 = vmatprep.subr.bf16.mxu0 0
    %380 = vmatpush1.bf16.msra.mxu0 %v197
    %381 = vmatprep.subr.bf16.mxu0 0
    %382 = vmatpush1.bf16.msra.mxu0 %v194
    %383 = vmatprep.subr.bf16.mxu0 0
    %384 = vmatpush1.bf16.msra.mxu0 %v191
    %385 = vmatprep.subr.bf16.mxu0 0
    %386 = vmatpush1.bf16.msra.mxu0 %v188
    %387 = vmatprep.subr.bf16.mxu0 0
    %388 = vmatpush1.bf16.msra.mxu0 %v185
    %389 = vmatprep.subr.bf16.mxu0 0
    %390 = vmatpush1.bf16.msra.mxu0 %v182
    %391 = vmatprep.subr.bf16.mxu0 0
    %392 = vmatpush1.bf16.msra.mxu0 %v179
    %393 = vmatprep.subr.bf16.mxu0 0
    %394 = vmatpush1.bf16.msra.mxu0 %v176
    %395 = vmatprep.subr.bf16.mxu0 0
    %396 = vmatpush2.bf16.msra.mxu0 0
    %397 = vmatprep.subr.bf16.mxu0 0
    %398 = vmatpush2.bf16.msra.mxu0 0
    %399 = vmatprep.subr.bf16.mxu0 0
    %400 = vmatpush2.bf16.msra.mxu0 0
    %401 = vmatprep.subr.bf16.mxu0 0
    %402 = vmatpush2.bf16.msra.mxu0 0
    %403 = vmatprep.subr.bf16.mxu0 0
    %404 = vmatpush2.bf16.msra.mxu0 0
    %405 = vmatprep.subr.bf16.mxu0 0
    %406 = vmatpush2.bf16.msra.mxu0 0
    %407 = vmatprep.subr.bf16.mxu0 0
    %408 = vmatpush2.bf16.msra.mxu0 0
    %409 = vmatprep.subr.bf16.mxu0 0
    %410 = vmatpush2.bf16.msra.mxu0 0
    %411 = vmatprep.mubr.bf16.mxu0 0
    %412 = vmatmul.mubr.bf16.gmra.mxu0 %v337
    %v413 = vpop.f32.mrf.mxu0
    %v414 = vadd.f32 0.0, %v413
    %v415 = vpop.f32.mrf.mxu0
    %v416 = vpop.f32.mrf.mxu0
    %v417 = vpop.f32.mrf.mxu0
    %418 = vdwg.mxu0
    %v419 = vadd.f32 %v336, %v373
    %v420 = vxor.u32 %v419, 2147483648
    %v421 = vmul.f32 %v420, 1.442695
    %v422 = vpow.pop %v421
    %v423 = vadd.f32 %v422, 1.0
    %v424 = vrcp.pop %v423
    %v425 = vmul.f32 1.0, %v424
    %v427 = vrot.slane %v336, 2
    %v429 = vadd.f32 %v427, %v375
    %v430 = vxor.u32 %v429, 2147483648
    %v431 = vmul.f32 %v430, 1.442695
    %v432 = vpow.pop %v431
    %v433 = vadd.f32 %v432, 1.0
    %v434 = vrcp.pop %v433
    %v435 = vmul.f32 1.0, %v434
    %v436 = vadd.f32 %v414, %v86
    %v437 = vmul.f32 %v425, %v436
    %v438 = vrot.slane %v336, 4
    %v440 = vadd.f32 %v438, %v437
    %v441 = vtanh.pop %v440
    %v442 = vsub.f32 %v328, %v441
    %v443 = vmul.f32 %v435, %v442
    %v444 = vadd.f32 %v441, %v443
    %s445 = smul.u32 %s332, 2
    %s446 = scalar_lea.vmem [#allocation8], %s445
    %447 = vst [vmem:[%s446] sm:$0x3] %v444
    %s448 = sadd.s32 0, 2
    %s449 = smul.u32 %s448, 3
    %s450 = scalar_lea.vmem [#allocation3], %s449
    %v451 = vld [vmem:[%s450] sm:$0x7]
    %v452 = vunpack.c.l.bf16 %v451
    %v453 = vpack.c.bf16 %v444, %v444
    %454 = vmatprep.subr.bf16.mxu0 %v196
    %455 = vmatpush1.bf16.msra.mxu0 %v195
    %456 = vmatprep.subr.bf16.mxu0 %v193
    %457 = vmatpush1.bf16.msra.mxu0 %v192
    %458 = vmatprep.subr.bf16.mxu0 %v190
    %459 = vmatpush1.bf16.msra.mxu0 %v189
    %460 = vmatprep.subr.bf16.mxu0 %v187
    %461 = vmatpush1.bf16.msra.mxu0 %v186
    %462 = vmatprep.subr.bf16.mxu0 %v184
    %463 = vmatpush1.bf16.msra.mxu0 %v183
    %464 = vmatprep.subr.bf16.mxu0 %v181
    %465 = vmatpush1.bf16.msra.mxu0 %v180
    %466 = vmatprep.subr.bf16.mxu0 %v178
    %467 = vmatpush1.bf16.msra.mxu0 %v177
    %468 = vmatprep.subr.bf16.mxu0 %v175
    %469 = vmatpush1.bf16.msra.mxu0 %v174
    %470 = vmatprep.subr.bf16.mxu0 0
    %471 = vmatpush2.bf16.msra.mxu0 0
    %472 = vmatprep.subr.bf16.mxu0 0
    %473 = vmatpush2.bf16.msra.mxu0 0
    %474 = vmatprep.subr.bf16.mxu0 0
    %475 = vmatpush2.bf16.msra.mxu0 0
    %476 = vmatprep.subr.bf16.mxu0 0
    %477 = vmatpush2.bf16.msra.mxu0 0
    %478 = vmatprep.subr.bf16.mxu0 0
    %479 = vmatpush2.bf16.msra.mxu0 0
    %480 = vmatprep.subr.bf16.mxu0 0
    %481 = vmatpush2.bf16.msra.mxu0 0
    %482 = vmatprep.subr.bf16.mxu0 0
    %483 = vmatpush2.bf16.msra.mxu0 0
    %484 = vmatprep.subr.bf16.mxu0 0
    %485 = vmatpush2.bf16.msra.mxu0 0
    %486 = vmatprep.mubr.bf16.mxu0 0
    %487 = vmatmul.mubr.bf16.gmra.mxu0 %v453
    %v488 = vpop.f32.mrf.mxu0
    %v489 = vadd.f32 0.0, %v488
    %v490 = vpop.f32.mrf.mxu0
    %v491 = vadd.f32 0.0, %v490
    %v492 = vpop.f32.mrf.mxu0
    %v493 = vpop.f32.mrf.mxu0
    %494 = vdwg.mxu0
    %495 = vmatprep.subr.bf16.mxu0 0
    %496 = vmatpush1.bf16.msra.mxu0 %v197
    %497 = vmatprep.subr.bf16.mxu0 0
    %498 = vmatpush1.bf16.msra.mxu0 %v194
    %499 = vmatprep.subr.bf16.mxu0 0
    %500 = vmatpush1.bf16.msra.mxu0 %v191
    %501 = vmatprep.subr.bf16.mxu0 0
    %502 = vmatpush1.bf16.msra.mxu0 %v188
    %503 = vmatprep.subr.bf16.mxu0 0
    %504 = vmatpush1.bf16.msra.mxu0 %v185
    %505 = vmatprep.subr.bf16.mxu0 0
    %506 = vmatpush1.bf16.msra.mxu0 %v182
    %507 = vmatprep.subr.bf16.mxu0 0
    %508 = vmatpush1.bf16.msra.mxu0 %v179
    %509 = vmatprep.subr.bf16.mxu0 0
    %510 = vmatpush1.bf16.msra.mxu0 %v176
    %511 = vmatprep.subr.bf16.mxu0 0
    %512 = vmatpush2.bf16.msra.mxu0 0
    %513 = vmatprep.subr.bf16.mxu0 0
    %514 = vmatpush2.bf16.msra.mxu0 0
    %515 = vmatprep.subr.bf16.mxu0 0
    %516 = vmatpush2.bf16.msra.mxu0 0
    %517 = vmatprep.subr.bf16.mxu0 0
    %518 = vmatpush2.bf16.msra.mxu0 0
    %519 = vmatprep.subr.bf16.mxu0 0
    %520 = vmatpush2.bf16.msra.mxu0 0
    %521 = vmatprep.subr.bf16.mxu0 0
    %522 = vmatpush2.bf16.msra.mxu0 0
    %523 = vmatprep.subr.bf16.mxu0 0
    %524 = vmatpush2.bf16.msra.mxu0 0
    %525 = vmatprep.subr.bf16.mxu0 0
    %526 = vmatpush2.bf16.msra.mxu0 0
    %527 = vmatprep.mubr.bf16.mxu0 0
    %528 = vmatmul.mubr.bf16.gmra.mxu0 %v453
    %v529 = vpop.f32.mrf.mxu0
    %v530 = vadd.f32 0.0, %v529
    %v531 = vpop.f32.mrf.mxu0
    %v532 = vpop.f32.mrf.mxu0
    %v533 = vpop.f32.mrf.mxu0
    %534 = vdwg.mxu0
    %v535 = vadd.f32 %v452, %v489
    %v536 = vxor.u32 %v535, 2147483648
    %v537 = vmul.f32 %v536, 1.442695
    %v538 = vpow.pop %v537
    %v539 = vadd.f32 %v538, 1.0
    %v540 = vrcp.pop %v539
    %v541 = vmul.f32 1.0, %v540
    %v543 = vrot.slane %v452, 2
    %v545 = vadd.f32 %v543, %v491
    %v546 = vxor.u32 %v545, 2147483648
    %v547 = vmul.f32 %v546, 1.442695
    %v548 = vpow.pop %v547
    %v549 = vadd.f32 %v548, 1.0
    %v550 = vrcp.pop %v549
    %v551 = vmul.f32 1.0, %v550
    %v552 = vadd.f32 %v530, %v86
    %v553 = vmul.f32 %v541, %v552
    %v554 = vrot.slane %v452, 4
    %v556 = vadd.f32 %v554, %v553
    %v557 = vtanh.pop %v556
    %v558 = vsub.f32 %v444, %v557
    %v559 = vmul.f32 %v551, %v558
    %v560 = vadd.f32 %v557, %v559
    %s561 = smul.u32 %s448, 2
    %s562 = scalar_lea.vmem [#allocation8], %s561
    %563 = vst [vmem:[%s562] sm:$0x3] %v560
    %s564 = sadd.s32 0, 3
    %s565 = smul.u32 %s564, 3
    %s566 = scalar_lea.vmem [#allocation3], %s565
    %v567 = vld [vmem:[%s566] sm:$0x7]
    %v568 = vunpack.c.l.bf16 %v567
    %v569 = vpack.c.bf16 %v560, %v560
    %570 = vmatprep.subr.bf16.mxu0 %v196
    %571 = vmatpush1.bf16.msra.mxu0 %v195
    %572 = vmatprep.subr.bf16.mxu0 %v193
    %573 = vmatpush1.bf16.msra.mxu0 %v192
    %574 = vmatprep.subr.bf16.mxu0 %v190
    %575 = vmatpush1.bf16.msra.mxu0 %v189
    %576 = vmatprep.subr.bf16.mxu0 %v187
    %577 = vmatpush1.bf16.msra.mxu0 %v186
    %578 = vmatprep.subr.bf16.mxu0 %v184
    %579 = vmatpush1.bf16.msra.mxu0 %v183
    %580 = vmatprep.subr.bf16.mxu0 %v181
    %581 = vmatpush1.bf16.msra.mxu0 %v180
    %582 = vmatprep.subr.bf16.mxu0 %v178
    %583 = vmatpush1.bf16.msra.mxu0 %v177
    %584 = vmatprep.subr.bf16.mxu0 %v175
    %585 = vmatpush1.bf16.msra.mxu0 %v174
    %586 = vmatprep.subr.bf16.mxu0 0
    %587 = vmatpush2.bf16.msra.mxu0 0
    %588 = vmatprep.subr.bf16.mxu0 0
    %589 = vmatpush2.bf16.msra.mxu0 0
    %590 = vmatprep.subr.bf16.mxu0 0
    %591 = vmatpush2.bf16.msra.mxu0 0
    %592 = vmatprep.subr.bf16.mxu0 0
    %593 = vmatpush2.bf16.msra.mxu0 0
    %594 = vmatprep.subr.bf16.mxu0 0
    %595 = vmatpush2.bf16.msra.mxu0 0
    %596 = vmatprep.subr.bf16.mxu0 0
    %597 = vmatpush2.bf16.msra.mxu0 0
    %598 = vmatprep.subr.bf16.mxu0 0
    %599 = vmatpush2.bf16.msra.mxu0 0
    %600 = vmatprep.subr.bf16.mxu0 0
    %601 = vmatpush2.bf16.msra.mxu0 0
    %602 = vmatprep.mubr.bf16.mxu0 0
    %603 = vmatmul.mubr.bf16.gmra.mxu0 %v569
    %v604 = vpop.f32.mrf.mxu0
    %v605 = vadd.f32 0.0, %v604
    %v606 = vpop.f32.mrf.mxu0
    %v607 = vadd.f32 0.0, %v606
    %v608 = vpop.f32.mrf.mxu0
    %v609 = vpop.f32.mrf.mxu0
    %610 = vdwg.mxu0
    %611 = vmatprep.subr.bf16.mxu0 0
    %612 = vmatpush1.bf16.msra.mxu0 %v197
    %613 = vmatprep.subr.bf16.mxu0 0
    %614 = vmatpush1.bf16.msra.mxu0 %v194
    %615 = vmatprep.subr.bf16.mxu0 0
    %616 = vmatpush1.bf16.msra.mxu0 %v191
    %617 = vmatprep.subr.bf16.mxu0 0
    %618 = vmatpush1.bf16.msra.mxu0 %v188
    %619 = vmatprep.subr.bf16.mxu0 0
    %620 = vmatpush1.bf16.msra.mxu0 %v185
    %621 = vmatprep.subr.bf16.mxu0 0
    %622 = vmatpush1.bf16.msra.mxu0 %v182
    %623 = vmatprep.subr.bf16.mxu0 0
    %624 = vmatpush1.bf16.msra.mxu0 %v179
    %625 = vmatprep.subr.bf16.mxu0 0
    %626 = vmatpush1.bf16.msra.mxu0 %v176
    %627 = vmatprep.subr.bf16.mxu0 0
    %628 = vmatpush2.bf16.msra.mxu0 0
    %629 = vmatprep.subr.bf16.mxu0 0
    %630 = vmatpush2.bf16.msra.mxu0 0
    %631 = vmatprep.subr.bf16.mxu0 0
    %632 = vmatpush2.bf16.msra.mxu0 0
    %633 = vmatprep.subr.bf16.mxu0 0
    %634 = vmatpush2.bf16.msra.mxu0 0
    %635 = vmatprep.subr.bf16.mxu0 0
    %636 = vmatpush2.bf16.msra.mxu0 0
    %637 = vmatprep.subr.bf16.mxu0 0
    %638 = vmatpush2.bf16.msra.mxu0 0
    %639 = vmatprep.subr.bf16.mxu0 0
    %640 = vmatpush2.bf16.msra.mxu0 0
    %641 = vmatprep.subr.bf16.mxu0 0
    %642 = vmatpush2.bf16.msra.mxu0 0
    %643 = vmatprep.mubr.bf16.mxu0 0
    %644 = vmatmul.mubr.bf16.gmra.mxu0 %v569
    %v645 = vpop.f32.mrf.mxu0
    %v646 = vadd.f32 0.0, %v645
    %v647 = vpop.f32.mrf.mxu0
    %v648 = vpop.f32.mrf.mxu0
    %v649 = vpop.f32.mrf.mxu0
    %650 = vdwg.mxu0
    %v651 = vadd.f32 %v568, %v605
    %v652 = vxor.u32 %v651, 2147483648
    %v653 = vmul.f32 %v652, 1.442695
    %v654 = vpow.pop %v653
    %v655 = vadd.f32 %v654, 1.0
    %v656 = vrcp.pop %v655
    %v657 = vmul.f32 1.0, %v656
    %v659 = vrot.slane %v568, 2
    %v661 = vadd.f32 %v659, %v607
    %v662 = vxor.u32 %v661, 2147483648
    %v663 = vmul.f32 %v662, 1.442695
    %v664 = vpow.pop %v663
    %v665 = vadd.f32 %v664, 1.0
    %v666 = vrcp.pop %v665
    %v667 = vmul.f32 1.0, %v666
    %v668 = vadd.f32 %v646, %v86
    %v669 = vmul.f32 %v657, %v668
    %v670 = vrot.slane %v568, 4
    %v672 = vadd.f32 %v670, %v669
    %v673 = vtanh.pop %v672
    %v674 = vsub.f32 %v560, %v673
    %v675 = vmul.f32 %v667, %v674
    %v676 = vadd.f32 %v673, %v675
    %s677 = smul.u32 %s564, 2
    %s678 = scalar_lea.vmem [#allocation8], %s677
    %679 = vst [vmem:[%s678] sm:$0x3] %v676
    %s680 = sadd.s32 0, 4
    %s681 = smul.u32 %s680, 3
    %s682 = scalar_lea.vmem [#allocation3], %s681
    %v683 = vld [vmem:[%s682] sm:$0x7]
    %v684 = vunpack.c.l.bf16 %v683
    %v685 = vpack.c.bf16 %v676, %v676
    %686 = vmatprep.subr.bf16.mxu0 %v196
    %687 = vmatpush1.bf16.msra.mxu0 %v195
    %688 = vmatprep.subr.bf16.mxu0 %v193
    %689 = vmatpush1.bf16.msra.mxu0 %v192
    %690 = vmatprep.subr.bf16.mxu0 %v190
    %691 = vmatpush1.bf16.msra.mxu0 %v189
    %692 = vmatprep.subr.bf16.mxu0 %v187
    %693 = vmatpush1.bf16.msra.mxu0 %v186
    %694 = vmatprep.subr.bf16.mxu0 %v184
    %695 = vmatpush1.bf16.msra.mxu0 %v183
    %696 = vmatprep.subr.bf16.mxu0 %v181
    %697 = vmatpush1.bf16.msra.mxu0 %v180
    %698 = vmatprep.subr.bf16.mxu0 %v178
    %699 = vmatpush1.bf16.msra.mxu0 %v177
    %700 = vmatprep.subr.bf16.mxu0 %v175
    %701 = vmatpush1.bf16.msra.mxu0 %v174
    %702 = vmatprep.subr.bf16.mxu0 0
    %703 = vmatpush2.bf16.msra.mxu0 0
    %704 = vmatprep.subr.bf16.mxu0 0
    %705 = vmatpush2.bf16.msra.mxu0 0
    %706 = vmatprep.subr.bf16.mxu0 0
    %707 = vmatpush2.bf16.msra.mxu0 0
    %708 = vmatprep.subr.bf16.mxu0 0
    %709 = vmatpush2.bf16.msra.mxu0 0
    %710 = vmatprep.subr.bf16.mxu0 0
    %711 = vmatpush2.bf16.msra.mxu0 0
    %712 = vmatprep.subr.bf16.mxu0 0
    %713 = vmatpush2.bf16.msra.mxu0 0
    %714 = vmatprep.subr.bf16.mxu0 0
    %715 = vmatpush2.bf16.msra.mxu0 0
    %716 = vmatprep.subr.bf16.mxu0 0
    %717 = vmatpush2.bf16.msra.mxu0 0
    %718 = vmatprep.mubr.bf16.mxu0 0
    %719 = vmatmul.mubr.bf16.gmra.mxu0 %v685
    %v720 = vpop.f32.mrf.mxu0
    %v721 = vadd.f32 0.0, %v720
    %v722 = vpop.f32.mrf.mxu0
    %v723 = vadd.f32 0.0, %v722
    %v724 = vpop.f32.mrf.mxu0
    %v725 = vpop.f32.mrf.mxu0
    %726 = vdwg.mxu0
    %727 = vmatprep.subr.bf16.mxu0 0
    %728 = vmatpush1.bf16.msra.mxu0 %v197
    %729 = vmatprep.subr.bf16.mxu0 0
    %730 = vmatpush1.bf16.msra.mxu0 %v194
    %731 = vmatprep.subr.bf16.mxu0 0
    %732 = vmatpush1.bf16.msra.mxu0 %v191
    %733 = vmatprep.subr.bf16.mxu0 0
    %734 = vmatpush1.bf16.msra.mxu0 %v188
    %735 = vmatprep.subr.bf16.mxu0 0
    %736 = vmatpush1.bf16.msra.mxu0 %v185
    %737 = vmatprep.subr.bf16.mxu0 0
    %738 = vmatpush1.bf16.msra.mxu0 %v182
    %739 = vmatprep.subr.bf16.mxu0 0
    %740 = vmatpush1.bf16.msra.mxu0 %v179
    %741 = vmatprep.subr.bf16.mxu0 0
    %742 = vmatpush1.bf16.msra.mxu0 %v176
    %743 = vmatprep.subr.bf16.mxu0 0
    %744 = vmatpush2.bf16.msra.mxu0 0
    %745 = vmatprep.subr.bf16.mxu0 0
    %746 = vmatpush2.bf16.msra.mxu0 0
    %747 = vmatprep.subr.bf16.mxu0 0
    %748 = vmatpush2.bf16.msra.mxu0 0
    %749 = vmatprep.subr.bf16.mxu0 0
    %750 = vmatpush2.bf16.msra.mxu0 0
    %751 = vmatprep.subr.bf16.mxu0 0
    %752 = vmatpush2.bf16.msra.mxu0 0
    %753 = vmatprep.subr.bf16.mxu0 0
    %754 = vmatpush2.bf16.msra.mxu0 0
    %755 = vmatprep.subr.bf16.mxu0 0
    %756 = vmatpush2.bf16.msra.mxu0 0
    %757 = vmatprep.subr.bf16.mxu0 0
    %758 = vmatpush2.bf16.msra.mxu0 0
    %759 = vmatprep.mubr.bf16.mxu0 0
    %760 = vmatmul.mubr.bf16.gmra.mxu0 %v685
    %v761 = vpop.f32.mrf.mxu0
    %v762 = vadd.f32 0.0, %v761
    %v763 = vpop.f32.mrf.mxu0
    %v764 = vpop.f32.mrf.mxu0
    %v765 = vpop.f32.mrf.mxu0
    %766 = vdwg.mxu0
    %v767 = vadd.f32 %v684, %v721
    %v768 = vxor.u32 %v767, 2147483648
    %v769 = vmul.f32 %v768, 1.442695
    %v770 = vpow.pop %v769
    %v771 = vadd.f32 %v770, 1.0
    %v772 = vrcp.pop %v771
    %v773 = vmul.f32 1.0, %v772
    %v775 = vrot.slane %v684, 2
    %v777 = vadd.f32 %v775, %v723
    %v778 = vxor.u32 %v777, 2147483648
    %v779 = vmul.f32 %v778, 1.442695
    %v780 = vpow.pop %v779
    %v781 = vadd.f32 %v780, 1.0
    %v782 = vrcp.pop %v781
    %v783 = vmul.f32 1.0, %v782
    %v784 = vadd.f32 %v762, %v86
    %v785 = vmul.f32 %v773, %v784
    %v786 = vrot.slane %v684, 4
    %v788 = vadd.f32 %v786, %v785
    %v789 = vtanh.pop %v788
    %v790 = vsub.f32 %v676, %v789
    %v791 = vmul.f32 %v783, %v790
    %v792 = vadd.f32 %v789, %v791
    %s793 = smul.u32 %s680, 2
    %s794 = scalar_lea.vmem [#allocation8], %s793
    %795 = vst [vmem:[%s794] sm:$0x3] %v792
    %s796 = sadd.s32 0, 5
    %s797 = smul.u32 %s796, 3
    %s798 = scalar_lea.vmem [#allocation3], %s797
    %v799 = vld [vmem:[%s798] sm:$0x7]
    %v800 = vunpack.c.l.bf16 %v799
    %v801 = vpack.c.bf16 %v792, %v792
    %802 = vmatprep.subr.bf16.mxu0 %v196
    %803 = vmatpush1.bf16.msra.mxu0 %v195
    %804 = vmatprep.subr.bf16.mxu0 %v193
    %805 = vmatpush1.bf16.msra.mxu0 %v192
    %806 = vmatprep.subr.bf16.mxu0 %v190
    %807 = vmatpush1.bf16.msra.mxu0 %v189
    %808 = vmatprep.subr.bf16.mxu0 %v187
    %809 = vmatpush1.bf16.msra.mxu0 %v186
    %810 = vmatprep.subr.bf16.mxu0 %v184
    %811 = vmatpush1.bf16.msra.mxu0 %v183
    %812 = vmatprep.subr.bf16.mxu0 %v181
    %813 = vmatpush1.bf16.msra.mxu0 %v180
    %814 = vmatprep.subr.bf16.mxu0 %v178
    %815 = vmatpush1.bf16.msra.mxu0 %v177
    %816 = vmatprep.subr.bf16.mxu0 %v175
    %817 = vmatpush1.bf16.msra.mxu0 %v174
    %818 = vmatprep.subr.bf16.mxu0 0
    %819 = vmatpush2.bf16.msra.mxu0 0
    %820 = vmatprep.subr.bf16.mxu0 0
    %821 = vmatpush2.bf16.msra.mxu0 0
    %822 = vmatprep.subr.bf16.mxu0 0
    %823 = vmatpush2.bf16.msra.mxu0 0
    %824 = vmatprep.subr.bf16.mxu0 0
    %825 = vmatpush2.bf16.msra.mxu0 0
    %826 = vmatprep.subr.bf16.mxu0 0
    %827 = vmatpush2.bf16.msra.mxu0 0
    %828 = vmatprep.subr.bf16.mxu0 0
    %829 = vmatpush2.bf16.msra.mxu0 0
    %830 = vmatprep.subr.bf16.mxu0 0
    %831 = vmatpush2.bf16.msra.mxu0 0
    %832 = vmatprep.subr.bf16.mxu0 0
    %833 = vmatpush2.bf16.msra.mxu0 0
    %834 = vmatprep.mubr.bf16.mxu0 0
    %835 = vmatmul.mubr.bf16.gmra.mxu0 %v801
    %v836 = vpop.f32.mrf.mxu0
    %v837 = vadd.f32 0.0, %v836
    %v838 = vpop.f32.mrf.mxu0
    %v839 = vadd.f32 0.0, %v838
    %v840 = vpop.f32.mrf.mxu0
    %v841 = vpop.f32.mrf.mxu0
    %842 = vdwg.mxu0
    %843 = vmatprep.subr.bf16.mxu0 0
    %844 = vmatpush1.bf16.msra.mxu0 %v197
    %845 = vmatprep.subr.bf16.mxu0 0
    %846 = vmatpush1.bf16.msra.mxu0 %v194
    %847 = vmatprep.subr.bf16.mxu0 0
    %848 = vmatpush1.bf16.msra.mxu0 %v191
    %849 = vmatprep.subr.bf16.mxu0 0
    %850 = vmatpush1.bf16.msra.mxu0 %v188
    %851 = vmatprep.subr.bf16.mxu0 0
    %852 = vmatpush1.bf16.msra.mxu0 %v185
    %853 = vmatprep.subr.bf16.mxu0 0
    %854 = vmatpush1.bf16.msra.mxu0 %v182
    %855 = vmatprep.subr.bf16.mxu0 0
    %856 = vmatpush1.bf16.msra.mxu0 %v179
    %857 = vmatprep.subr.bf16.mxu0 0
    %858 = vmatpush1.bf16.msra.mxu0 %v176
    %859 = vmatprep.subr.bf16.mxu0 0
    %860 = vmatpush2.bf16.msra.mxu0 0
    %861 = vmatprep.subr.bf16.mxu0 0
    %862 = vmatpush2.bf16.msra.mxu0 0
    %863 = vmatprep.subr.bf16.mxu0 0
    %864 = vmatpush2.bf16.msra.mxu0 0
    %865 = vmatprep.subr.bf16.mxu0 0
    %866 = vmatpush2.bf16.msra.mxu0 0
    %867 = vmatprep.subr.bf16.mxu0 0
    %868 = vmatpush2.bf16.msra.mxu0 0
    %869 = vmatprep.subr.bf16.mxu0 0
    %870 = vmatpush2.bf16.msra.mxu0 0
    %871 = vmatprep.subr.bf16.mxu0 0
    %872 = vmatpush2.bf16.msra.mxu0 0
    %873 = vmatprep.subr.bf16.mxu0 0
    %874 = vmatpush2.bf16.msra.mxu0 0
    %875 = vmatprep.mubr.bf16.mxu0 0
    %876 = vmatmul.mubr.bf16.gmra.mxu0 %v801
    %v877 = vpop.f32.mrf.mxu0
    %v878 = vadd.f32 0.0, %v877
    %v879 = vpop.f32.mrf.mxu0
    %v880 = vpop.f32.mrf.mxu0
    %v881 = vpop.f32.mrf.mxu0
    %882 = vdwg.mxu0
    %v883 = vadd.f32 %v800, %v837
    %v884 = vxor.u32 %v883, 2147483648
    %v885 = vmul.f32 %v884, 1.442695
    %v886 = vpow.pop %v885
    %v887 = vadd.f32 %v886, 1.0
    %v888 = vrcp.pop %v887
    %v889 = vmul.f32 1.0, %v888
    %v891 = vrot.slane %v800, 2
    %v893 = vadd.f32 %v891, %v839
    %v894 = vxor.u32 %v893, 2147483648
    %v895 = vmul.f32 %v894, 1.442695
    %v896 = vpow.pop %v895
    %v897 = vadd.f32 %v896, 1.0
    %v898 = vrcp.pop %v897
    %v899 = vmul.f32 1.0, %v898
    %v900 = vadd.f32 %v878, %v86
    %v901 = vmul.f32 %v889, %v900
    %v902 = vrot.slane %v800, 4
    %v904 = vadd.f32 %v902, %v901
    %v905 = vtanh.pop %v904
    %v906 = vsub.f32 %v792, %v905
    %v907 = vmul.f32 %v899, %v906
    %v908 = vadd.f32 %v905, %v907
    %s909 = smul.u32 %s796, 2
    %s910 = scalar_lea.vmem [#allocation8], %s909
    %911 = vst [vmem:[%s910] sm:$0x3] %v908
    %s912 = sadd.s32 0, 6
    %s913 = smul.u32 %s912, 3
    %s914 = scalar_lea.vmem [#allocation3], %s913
    %v915 = vld [vmem:[%s914] sm:$0x7]
    %v916 = vunpack.c.l.bf16 %v915
    %v917 = vpack.c.bf16 %v908, %v908
    %918 = vmatprep.subr.bf16.mxu0 %v196
    %919 = vmatpush1.bf16.msra.mxu0 %v195
    %920 = vmatprep.subr.bf16.mxu0 %v193
    %921 = vmatpush1.bf16.msra.mxu0 %v192
    %922 = vmatprep.subr.bf16.mxu0 %v190
    %923 = vmatpush1.bf16.msra.mxu0 %v189
    %924 = vmatprep.subr.bf16.mxu0 %v187
    %925 = vmatpush1.bf16.msra.mxu0 %v186
    %926 = vmatprep.subr.bf16.mxu0 %v184
    %927 = vmatpush1.bf16.msra.mxu0 %v183
    %928 = vmatprep.subr.bf16.mxu0 %v181
    %929 = vmatpush1.bf16.msra.mxu0 %v180
    %930 = vmatprep.subr.bf16.mxu0 %v178
    %931 = vmatpush1.bf16.msra.mxu0 %v177
    %932 = vmatprep.subr.bf16.mxu0 %v175
    %933 = vmatpush1.bf16.msra.mxu0 %v174
    %934 = vmatprep.subr.bf16.mxu0 0
    %935 = vmatpush2.bf16.msra.mxu0 0
    %936 = vmatprep.subr.bf16.mxu0 0
    %937 = vmatpush2.bf16.msra.mxu0 0
    %938 = vmatprep.subr.bf16.mxu0 0
    %939 = vmatpush2.bf16.msra.mxu0 0
    %940 = vmatprep.subr.bf16.mxu0 0
    %941 = vmatpush2.bf16.msra.mxu0 0
    %942 = vmatprep.subr.bf16.mxu0 0
    %943 = vmatpush2.bf16.msra.mxu0 0
    %944 = vmatprep.subr.bf16.mxu0 0
    %945 = vmatpush2.bf16.msra.mxu0 0
    %946 = vmatprep.subr.bf16.mxu0 0
    %947 = vmatpush2.bf16.msra.mxu0 0
    %948 = vmatprep.subr.bf16.mxu0 0
    %949 = vmatpush2.bf16.msra.mxu0 0
    %950 = vmatprep.mubr.bf16.mxu0 0
    %951 = vmatmul.mubr.bf16.gmra.mxu0 %v917
    %v952 = vpop.f32.mrf.mxu0
    %v953 = vadd.f32 0.0, %v952
    %v954 = vpop.f32.mrf.mxu0
    %v955 = vadd.f32 0.0, %v954
    %v956 = vpop.f32.mrf.mxu0
    %v957 = vpop.f32.mrf.mxu0
    %958 = vdwg.mxu0
    %959 = vmatprep.subr.bf16.mxu0 0
    %960 = vmatpush1.bf16.msra.mxu0 %v197
    %961 = vmatprep.subr.bf16.mxu0 0
    %962 = vmatpush1.bf16.msra.mxu0 %v194
    %963 = vmatprep.subr.bf16.mxu0 0
    %964 = vmatpush1.bf16.msra.mxu0 %v191
    %965 = vmatprep.subr.bf16.mxu0 0
    %966 = vmatpush1.bf16.msra.mxu0 %v188
    %967 = vmatprep.subr.bf16.mxu0 0
    %968 = vmatpush1.bf16.msra.mxu0 %v185
    %969 = vmatprep.subr.bf16.mxu0 0
    %970 = vmatpush1.bf16.msra.mxu0 %v182
    %971 = vmatprep.subr.bf16.mxu0 0
    %972 = vmatpush1.bf16.msra.mxu0 %v179
    %973 = vmatprep.subr.bf16.mxu0 0
    %974 = vmatpush1.bf16.msra.mxu0 %v176
    %975 = vmatprep.subr.bf16.mxu0 0
    %976 = vmatpush2.bf16.msra.mxu0 0
    %977 = vmatprep.subr.bf16.mxu0 0
    %978 = vmatpush2.bf16.msra.mxu0 0
    %979 = vmatprep.subr.bf16.mxu0 0
    %980 = vmatpush2.bf16.msra.mxu0 0
    %981 = vmatprep.subr.bf16.mxu0 0
    %982 = vmatpush2.bf16.msra.mxu0 0
    %983 = vmatprep.subr.bf16.mxu0 0
    %984 = vmatpush2.bf16.msra.mxu0 0
    %985 = vmatprep.subr.bf16.mxu0 0
    %986 = vmatpush2.bf16.msra.mxu0 0
    %987 = vmatprep.subr.bf16.mxu0 0
    %988 = vmatpush2.bf16.msra.mxu0 0
    %989 = vmatprep.subr.bf16.mxu0 0
    %990 = vmatpush2.bf16.msra.mxu0 0
    %991 = vmatprep.mubr.bf16.mxu0 0
    %992 = vmatmul.mubr.bf16.gmra.mxu0 %v917
    %v993 = vpop.f32.mrf.mxu0
    %v994 = vadd.f32 0.0, %v993
    %v995 = vpop.f32.mrf.mxu0
    %v996 = vpop.f32.mrf.mxu0
    %v997 = vpop.f32.mrf.mxu0
    %998 = vdwg.mxu0
    %v999 = vadd.f32 %v916, %v953
    %v1000 = vxor.u32 %v999, 2147483648
    %v1001 = vmul.f32 %v1000, 1.442695
    %v1002 = vpow.pop %v1001
    %v1003 = vadd.f32 %v1002, 1.0
    %v1004 = vrcp.pop %v1003
    %v1005 = vmul.f32 1.0, %v1004
    %v1007 = vrot.slane %v916, 2
    %v1009 = vadd.f32 %v1007, %v955
    %v1010 = vxor.u32 %v1009, 2147483648
    %v1011 = vmul.f32 %v1010, 1.442695
    %v1012 = vpow.pop %v1011
    %v1013 = vadd.f32 %v1012, 1.0
    %v1014 = vrcp.pop %v1013
    %v1015 = vmul.f32 1.0, %v1014
    %v1016 = vadd.f32 %v994, %v86
    %v1017 = vmul.f32 %v1005, %v1016
    %v1018 = vrot.slane %v916, 4
    %v1020 = vadd.f32 %v1018, %v1017
    %v1021 = vtanh.pop %v1020
    %v1022 = vsub.f32 %v908, %v1021
    %v1023 = vmul.f32 %v1015, %v1022
    %v1024 = vadd.f32 %v1021, %v1023
    %s1025 = smul.u32 %s912, 2
    %s1026 = scalar_lea.vmem [#allocation8], %s1025
    %1027 = vst [vmem:[%s1026] sm:$0x3] %v1024
    %s1028 = sadd.s32 0, 7
    %s1029 = smul.u32 %s1028, 3
    %s1030 = scalar_lea.vmem [#allocation3], %s1029
    %v1031 = vld [vmem:[%s1030] sm:$0x7]
    %v1032 = vunpack.c.l.bf16 %v1031
    %v1033 = vpack.c.bf16 %v1024, %v1024
    %1034 = vmatprep.subr.bf16.mxu0 %v196
    %1035 = vmatpush1.bf16.msra.mxu0 %v195
    %1036 = vmatprep.subr.bf16.mxu0 %v193
    %1037 = vmatpush1.bf16.msra.mxu0 %v192
    %1038 = vmatprep.subr.bf16.mxu0 %v190
    %1039 = vmatpush1.bf16.msra.mxu0 %v189
    %1040 = vmatprep.subr.bf16.mxu0 %v187
    %1041 = vmatpush1.bf16.msra.mxu0 %v186
    %1042 = vmatprep.subr.bf16.mxu0 %v184
    %1043 = vmatpush1.bf16.msra.mxu0 %v183
    %1044 = vmatprep.subr.bf16.mxu0 %v181
    %1045 = vmatpush1.bf16.msra.mxu0 %v180
    %1046 = vmatprep.subr.bf16.mxu0 %v178
    %1047 = vmatpush1.bf16.msra.mxu0 %v177
    %1048 = vmatprep.subr.bf16.mxu0 %v175
    %1049 = vmatpush1.bf16.msra.mxu0 %v174
    %1050 = vmatprep.subr.bf16.mxu0 0
    %1051 = vmatpush2.bf16.msra.mxu0 0
    %1052 = vmatprep.subr.bf16.mxu0 0
    %1053 = vmatpush2.bf16.msra.mxu0 0
    %1054 = vmatprep.subr.bf16.mxu0 0
    %1055 = vmatpush2.bf16.msra.mxu0 0
    %1056 = vmatprep.subr.bf16.mxu0 0
    %1057 = vmatpush2.bf16.msra.mxu0 0
    %1058 = vmatprep.subr.bf16.mxu0 0
    %1059 = vmatpush2.bf16.msra.mxu0 0
    %1060 = vmatprep.subr.bf16.mxu0 0
    %1061 = vmatpush2.bf16.msra.mxu0 0
    %1062 = vmatprep.subr.bf16.mxu0 0
    %1063 = vmatpush2.bf16.msra.mxu0 0
    %1064 = vmatprep.subr.bf16.mxu0 0
    %1065 = vmatpush2.bf16.msra.mxu0 0
    %1066 = vmatprep.mubr.bf16.mxu0 0
    %1067 = vmatmul.mubr.bf16.gmra.mxu0 %v1033
    %v1068 = vpop.f32.mrf.mxu0
    %v1069 = vadd.f32 0.0, %v1068
    %v1070 = vpop.f32.mrf.mxu0
    %v1071 = vadd.f32 0.0, %v1070
    %v1072 = vpop.f32.mrf.mxu0
    %v1073 = vpop.f32.mrf.mxu0
    %1074 = vdwg.mxu0
    %1075 = vmatprep.subr.bf16.mxu0 0
    %1076 = vmatpush1.bf16.msra.mxu0 %v197
    %1077 = vmatprep.subr.bf16.mxu0 0
    %1078 = vmatpush1.bf16.msra.mxu0 %v194
    %1079 = vmatprep.subr.bf16.mxu0 0
    %1080 = vmatpush1.bf16.msra.mxu0 %v191
    %1081 = vmatprep.subr.bf16.mxu0 0
    %1082 = vmatpush1.bf16.msra.mxu0 %v188
    %1083 = vmatprep.subr.bf16.mxu0 0
    %1084 = vmatpush1.bf16.msra.mxu0 %v185
    %1085 = vmatprep.subr.bf16.mxu0 0
    %1086 = vmatpush1.bf16.msra.mxu0 %v182
    %1087 = vmatprep.subr.bf16.mxu0 0
    %1088 = vmatpush1.bf16.msra.mxu0 %v179
    %1089 = vmatprep.subr.bf16.mxu0 0
    %1090 = vmatpush1.bf16.msra.mxu0 %v176
    %1091 = vmatprep.subr.bf16.mxu0 0
    %1092 = vmatpush2.bf16.msra.mxu0 0
    %1093 = vmatprep.subr.bf16.mxu0 0
    %1094 = vmatpush2.bf16.msra.mxu0 0
    %1095 = vmatprep.subr.bf16.mxu0 0
    %1096 = vmatpush2.bf16.msra.mxu0 0
    %1097 = vmatprep.subr.bf16.mxu0 0
    %1098 = vmatpush2.bf16.msra.mxu0 0
    %1099 = vmatprep.subr.bf16.mxu0 0
    %1100 = vmatpush2.bf16.msra.mxu0 0
    %1101 = vmatprep.subr.bf16.mxu0 0
    %1102 = vmatpush2.bf16.msra.mxu0 0
    %1103 = vmatprep.subr.bf16.mxu0 0
    %1104 = vmatpush2.bf16.msra.mxu0 0
    %1105 = vmatprep.subr.bf16.mxu0 0
    %1106 = vmatpush2.bf16.msra.mxu0 0
    %1107 = vmatprep.mubr.bf16.mxu0 0
    %1108 = vmatmul.mubr.bf16.gmra.mxu0 %v1033
    %v1109 = vpop.f32.mrf.mxu0
    %v1110 = vadd.f32 0.0, %v1109
    %v1111 = vpop.f32.mrf.mxu0
    %v1112 = vpop.f32.mrf.mxu0
    %v1113 = vpop.f32.mrf.mxu0
    %1114 = vdwg.mxu0
    %v1115 = vadd.f32 %v1032, %v1069
    %v1116 = vxor.u32 %v1115, 2147483648
    %v1117 = vmul.f32 %v1116, 1.442695
    %v1118 = vpow.pop %v1117
    %v1119 = vadd.f32 %v1118, 1.0
    %v1120 = vrcp.pop %v1119
    %v1121 = vmul.f32 1.0, %v1120
    %v1123 = vrot.slane %v1032, 2
    %v1125 = vadd.f32 %v1123, %v1071
    %v1126 = vxor.u32 %v1125, 2147483648
    %v1127 = vmul.f32 %v1126, 1.442695
    %v1128 = vpow.pop %v1127
    %v1129 = vadd.f32 %v1128, 1.0
    %v1130 = vrcp.pop %v1129
    %v1131 = vmul.f32 1.0, %v1130
    %v1132 = vadd.f32 %v1110, %v86
    %v1133 = vmul.f32 %v1121, %v1132
    %v1134 = vrot.slane %v1032, 4
    %v1136 = vadd.f32 %v1134, %v1133
    %v1137 = vtanh.pop %v1136
    %v1138 = vsub.f32 %v1024, %v1137
    %v1139 = vmul.f32 %v1131, %v1138
    %v1140 = vadd.f32 %v1137, %v1139
    %s1141 = smul.u32 %s1028, 2
    %s1142 = scalar_lea.vmem [#allocation8], %s1141
    %1143 = vst [vmem:[%s1142] sm:$0x3] %v1140
    %1144 = vst [vmem:[#allocation2] sm:$0x3] %v1140
    // Predicated region
    $region26: #{tpu_custom_call.1} parent=1 // pred_check
      _
    $region27: #{tpu_custom_call.1} parent=1 // pred_check_branch
      %1146 = sbr.rel (0) target = $region29
    $region28: #{tpu_custom_call.1} parent=1 // pred_region
      %s1148 = ssub.s32 256, 256
      %1149 = vsyncadd [#allocation5], %s1148
      %s1150 = sshll.u32 [#allocation8], 4
      %s1151 = int_to_ptr.vmem [resolvable:$true] %s1150
      %1156 = dma.vmem_to_hbm [thread:$0]  %s1151, 256, %s3, [#allocation5], 32, 32, 2
    $region29: #{tpu_custom_call.1} parent=1 // pred_fallthru
      _
    // Predicated region
    $region30: #{tpu_custom_call.1} parent=1 // pred_check
      _
    $region31: #{tpu_custom_call.1} parent=1 // pred_check_branch
      %1158 = sbr.rel (0) target = $region33
    $region32: #{tpu_custom_call.1} parent=1 // pred_region
      %1159 = dma.done [#allocation5], 256
    $region33: #{tpu_custom_call.1} parent=1 // pred_fallthru
      _
    %1160 = vsyncpa [#allocation4], 1
    %1161 = vsyncpa [#allocation7], 1
    %1162 = vsyncpa [#allocation5], 1

// kernel: tpu_custom_call.1
$region0: #{tpu_custom_call.1}
  #allocation0 [shape = 'u32[]', space=smem, size = 0x4, offset = 0x4, fixed_abs, tag = 'smem constant byte address 0x4 - core index']
  #allocation1 [shape = 'u32[144,128]{1,0:T(1,128)}', space=vmem, size = 0x12000, scoped, tag = 'internal scratch']
  #allocation2 [shape = 'f32[2,128]{1,0:T(2,128)}', space=vmem, size = 0x400, scoped, tag = 'scratch operand']
  %s0 = inlined_call_operand.hbm [shape: bf16[8,2,384], index: 0, kind: input, shape index: {}]
  %s1 = inlined_call_operand.hbm [shape: bf16[128,384], index: 1, kind: input, shape index: {}]
  %s2 = inlined_call_operand.vmem [shape: f32[1,128], index: 2, kind: input, shape index: {}]
  %s3 = inlined_call_operand.hbm [shape: f32[8,2,128], index: 3, kind: output, shape index: {}]
  %s4 = sld [smem:[#allocation0]]
  $region34: #{tpu_custom_call.1} parent=0
    _
  %s6 = ssub.s32 1, %s4
  %s7 = scalar_select 0, %s6, %s4
  $region1: #{tpu_custom_call.1} parent=0
    #allocation3 [shape = 'u8[12288]{0}', space=vmem, size = 0x3000, scoped, tag = 'input window, operand 0, single buffered']
    #allocation4 [shape = 's32[1]{0}', space=sflag, size = 0x4, scoped, tag = 'scoped memory for tpu_custom_call.1']
    #allocation5 [shape = 's32[1]{0}', space=sflag, size = 0x4, scoped, tag = 'scoped memory for tpu_custom_call.1']
    #allocation6 [shape = 'u8[98304]{0}', space=vmem, size = 0x18000, scoped, tag = 'input window, operand 1, single buffered']
    #allocation7 [shape = 's32[1]{0}', space=sflag, size = 0x4, scoped, tag = 'scoped memory for tpu_custom_call.1']
    #allocation8 [shape = 'u8[8192]{0}', space=vmem, size = 0x2000, scoped, tag = 'output window, operand 0, single buffered']
    %8 = vsyncpa [#allocation4], 0
    %9 = vsyncpa [#allocation7], 0
    %10 = vsyncpa [#allocation5], 0
    // Predicated region
    $region2: #{tpu_custom_call.1} parent=1 // pred_check
      _
    $region3: #{tpu_custom_call.1} parent=1 // pred_check_branch
      %12 = sbr.rel (0) target = $region5
    $region4: #{tpu_custom_call.1} parent=1 // pred_region
      %s14 = ssub.s32 384, 384
      %15 = vsyncadd [#allocation4], %s14
      %s16 = sshll.u32 [#allocation3], 4
      %s17 = int_to_ptr.vmem [resolvable:$true] %s16
      %22 = dma.hbm_to_vmem [thread:$0]  %s0, 384, %s17, [#allocation4], 48, 48, 3
    $region5: #{tpu_custom_call.1} parent=1 // pred_fallthru
      _
    // Predicated region
    $region6: #{tpu_custom_call.1} parent=1 // pred_check
      _
    $region7: #{tpu_custom_call.1} parent=1 // pred_check_branch
      %24 = sbr.rel (0) target = $region9
    $region8: #{tpu_custom_call.1} parent=1 // pred_region
      %s26 = ssub.s32 3072, 3072
      %27 = vsyncadd [#allocation7], %s26
      %s28 = sshll.u32 [#allocation6], 4
      %s29 = int_to_ptr.vmem [resolvable:$true] %s28
      %34 = dma.hbm_to_vmem [thread:$0]  %s1, 3072, %s29, [#allocation7], 192, 192, 12
    $region9: #{tpu_custom_call.1} parent=1 // pred_fallthru
      _
    // Predicated region
    $region10: #{tpu_custom_call.1} parent=1 // pred_check
      _
    $region11: #{tpu_custom_call.1} parent=1 // pred_check_branch
      %36 = sbr.rel (0) target = $region13
    $region12: #{tpu_custom_call.1} parent=1 // pred_region
      _
    $region13: #{tpu_custom_call.1} parent=1 // pred_fallthru
      _
    // Predicated region
    $region14: #{tpu_custom_call.1} parent=1 // pred_check
      _
    $region15: #{tpu_custom_call.1} parent=1 // pred_check_branch
      %38 = sbr.rel (0) target = $region17
    $region16: #{tpu_custom_call.1} parent=1 // pred_region
      %39 = dma.done [#allocation4], 384
    $region17: #{tpu_custom_call.1} parent=1 // pred_fallthru
      _
    // Predicated region
    $region18: #{tpu_custom_call.1} parent=1 // pred_check
      _
    $region19: #{tpu_custom_call.1} parent=1 // pred_check_branch
      %41 = sbr.rel (0) target = $region21
    $region20: #{tpu_custom_call.1} parent=1 // pred_region
      %42 = dma.done [#allocation7], 3072
    $region21: #{tpu_custom_call.1} parent=1 // pred_fallthru
      _
    %p44 = scmp.eq.s32.totalorder 0, 0
    // Predicated region
    $region22: #{tpu_custom_call.1} parent=1 // pred_check
      %p45 = pneg %p44
    $region23: #{tpu_custom_call.1} parent=1 // pred_check_branch
      %47 = sbr.rel (%p45) target = $region25
    $region24: #{tpu_custom_call.1} parent=1 // pred_region
      %48 = vst [vmem:[#allocation2] sm:$0x3] 0.0
    $region25: #{tpu_custom_call.1} parent=1 // pred_fallthru
      _
    %v49 = vld [vmem:[#allocation6] sm:$0xff]
    %v50 = vld [vmem:[#allocation6 + $0x8] sm:$0xf]
    %v51 = vld [vmem:[#allocation6 + $0xc] sm:$0xff]
    %v52 = vld [vmem:[#allocation6 + $0x14] sm:$0xf]
    %v53 = vld [vmem:[#allocation6 + $0x18] sm:$0xff]
    %v54 = vld [vmem:[#allocation6 + $0x20] sm:$0xf]
    %v55 = vld [vmem:[#allocation6 + $0x24] sm:$0xff]
    %v56 = vld [vmem:[#allocation6 + $0x2c] sm:$0xf]
    %v57 = vld [vmem:[#allocation6 + $0x30] sm:$0xff]
    %v58 = vld [vmem:[#allocation6 + $0x38] sm:$0xf]
    %v59 = vld [vmem:[#allocation6 + $0x3c] sm:$0xff]
    %v60 = vld [vmem:[#allocation6 + $0x44] sm:$0xf]
    %v61 = vld [vmem:[#allocation6 + $0x48] sm:$0xff]
    %v62 = vld [vmem:[#allocation6 + $0x50] sm:$0xf]
    %v63 = vld [vmem:[#allocation6 + $0x54] sm:$0xff]
    %v64 = vld [vmem:[#allocation6 + $0x5c] sm:$0xf]
    %v65 = vld [vmem:[#allocation6 + $0x60] sm:$0xff]
    %v66 = vld [vmem:[#allocation6 + $0x68] sm:$0xf]
    %v67 = vld [vmem:[#allocation6 + $0x6c] sm:$0xff]
    %v68 = vld [vmem:[#allocation6 + $0x74] sm:$0xf]
    %v69 = vld [vmem:[#allocation6 + $0x78] sm:$0xff]
    %v70 = vld [vmem:[#allocation6 + $0x80] sm:$0xf]
    %v71 = vld [vmem:[#allocation6 + $0x84] sm:$0xff]
    %v72 = vld [vmem:[#allocation6 + $0x8c] sm:$0xf]
    %v73 = vld [vmem:[#allocation6 + $0x90] sm:$0xff]
    %v74 = vld [vmem:[#allocation6 + $0x98] sm:$0xf]
    %v75 = vld [vmem:[#allocation6 + $0x9c] sm:$0xff]
    %v76 = vld [vmem:[#allocation6 + $0xa4] sm:$0xf]
    %v77 = vld [vmem:[#allocation6 + $0xa8] sm:$0xff]
    %v78 = vld [vmem:[#allocation6 + $0xb0] sm:$0xf]
    %v79 = vld [vmem:[#allocation6 + $0xb4] sm:$0xff]
    %v80 = vld [vmem:[#allocation6 + $0xbc] sm:$0xf]
    %v81 = vld [vmem:[%s2] sm:$0x1]
    %v83 = vlaneseq
    %v84 = vshrl.u32 %v83, 7
    %v85 = vsub.s32 0, %v84
    %v86 = vrot.slane %v81, %v85
    %v88 = vld [vmem:[#allocation2] sm:$0x3]
    %s89 = smul.u32 0, 3
    %s90 = scalar_lea.vmem [#allocation3], %s89
    %v91 = vld [vmem:[%s90] sm:$0x7]
    %v92 = vunpack.c.l.bf16 %v91
    %v93 = vpack.c.bf16 %v88, %v88
    %v126 = vunpack.c.l.b16 %v49
    %v127 = vunpack.c.h.b16 %v49
    %v128 = vunpack.c.l.b16 %v50
    %v129 = vunpack.c.l.b16 %v51
    %v130 = vunpack.c.h.b16 %v51
    %v131 = vunpack.c.l.b16 %v52
    %v132 = vunpack.c.l.b16 %v53
    %v133 = vunpack.c.h.b16 %v53
    %v134 = vunpack.c.l.b16 %v54
    %v135 = vunpack.c.l.b16 %v55
    %v136 = vunpack.c.h.b16 %v55
    %v137 = vunpack.c.l.b16 %v56
    %v138 = vunpack.c.l.b16 %v57
    %v139 = vunpack.c.h.b16 %v57
    %v140 = vunpack.c.l.b16 %v58
    %v141 = vunpack.c.l.b16 %v59
    %v142 = vunpack.c.h.b16 %v59
    %v143 = vunpack.c.l.b16 %v60
    %v144 = vunpack.c.l.b16 %v61
    %v145 = vunpack.c.h.b16 %v61
    %v146 = vunpack.c.l.b16 %v62
    %v147 = vunpack.c.l.b16 %v63
    %v148 = vunpack.c.h.b16 %v63
    %v149 = vunpack.c.l.b16 %v64
    %v150 = vunpack.c.l.b16 %v65
    %v151 = vunpack.c.h.b16 %v65
    %v152 = vunpack.c.l.b16 %v66
    %v153 = vunpack.c.l.b16 %v67
    %v154 = vunpack.c.h.b16 %v67
    %v155 = vunpack.c.l.b16 %v68
    %v156 = vunpack.c.l.b16 %v69
    %v157 = vunpack.c.h.b16 %v69
    %v158 = vunpack.c.l.b16 %v70
    %v159 = vunpack.c.l.b16 %v71
    %v160 = vunpack.c.h.b16 %v71
    %v161 = vunpack.c.l.b16 %v72
    %v162 = vunpack.c.l.b16 %v73
    %v163 = vunpack.c.h.b16 %v73
    %v164 = vunpack.c.l.b16 %v74
    %v165 = vunpack.c.l.b16 %v75
    %v166 = vunpack.c.h.b16 %v75
    %v167 = vunpack.c.l.b16 %v76
    %v168 = vunpack.c.l.b16 %v77
    %v169 = vunpack.c.h.b16 %v77
    %v170 = vunpack.c.l.b16 %v78
    %v171 = vunpack.c.l.b16 %v79
    %v172 = vunpack.c.h.b16 %v79
    %v173 = vunpack.c.l.b16 %v80
    %v174 = vpack.c.b16 %v129, %v126
    %v175 = vpack.c.b16 %v130, %v127
    %v176 = vpack.c.b16 %v131, %v128
    %v177 = vpack.c.b16 %v135, %v132
    %v178 = vpack.c.b16 %v136, %v133
    %v179 = vpack.c.b16 %v137, %v134
    %v180 = vpack.c.b16 %v141, %v138
    %v181 = vpack.c.b16 %v142, %v139
    %v182 = vpack.c.b16 %v143, %v140
    %v183 = vpack.c.b16 %v147, %v144
    %v184 = vpack.c.b16 %v148, %v145
    %v185 = vpack.c.b16 %v149, %v146
    %v186 = vpack.c.b16 %v153, %v150
    %v187 = vpack.c.b16 %v154, %v151
    %v188 = vpack.c.b16 %v155, %v152
    %v189 = vpack.c.b16 %v159, %v156
    %v190 = vpack.c.b16 %v160, %v157
    %v191 = vpack.c.b16 %v161, %v158
    %v192 = vpack.c.b16 %v165, %v162
    %v193 = vpack.c.b16 %v166, %v163
    %v194 = vpack.c.b16 %v167, %v164
    %v195 = vpack.c.b16 %v171, %v168
    %v196 = vpack.c.b16 %v172, %v169
    %v197 = vpack.c.b16 %v173, %v170
    %222 = vmatprep.subr.bf16.mxu0 %v196
    %223 = vmatpush1.bf16.msra.mxu0 %v195
    %224 = vmatprep.subr.bf16.mxu0 %v193
    %225 = vmatpush1.bf16.msra.mxu0 %v192
    %226 = vmatprep.subr.bf16.mxu0 %v190
    %227 = vmatpush1.bf16.msra.mxu0 %v189
    %228 = vmatprep.subr.bf16.mxu0 %v187
    %229 = vmatpush1.bf16.msra.mxu0 %v186
    %230 = vmatprep.subr.bf16.mxu0 %v184
    %231 = vmatpush1.bf16.msra.mxu0 %v183
    %232 = vmatprep.subr.bf16.mxu0 %v181
    %233 = vmatpush1.bf16.msra.mxu0 %v180
    %234 = vmatprep.subr.bf16.mxu0 %v178
    %235 = vmatpush1.bf16.msra.mxu0 %v177
    %236 = vmatprep.subr.bf16.mxu0 %v175
    %237 = vmatpush1.bf16.msra.mxu0 %v174
    %238 = vmatprep.subr.bf16.mxu0 0
    %239 = vmatpush2.bf16.msra.mxu0 0
    %240 = vmatprep.subr.bf16.mxu0 0
    %241 = vmatpush2.bf16.msra.mxu0 0
    %242 = vmatprep.subr.bf16.mxu0 0
    %243 = vmatpush2.bf16.msra.mxu0 0
    %244 = vmatprep.subr.bf16.mxu0 0
    %245 = vmatpush2.bf16.msra.mxu0 0
    %246 = vmatprep.subr.bf16.mxu0 0
    %247 = vmatpush2.bf16.msra.mxu0 0
    %248 = vmatprep.subr.bf16.mxu0 0
    %249 = vmatpush2.bf16.msra.mxu0 0
    %250 = vmatprep.subr.bf16.mxu0 0
    %251 = vmatpush2.bf16.msra.mxu0 0
    %252 = vmatprep.subr.bf16.mxu0 0
    %253 = vmatpush2.bf16.msra.mxu0 0
    %254 = vmatprep.mubr.bf16.mxu0 0
    %255 = vmatmul.mubr.bf16.gmra.mxu0 %v93
    %v256 = vpop.f32.mrf.mxu0
    %v257 = vadd.f32 0.0, %v256
    %v258 = vpop.f32.mrf.mxu0
    %v259 = vadd.f32 0.0, %v258
    %v260 = vpop.f32.mrf.mxu0
    %v261 = vpop.f32.mrf.mxu0
    %262 = vdwg.mxu0
    %263 = vmatprep.subr.bf16.mxu0 0
    %264 = vmatpush1.bf16.msra.mxu0 %v197
    %265 = vmatprep.subr.bf16.mxu0 0
    %266 = vmatpush1.bf16.msra.mxu0 %v194
    %267 = vmatprep.subr.bf16.mxu0 0
    %268 = vmatpush1.bf16.msra.mxu0 %v191
    %269 = vmatprep.subr.bf16.mxu0 0
    %270 = vmatpush1.bf16.msra.mxu0 %v188
    %271 = vmatprep.subr.bf16.mxu0 0
    %272 = vmatpush1.bf16.msra.mxu0 %v185
    %273 = vmatprep.subr.bf16.mxu0 0
    %274 = vmatpush1.bf16.msra.mxu0 %v182
    %275 = vmatprep.subr.bf16.mxu0 0
    %276 = vmatpush1.bf16.msra.mxu0 %v179
    %277 = vmatprep.subr.bf16.mxu0 0
    %278 = vmatpush1.bf16.msra.mxu0 %v176
    %279 = vmatprep.subr.bf16.mxu0 0
    %280 = vmatpush2.bf16.msra.mxu0 0
    %281 = vmatprep.subr.bf16.mxu0 0
    %282 = vmatpush2.bf16.msra.mxu0 0
    %283 = vmatprep.subr.bf16.mxu0 0
    %284 = vmatpush2.bf16.msra.mxu0 0
    %285 = vmatprep.subr.bf16.mxu0 0
    %286 = vmatpush2.bf16.msra.mxu0 0
    %287 = vmatprep.subr.bf16.mxu0 0
    %288 = vmatpush2.bf16.msra.mxu0 0
    %289 = vmatprep.subr.bf16.mxu0 0
    %290 = vmatpush2.bf16.msra.mxu0 0
    %291 = vmatprep.subr.bf16.mxu0 0
    %292 = vmatpush2.bf16.msra.mxu0 0
    %293 = vmatprep.subr.bf16.mxu0 0
    %294 = vmatpush2.bf16.msra.mxu0 0
    %295 = vmatprep.mubr.bf16.mxu0 0
    %296 = vmatmul.mubr.bf16.gmra.mxu0 %v93
    %v297 = vpop.f32.mrf.mxu0
    %v298 = vadd.f32 0.0, %v297
    %v299 = vpop.f32.mrf.mxu0
    %v300 = vpop.f32.mrf.mxu0
    %v301 = vpop.f32.mrf.mxu0
    %302 = vdwg.mxu0
    %v303 = vadd.f32 %v92, %v257
    %v304 = vxor.u32 %v303, 2147483648
    %v305 = vmul.f32 %v304, 1.442695
    %v306 = vpow.pop %v305
    %v307 = vadd.f32 %v306, 1.0
    %v308 = vrcp.pop %v307
    %v309 = vmul.f32 1.0, %v308
    %v311 = vrot.slane %v92, 2
    %v313 = vadd.f32 %v311, %v259
    %v314 = vxor.u32 %v313, 2147483648
    %v315 = vmul.f32 %v314, 1.442695
    %v316 = vpow.pop %v315
    %v317 = vadd.f32 %v316, 1.0
    %v318 = vrcp.pop %v317
    %v319 = vmul.f32 1.0, %v318
    %v320 = vadd.f32 %v298, %v86
    %v321 = vmul.f32 %v309, %v320
    %v322 = vrot.slane %v92, 4
    %v324 = vadd.f32 %v322, %v321
    %v325 = vtanh.pop %v324
    %v326 = vsub.f32 %v88, %v325
    %v327 = vmul.f32 %v319, %v326
    %v328 = vadd.f32 %v325, %v327
    %s329 = smul.u32 0, 2
    %s330 = scalar_lea.vmem [#allocation8], %s329
    %331 = vst [vmem:[%s330] sm:$0x3] %v328
    %s332 = sadd.s32 0, 1
    %s333 = smul.u32 %s332, 3
    %s334 = scalar_lea.vmem [#allocation3], %s333
    %v335 = vld [vmem:[%s334] sm:$0x7]
    %v336 = vunpack.c.l.bf16 %v335
    %v337 = vpack.c.bf16 %v328, %v328
    %338 = vmatprep.subr.bf16.mxu0 %v196
    %339 = vmatpush1.bf16.msra.mxu0 %v195
    %340 = vmatprep.subr.bf16.mxu0 %v193
    %341 = vmatpush1.bf16.msra.mxu0 %v192
    %342 = vmatprep.subr.bf16.mxu0 %v190
    %343 = vmatpush1.bf16.msra.mxu0 %v189
    %344 = vmatprep.subr.bf16.mxu0 %v187
    %345 = vmatpush1.bf16.msra.mxu0 %v186
    %346 = vmatprep.subr.bf16.mxu0 %v184
    %347 = vmatpush1.bf16.msra.mxu0 %v183
    %348 = vmatprep.subr.bf16.mxu0 %v181
    %349 = vmatpush1.bf16.msra.mxu0 %v180
    %350 = vmatprep.subr.bf16.mxu0 %v178
    %351 = vmatpush1.bf16.msra.mxu0 %v177
    %352 = vmatprep.subr.bf16.mxu0 %v175
    %353 = vmatpush1.bf16.msra.mxu0 %v174
    %354 = vmatprep.subr.bf16.mxu0 0
    %355 = vmatpush2.bf16.msra.mxu0 0
    %356 = vmatprep.subr.bf16.mxu0 0
    %357 = vmatpush2.bf16.msra.mxu0 0
    %358 = vmatprep.subr.bf16.mxu0 0
    %359 = vmatpush2.bf16.msra.mxu0 0
    %360 = vmatprep.subr.bf16.mxu0 0
    %361 = vmatpush2.bf16.msra.mxu0 0
    %362 = vmatprep.subr.bf16.mxu0 0
    %363 = vmatpush2.bf16.msra.mxu0 0
    %364 = vmatprep.subr.bf16.mxu0 0
    %365 = vmatpush2.bf16.msra.mxu0 0
    %366 = vmatprep.subr.bf16.mxu0 0
    %367 = vmatpush2.bf16.msra.mxu0 0
    %368 = vmatprep.subr.bf16.mxu0 0
    %369 = vmatpush2.bf16.msra.mxu0 0
    %370 = vmatprep.mubr.bf16.mxu0 0
    %371 = vmatmul.mubr.bf16.gmra.mxu0 %v337
    %v372 = vpop.f32.mrf.mxu0
    %v373 = vadd.f32 0.0, %v372
    %v374 = vpop.f32.mrf.mxu0
    %v375 = vadd.f32 0.0, %v374
    %v376 = vpop.f32.mrf.mxu0
    %v377 = vpop.f32.mrf.mxu0
    %378 = vdwg.mxu0
    %379 = vmatprep.subr.bf16.mxu0 0
    %380 = vmatpush1.bf16.msra.mxu0 %v197
    %381 = vmatprep.subr.bf16.mxu0 0
    %382 = vmatpush1.bf16.msra.mxu0 %v194
    %383 = vmatprep.subr.bf16.mxu0 0
    %384 = vmatpush1.bf16.msra.mxu0 %v191
    %385 = vmatprep.subr.bf16.mxu0 0
    %386 = vmatpush1.bf16.msra.mxu0 %v188
    %387 = vmatprep.subr.bf16.mxu0 0
    %388 = vmatpush1.bf16.msra.mxu0 %v185
    %389 = vmatprep.subr.bf16.mxu0 0
    %390 = vmatpush1.bf16.msra.mxu0 %v182
    %391 = vmatprep.subr.bf16.mxu0 0
    %392 = vmatpush1.bf16.msra.mxu0 %v179
    %393 = vmatprep.subr.bf16.mxu0 0
    %394 = vmatpush1.bf16.msra.mxu0 %v176
    %395 = vmatprep.subr.bf16.mxu0 0
    %396 = vmatpush2.bf16.msra.mxu0 0
    %397 = vmatprep.subr.bf16.mxu0 0
    %398 = vmatpush2.bf16.msra.mxu0 0
    %399 = vmatprep.subr.bf16.mxu0 0
    %400 = vmatpush2.bf16.msra.mxu0 0
    %401 = vmatprep.subr.bf16.mxu0 0
    %402 = vmatpush2.bf16.msra.mxu0 0
    %403 = vmatprep.subr.bf16.mxu0 0
    %404 = vmatpush2.bf16.msra.mxu0 0
    %405 = vmatprep.subr.bf16.mxu0 0
    %406 = vmatpush2.bf16.msra.mxu0 0
    %407 = vmatprep.subr.bf16.mxu0 0
    %408 = vmatpush2.bf16.msra.mxu0 0
    %409 = vmatprep.subr.bf16.mxu0 0
    %410 = vmatpush2.bf16.msra.mxu0 0
    %411 = vmatprep.mubr.bf16.mxu0 0
    %412 = vmatmul.mubr.bf16.gmra.mxu0 %v337
    %v413 = vpop.f32.mrf.mxu0
    %v414 = vadd.f32 0.0, %v413
    %v415 = vpop.f32.mrf.mxu0
    %v416 = vpop.f32.mrf.mxu0
    %v417 = vpop.f32.mrf.mxu0
    %418 = vdwg.mxu0
    %v419 = vadd.f32 %v336, %v373
    %v420 = vxor.u32 %v419, 2147483648
    %v421 = vmul.f32 %v420, 1.442695
    %v422 = vpow.pop %v421
    %v423 = vadd.f32 %v422, 1.0
    %v424 = vrcp.pop %v423
    %v425 = vmul.f32 1.0, %v424
    %v427 = vrot.slane %v336, 2
    %v429 = vadd.f32 %v427, %v375
    %v430 = vxor.u32 %v429, 2147483648
    %v431 = vmul.f32 %v430, 1.442695
    %v432 = vpow.pop %v431
    %v433 = vadd.f32 %v432, 1.0
    %v434 = vrcp.pop %v433
    %v435 = vmul.f32 1.0, %v434
    %v436 = vadd.f32 %v414, %v86
    %v437 = vmul.f32 %v425, %v436
    %v438 = vrot.slane %v336, 4
    %v440 = vadd.f32 %v438, %v437
    %v441 = vtanh.pop %v440
    %v442 = vsub.f32 %v328, %v441
    %v443 = vmul.f32 %v435, %v442
    %v444 = vadd.f32 %v441, %v443
    %s445 = smul.u32 %s332, 2
    %s446 = scalar_lea.vmem [#allocation8], %s445
    %447 = vst [vmem:[%s446] sm:$0x3] %v444
    %s448 = sadd.s32 0, 2
    %s449 = smul.u32 %s448, 3
    %s450 = scalar_lea.vmem [#allocation3], %s449
    %v451 = vld [vmem:[%s450] sm:$0x7]
    %v452 = vunpack.c.l.bf16 %v451
    %v453 = vpack.c.bf16 %v444, %v444
    %454 = vmatprep.subr.bf16.mxu0 %v196
    %455 = vmatpush1.bf16.msra.mxu0 %v195
    %456 = vmatprep.subr.bf16.mxu0 %v193
    %457 = vmatpush1.bf16.msra.mxu0 %v192
    %458 = vmatprep.subr.bf16.mxu0 %v190
    %459 = vmatpush1.bf16.msra.mxu0 %v189
    %460 = vmatprep.subr.bf16.mxu0 %v187
    %461 = vmatpush1.bf16.msra.mxu0 %v186
    %462 = vmatprep.subr.bf16.mxu0 %v184
    %463 = vmatpush1.bf16.msra.mxu0 %v183
    %464 = vmatprep.subr.bf16.mxu0 %v181
    %465 = vmatpush1.bf16.msra.mxu0 %v180
    %466 = vmatprep.subr.bf16.mxu0 %v178
    %467 = vmatpush1.bf16.msra.mxu0 %v177
    %468 = vmatprep.subr.bf16.mxu0 %v175
    %469 = vmatpush1.bf16.msra.mxu0 %v174
    %470 = vmatprep.subr.bf16.mxu0 0
    %471 = vmatpush2.bf16.msra.mxu0 0
    %472 = vmatprep.subr.bf16.mxu0 0
    %473 = vmatpush2.bf16.msra.mxu0 0
    %474 = vmatprep.subr.bf16.mxu0 0
    %475 = vmatpush2.bf16.msra.mxu0 0
    %476 = vmatprep.subr.bf16.mxu0 0
    %477 = vmatpush2.bf16.msra.mxu0 0
    %478 = vmatprep.subr.bf16.mxu0 0
    %479 = vmatpush2.bf16.msra.mxu0 0
    %480 = vmatprep.subr.bf16.mxu0 0
    %481 = vmatpush2.bf16.msra.mxu0 0
    %482 = vmatprep.subr.bf16.mxu0 0
    %483 = vmatpush2.bf16.msra.mxu0 0
    %484 = vmatprep.subr.bf16.mxu0 0
    %485 = vmatpush2.bf16.msra.mxu0 0
    %486 = vmatprep.mubr.bf16.mxu0 0
    %487 = vmatmul.mubr.bf16.gmra.mxu0 %v453
    %v488 = vpop.f32.mrf.mxu0
    %v489 = vadd.f32 0.0, %v488
    %v490 = vpop.f32.mrf.mxu0
    %v491 = vadd.f32 0.0, %v490
    %v492 = vpop.f32.mrf.mxu0
    %v493 = vpop.f32.mrf.mxu0
    %494 = vdwg.mxu0
    %495 = vmatprep.subr.bf16.mxu0 0
    %496 = vmatpush1.bf16.msra.mxu0 %v197
    %497 = vmatprep.subr.bf16.mxu0 0
    %498 = vmatpush1.bf16.msra.mxu0 %v194
    %499 = vmatprep.subr.bf16.mxu0 0
    %500 = vmatpush1.bf16.msra.mxu0 %v191
    %501 = vmatprep.subr.bf16.mxu0 0
    %502 = vmatpush1.bf16.msra.mxu0 %v188
    %503 = vmatprep.subr.bf16.mxu0 0
    %504 = vmatpush1.bf16.msra.mxu0 %v185
    %505 = vmatprep.subr.bf16.mxu0 0
    %506 = vmatpush1.bf16.msra.mxu0 %v182
    %507 = vmatprep.subr.bf16.mxu0 0
    %508 = vmatpush1.bf16.msra.mxu0 %v179
    %509 = vmatprep.subr.bf16.mxu0 0
    %510 = vmatpush1.bf16.msra.mxu0 %v176
    %511 = vmatprep.subr.bf16.mxu0 0
    %512 = vmatpush2.bf16.msra.mxu0 0
    %513 = vmatprep.subr.bf16.mxu0 0
    %514 = vmatpush2.bf16.msra.mxu0 0
    %515 = vmatprep.subr.bf16.mxu0 0
    %516 = vmatpush2.bf16.msra.mxu0 0
    %517 = vmatprep.subr.bf16.mxu0 0
    %518 = vmatpush2.bf16.msra.mxu0 0
    %519 = vmatprep.subr.bf16.mxu0 0
    %520 = vmatpush2.bf16.msra.mxu0 0
    %521 = vmatprep.subr.bf16.mxu0 0
    %522 = vmatpush2.bf16.msra.mxu0 0
    %523 = vmatprep.subr.bf16.mxu0 0
    %524 = vmatpush2.bf16.msra.mxu0 0
    %525 = vmatprep.subr.bf16.mxu0 0
    %526 = vmatpush2.bf16.msra.mxu0 0
    %527 = vmatprep.mubr.bf16.mxu0 0
    %528 = vmatmul.mubr.bf16.gmra.mxu0 %v453
    %v529 = vpop.f32.mrf.mxu0
    %v530 = vadd.f32 0.0, %v529
    %v531 = vpop.f32.mrf.mxu0
    %v532 = vpop.f32.mrf.mxu0
    %v533 = vpop.f32.mrf.mxu0
    %534 = vdwg.mxu0
    %v535 = vadd.f32 %v452, %v489
    %v536 = vxor.u32 %v535, 2147483648
    %v537 = vmul.f32 %v536, 1.442695
    %v538 = vpow.pop %v537
    %v539 = vadd.f32 %v538, 1.0
    %v540 = vrcp.pop %v539
    %v541 = vmul.f32 1.0, %v540
    %v543 = vrot.slane %v452, 2
    %v545 = vadd.f32 %v543, %v491
    %v546 = vxor.u32 %v545, 2147483648
    %v547 = vmul.f32 %v546, 1.442695
    %v548 = vpow.pop %v547
    %v549 = vadd.f32 %v548, 1.0
    %v550 = vrcp.pop %v549
    %v551 = vmul.f32 1.0, %v550
    %v552 = vadd.f32 %v530, %v86
    %v553 = vmul.f32 %v541, %v552
    %v554 = vrot.slane %v452, 4
    %v556 = vadd.f32 %v554, %v553
    %v557 = vtanh.pop %v556
    %v558 = vsub.f32 %v444, %v557
    %v559 = vmul.f32 %v551, %v558
    %v560 = vadd.f32 %v557, %v559
    %s561 = smul.u32 %s448, 2
    %s562 = scalar_lea.vmem [#allocation8], %s561
    %563 = vst [vmem:[%s562] sm:$0x3] %v560
    %s564 = sadd.s32 0, 3
    %s565 = smul.u32 %s564, 3
    %s566 = scalar_lea.vmem [#allocation3], %s565
    %v567 = vld [vmem:[%s566] sm:$0x7]
    %v568 = vunpack.c.l.bf16 %v567
    %v569 = vpack.c.bf16 %v560, %v560
    %570 = vmatprep.subr.bf16.mxu0 %v196
    %571 = vmatpush1.bf16.msra.mxu0 %v195
    %572 = vmatprep.subr.bf16.mxu0 %v193
    %573 = vmatpush1.bf16.msra.mxu0 %v192
    %574 = vmatprep.subr.bf16.mxu0 %v190
    %575 = vmatpush1.bf16.msra.mxu0 %v189
    %576 = vmatprep.subr.bf16.mxu0 %v187
    %577 = vmatpush1.bf16.msra.mxu0 %v186
    %578 = vmatprep.subr.bf16.mxu0 %v184
    %579 = vmatpush1.bf16.msra.mxu0 %v183
    %580 = vmatprep.subr.bf16.mxu0 %v181
    %581 = vmatpush1.bf16.msra.mxu0 %v180
    %582 = vmatprep.subr.bf16.mxu0 %v178
    %583 = vmatpush1.bf16.msra.mxu0 %v177
    %584 = vmatprep.subr.bf16.mxu0 %v175
    %585 = vmatpush1.bf16.msra.mxu0 %v174
    %586 = vmatprep.subr.bf16.mxu0 0
    %587 = vmatpush2.bf16.msra.mxu0 0
    %588 = vmatprep.subr.bf16.mxu0 0
    %589 = vmatpush2.bf16.msra.mxu0 0
    %590 = vmatprep.subr.bf16.mxu0 0
    %591 = vmatpush2.bf16.msra.mxu0 0
    %592 = vmatprep.subr.bf16.mxu0 0
    %593 = vmatpush2.bf16.msra.mxu0 0
    %594 = vmatprep.subr.bf16.mxu0 0
    %595 = vmatpush2.bf16.msra.mxu0 0
    %596 = vmatprep.subr.bf16.mxu0 0
    %597 = vmatpush2.bf16.msra.mxu0 0
    %598 = vmatprep.subr.bf16.mxu0 0
    %599 = vmatpush2.bf16.msra.mxu0 0
    %600 = vmatprep.subr.bf16.mxu0 0
    %601 = vmatpush2.bf16.msra.mxu0 0
    %602 = vmatprep.mubr.bf16.mxu0 0
    %603 = vmatmul.mubr.bf16.gmra.mxu0 %v569
    %v604 = vpop.f32.mrf.mxu0
    %v605 = vadd.f32 0.0, %v604
    %v606 = vpop.f32.mrf.mxu0
    %v607 = vadd.f32 0.0, %v606
    %v608 = vpop.f32.mrf.mxu0
    %v609 = vpop.f32.mrf.mxu0
    %610 = vdwg.mxu0
    %611 = vmatprep.subr.bf16.mxu0 0
    %612 = vmatpush1.bf16.msra.mxu0 %v197
    %613 = vmatprep.subr.bf16.mxu0 0
    %614 = vmatpush1.bf16.msra.mxu0 %v194
    %615 = vmatprep.subr.bf16.mxu0 0
    %616 = vmatpush1.bf16.msra.mxu0 %v191
    %617 = vmatprep.subr.bf16.mxu0 0
    %618 = vmatpush1.bf16.msra.mxu0 %v188
    %619 = vmatprep.subr.bf16.mxu0 0
    %620 = vmatpush1.bf16.msra.mxu0 %v185
    %621 = vmatprep.subr.bf16.mxu0 0
    %622 = vmatpush1.bf16.msra.mxu0 %v182
    %623 = vmatprep.subr.bf16.mxu0 0
    %624 = vmatpush1.bf16.msra.mxu0 %v179
    %625 = vmatprep.subr.bf16.mxu0 0
    %626 = vmatpush1.bf16.msra.mxu0 %v176
    %627 = vmatprep.subr.bf16.mxu0 0
    %628 = vmatpush2.bf16.msra.mxu0 0
    %629 = vmatprep.subr.bf16.mxu0 0
    %630 = vmatpush2.bf16.msra.mxu0 0
    %631 = vmatprep.subr.bf16.mxu0 0
    %632 = vmatpush2.bf16.msra.mxu0 0
    %633 = vmatprep.subr.bf16.mxu0 0
    %634 = vmatpush2.bf16.msra.mxu0 0
    %635 = vmatprep.subr.bf16.mxu0 0
    %636 = vmatpush2.bf16.msra.mxu0 0
    %637 = vmatprep.subr.bf16.mxu0 0
    %638 = vmatpush2.bf16.msra.mxu0 0
    %639 = vmatprep.subr.bf16.mxu0 0
    %640 = vmatpush2.bf16.msra.mxu0 0
    %641 = vmatprep.subr.bf16.mxu0 0
    %642 = vmatpush2.bf16.msra.mxu0 0
    %643 = vmatprep.mubr.bf16.mxu0 0
    %644 = vmatmul.mubr.bf16.gmra.mxu0 %v569
    %v645 = vpop.f32.mrf.mxu0
    %v646 = vadd.f32 0.0, %v645
    %v647 = vpop.f32.mrf.mxu0
    %v648 = vpop.f32.mrf.mxu0
    %v649 = vpop.f32.mrf.mxu0
    %650 = vdwg.mxu0
    %v651 = vadd.f32 %v568, %v605
    %v652 = vxor.u32 %v651, 2147483648
    %v653 = vmul.f32 %v652, 1.442695
    %v654 = vpow.pop %v653
    %v655 = vadd.f32 %v654, 1.0
    %v656 = vrcp.pop %v655
    %v657 = vmul.f32 1.0, %v656
    %v659 = vrot.slane %v568, 2
    %v661 = vadd.f32 %v659, %v607
    %v662 = vxor.u32 %v661, 2147483648
    %v663 = vmul.f32 %v662, 1.442695
    %v664 = vpow.pop %v663
    %v665 = vadd.f32 %v664, 1.0
    %v666 = vrcp.pop %v665
    %v667 = vmul.f32 1.0, %v666
    %v668 = vadd.f32 %v646, %v86
    %v669 = vmul.f32 %v657, %v668
    %v670 = vrot.slane %v568, 4
    %v672 = vadd.f32 %v670, %v669
    %v673 = vtanh.pop %v672
    %v674 = vsub.f32 %v560, %v673
    %v675 = vmul.f32 %v667, %v674
    %v676 = vadd.f32 %v673, %v675
    %s677 = smul.u32 %s564, 2
    %s678 = scalar_lea.vmem [#allocation8], %s677
    %679 = vst [vmem:[%s678] sm:$0x3] %v676
    %s680 = sadd.s32 0, 4
    %s681 = smul.u32 %s680, 3
    %s682 = scalar_lea.vmem [#allocation3], %s681
    %v683 = vld [vmem:[%s682] sm:$0x7]
    %v684 = vunpack.c.l.bf16 %v683
    %v685 = vpack.c.bf16 %v676, %v676
    %686 = vmatprep.subr.bf16.mxu0 %v196
    %687 = vmatpush1.bf16.msra.mxu0 %v195
    %688 = vmatprep.subr.bf16.mxu0 %v193
    %689 = vmatpush1.bf16.msra.mxu0 %v192
    %690 = vmatprep.subr.bf16.mxu0 %v190
    %691 = vmatpush1.bf16.msra.mxu0 %v189
    %692 = vmatprep.subr.bf16.mxu0 %v187
    %693 = vmatpush1.bf16.msra.mxu0 %v186
    %694 = vmatprep.subr.bf16.mxu0 %v184
    %695 = vmatpush1.bf16.msra.mxu0 %v183
    %696 = vmatprep.subr.bf16.mxu0 %v181
    %697 = vmatpush1.bf16.msra.mxu0 %v180
    %698 = vmatprep.subr.bf16.mxu0 %v178
    %699 = vmatpush1.bf16.msra.mxu0 %v177
    %700 = vmatprep.subr.bf16.mxu0 %v175
    %701 = vmatpush1.bf16.msra.mxu0 %v174
    %702 = vmatprep.subr.bf16.mxu0 0
    %703 = vmatpush2.bf16.msra.mxu0 0
    %704 = vmatprep.subr.bf16.mxu0 0
    %705 = vmatpush2.bf16.msra.mxu0 0
    %706 = vmatprep.subr.bf16.mxu0 0
    %707 = vmatpush2.bf16.msra.mxu0 0
    %708 = vmatprep.subr.bf16.mxu0 0
    %709 = vmatpush2.bf16.msra.mxu0 0
    %710 = vmatprep.subr.bf16.mxu0 0
    %711 = vmatpush2.bf16.msra.mxu0 0
    %712 = vmatprep.subr.bf16.mxu0 0
    %713 = vmatpush2.bf16.msra.mxu0 0
    %714 = vmatprep.subr.bf16.mxu0 0
    %715 = vmatpush2.bf16.msra.mxu0 0
    %716 = vmatprep.subr.bf16.mxu0 0
    %717 = vmatpush2.bf16.msra.mxu0 0
    %718 = vmatprep.mubr.bf16.mxu0 0
    %719 = vmatmul.mubr.bf16.gmra.mxu0 %v685
    %v720 = vpop.f32.mrf.mxu0
    %v721 = vadd.f32 0.0, %v720
    %v722 = vpop.f32.mrf.mxu0
    %v723 = vadd.f32 0.0, %v722
    %v724 = vpop.f32.mrf.mxu0
    %v725 = vpop.f32.mrf.mxu0
    %726 = vdwg.mxu0
    %727 = vmatprep.subr.bf16.mxu0 0
    %728 = vmatpush1.bf16.msra.mxu0 %v197
    %729 = vmatprep.subr.bf16.mxu0 0
    %730 = vmatpush1.bf16.msra.mxu0 %v194
    %731 = vmatprep.subr.bf16.mxu0 0
    %732 = vmatpush1.bf16.msra.mxu0 %v191
    %733 = vmatprep.subr.bf16.mxu0 0
    %734 = vmatpush1.bf16.msra.mxu0 %v188
    %735 = vmatprep.subr.bf16.mxu0 0
    %736 = vmatpush1.bf16.msra.mxu0 %v185
    %737 = vmatprep.subr.bf16.mxu0 0
    %738 = vmatpush1.bf16.msra.mxu0 %v182
    %739 = vmatprep.subr.bf16.mxu0 0
    %740 = vmatpush1.bf16.msra.mxu0 %v179
    %741 = vmatprep.subr.bf16.mxu0 0
    %742 = vmatpush1.bf16.msra.mxu0 %v176
    %743 = vmatprep.subr.bf16.mxu0 0
    %744 = vmatpush2.bf16.msra.mxu0 0
    %745 = vmatprep.subr.bf16.mxu0 0
    %746 = vmatpush2.bf16.msra.mxu0 0
    %747 = vmatprep.subr.bf16.mxu0 0
    %748 = vmatpush2.bf16.msra.mxu0 0
    %749 = vmatprep.subr.bf16.mxu0 0
    %750 = vmatpush2.bf16.msra.mxu0 0
    %751 = vmatprep.subr.bf16.mxu0 0
    %752 = vmatpush2.bf16.msra.mxu0 0
    %753 = vmatprep.subr.bf16.mxu0 0
    %754 = vmatpush2.bf16.msra.mxu0 0
    %755 = vmatprep.subr.bf16.mxu0 0
    %756 = vmatpush2.bf16.msra.mxu0 0
    %757 = vmatprep.subr.bf16.mxu0 0
    %758 = vmatpush2.bf16.msra.mxu0 0
    %759 = vmatprep.mubr.bf16.mxu0 0
    %760 = vmatmul.mubr.bf16.gmra.mxu0 %v685
    %v761 = vpop.f32.mrf.mxu0
    %v762 = vadd.f32 0.0, %v761
    %v763 = vpop.f32.mrf.mxu0
    %v764 = vpop.f32.mrf.mxu0
    %v765 = vpop.f32.mrf.mxu0
    %766 = vdwg.mxu0
    %v767 = vadd.f32 %v684, %v721
    %v768 = vxor.u32 %v767, 2147483648
    %v769 = vmul.f32 %v768, 1.442695
    %v770 = vpow.pop %v769
    %v771 = vadd.f32 %v770, 1.0
    %v772 = vrcp.pop %v771
    %v773 = vmul.f32 1.0, %v772
    %v775 = vrot.slane %v684, 2
    %v777 = vadd.f32 %v775, %v723
    %v778 = vxor.u32 %v777, 2147483648
    %v779 = vmul.f32 %v778, 1.442695
    %v780 = vpow.pop %v779
    %v781 = vadd.f32 %v780, 1.0
    %v782 = vrcp.pop %v781
    %v783 = vmul.f32 1.0, %v782
    %v784 = vadd.f32 %v762, %v86
    %v785 = vmul.f32 %v773, %v784
    %v786 = vrot.slane %v684, 4
    %v788 = vadd.f32 %v786, %v785
    %v789 = vtanh.pop %v788
    %v790 = vsub.f32 %v676, %v789
    %v791 = vmul.f32 %v783, %v790
    %v792 = vadd.f32 %v789, %v791
    %s793 = smul.u32 %s680, 2
    %s794 = scalar_lea.vmem [#allocation8], %s793
    %795 = vst [vmem:[%s794] sm:$0x3] %v792
    %s796 = sadd.s32 0, 5
    %s797 = smul.u32 %s796, 3
    %s798 = scalar_lea.vmem [#allocation3], %s797
    %v799 = vld [vmem:[%s798] sm:$0x7]
    %v800 = vunpack.c.l.bf16 %v799
    %v801 = vpack.c.bf16 %v792, %v792
    %802 = vmatprep.subr.bf16.mxu0 %v196
    %803 = vmatpush1.bf16.msra.mxu0 %v195
    %804 = vmatprep.subr.bf16.mxu0 %v193
    %805 = vmatpush1.bf16.msra.mxu0 %v192
    %806 = vmatprep.subr.bf16.mxu0 %v190
    %807 = vmatpush1.bf16.msra.mxu0 %v189
    %808 = vmatprep.subr.bf16.mxu0 %v187
    %809 = vmatpush1.bf16.msra.mxu0 %v186
    %810 = vmatprep.subr.bf16.mxu0 %v184
    %811 = vmatpush1.bf16.msra.mxu0 %v183
    %812 = vmatprep.subr.bf16.mxu0 %v181
    %813 = vmatpush1.bf16.msra.mxu0 %v180
    %814 = vmatprep.subr.bf16.mxu0 %v178
    %815 = vmatpush1.bf16.msra.mxu0 %v177
    %816 = vmatprep.subr.bf16.mxu0 %v175
    %817 = vmatpush1.bf16.msra.mxu0 %v174
    %818 = vmatprep.subr.bf16.mxu0 0
    %819 = vmatpush2.bf16.msra.mxu0 0
    %820 = vmatprep.subr.bf16.mxu0 0
    %821 = vmatpush2.bf16.msra.mxu0 0
    %822 = vmatprep.subr.bf16.mxu0 0
    %823 = vmatpush2.bf16.msra.mxu0 0
    %824 = vmatprep.subr.bf16.mxu0 0
    %825 = vmatpush2.bf16.msra.mxu0 0
    %826 = vmatprep.subr.bf16.mxu0 0
    %827 = vmatpush2.bf16.msra.mxu0 0
    %828 = vmatprep.subr.bf16.mxu0 0
    %829 = vmatpush2.bf16.msra.mxu0 0
    %830 = vmatprep.subr.bf16.mxu0 0
    %831 = vmatpush2.bf16.msra.mxu0 0
    %832 = vmatprep.subr.bf16.mxu0 0
    %833 = vmatpush2.bf16.msra.mxu0 0
    %834 = vmatprep.mubr.bf16.mxu0 0
    %835 = vmatmul.mubr.bf16.gmra.mxu0 %v801
    %v836 = vpop.f32.mrf.mxu0
    %v837 = vadd.f32 0.0, %v836
    %v838 = vpop.f32.mrf.mxu0
    %v839 = vadd.f32 0.0, %v838
    %v840 = vpop.f32.mrf.mxu0
    %v841 = vpop.f32.mrf.mxu0
    %842 = vdwg.mxu0
    %843 = vmatprep.subr.bf16.mxu0 0
    %844 = vmatpush1.bf16.msra.mxu0 %v197
    %845 = vmatprep.subr.bf16.mxu0 0
    %846 = vmatpush1.bf16.msra.mxu0 %v194
    %847 = vmatprep.subr.bf16.mxu0 0
    %848 = vmatpush1.bf16.msra.mxu0 %v191
    %849 = vmatprep.subr.bf16.mxu0 0
    %850 = vmatpush1.bf16.msra.mxu0 %v188
    %851 = vmatprep.subr.bf16.mxu0 0
    %852 = vmatpush1.bf16.msra.mxu0 %v185
    %853 = vmatprep.subr.bf16.mxu0 0
    %854 = vmatpush1.bf16.msra.mxu0 %v182
    %855 = vmatprep.subr.bf16.mxu0 0
    %856 = vmatpush1.bf16.msra.mxu0 %v179
    %857 = vmatprep.subr.bf16.mxu0 0
    %858 = vmatpush1.bf16.msra.mxu0 %v176
    %859 = vmatprep.subr.bf16.mxu0 0
    %860 = vmatpush2.bf16.msra.mxu0 0
    %861 = vmatprep.subr.bf16.mxu0 0
    %862 = vmatpush2.bf16.msra.mxu0 0
    %863 = vmatprep.subr.bf16.mxu0 0
    %864 = vmatpush2.bf16.msra.mxu0 0
    %865 = vmatprep.subr.bf16.mxu0 0
    %866 = vmatpush2.bf16.msra.mxu0 0
    %867 = vmatprep.subr.bf16.mxu0 0
    %868 = vmatpush2.bf16.msra.mxu0 0
    %869 = vmatprep.subr.bf16.mxu0 0
    %870 = vmatpush2.bf16.msra.mxu0 0
    %871 = vmatprep.subr.bf16.mxu0 0
    %872 = vmatpush2.bf16.msra.mxu0 0
    %873 = vmatprep.subr.bf16.mxu0 0
    %874 = vmatpush2.bf16.msra.mxu0 0
    %875 = vmatprep.mubr.bf16.mxu0 0
    %876 = vmatmul.mubr.bf16.gmra.mxu0 %v801
    %v877 = vpop.f32.mrf.mxu0
    %v878 = vadd.f32 0.0, %v877
    %v879 = vpop.f32.mrf.mxu0
    %v880 = vpop.f32.mrf.mxu0
    %v881 = vpop.f32.mrf.mxu0
    %882 = vdwg.mxu0
    %v883 = vadd.f32 %v800, %v837
    %v884 = vxor.u32 %v883, 2147483648
    %v885 = vmul.f32 %v884, 1.442695
    %v886 = vpow.pop %v885
    %v887 = vadd.f32 %v886, 1.0
    %v888 = vrcp.pop %v887
    %v889 = vmul.f32 1.0, %v888
    %v891 = vrot.slane %v800, 2
    %v893 = vadd.f32 %v891, %v839
    %v894 = vxor.u32 %v893, 2147483648
    %v895 = vmul.f32 %v894, 1.442695
    %v896 = vpow.pop %v895
    %v897 = vadd.f32 %v896, 1.0
    %v898 = vrcp.pop %v897
    %v899 = vmul.f32 1.0, %v898
    %v900 = vadd.f32 %v878, %v86
    %v901 = vmul.f32 %v889, %v900
    %v902 = vrot.slane %v800, 4
    %v904 = vadd.f32 %v902, %v901
    %v905 = vtanh.pop %v904
    %v906 = vsub.f32 %v792, %v905
    %v907 = vmul.f32 %v899, %v906
    %v908 = vadd.f32 %v905, %v907
    %s909 = smul.u32 %s796, 2
    %s910 = scalar_lea.vmem [#allocation8], %s909
    %911 = vst [vmem:[%s910] sm:$0x3] %v908
    %s912 = sadd.s32 0, 6
    %s913 = smul.u32 %s912, 3
    %s914 = scalar_lea.vmem [#allocation3], %s913
    %v915 = vld [vmem:[%s914] sm:$0x7]
    %v916 = vunpack.c.l.bf16 %v915
    %v917 = vpack.c.bf16 %v908, %v908
    %918 = vmatprep.subr.bf16.mxu0 %v196
    %919 = vmatpush1.bf16.msra.mxu0 %v195
    %920 = vmatprep.subr.bf16.mxu0 %v193
    %921 = vmatpush1.bf16.msra.mxu0 %v192
    %922 = vmatprep.subr.bf16.mxu0 %v190
    %923 = vmatpush1.bf16.msra.mxu0 %v189
    %924 = vmatprep.subr.bf16.mxu0 %v187
    %925 = vmatpush1.bf16.msra.mxu0 %v186
    %926 = vmatprep.subr.bf16.mxu0 %v184
    %927 = vmatpush1.bf16.msra.mxu0 %v183
    %928 = vmatprep.subr.bf16.mxu0 %v181
    %929 = vmatpush1.bf16.msra.mxu0 %v180
    %930 = vmatprep.subr.bf16.mxu0 %v178
    %931 = vmatpush1.bf16.msra.mxu0 %v177
    %932 = vmatprep.subr.bf16.mxu0 %v175
    %933 = vmatpush1.bf16.msra.mxu0 %v174
    %934 = vmatprep.subr.bf16.mxu0 0
    %935 = vmatpush2.bf16.msra.mxu0 0
    %936 = vmatprep.subr.bf16.mxu0 0
    %937 = vmatpush2.bf16.msra.mxu0 0
    %938 = vmatprep.subr.bf16.mxu0 0
    %939 = vmatpush2.bf16.msra.mxu0 0
    %940 = vmatprep.subr.bf16.mxu0 0
    %941 = vmatpush2.bf16.msra.mxu0 0
    %942 = vmatprep.subr.bf16.mxu0 0
    %943 = vmatpush2.bf16.msra.mxu0 0
    %944 = vmatprep.subr.bf16.mxu0 0
    %945 = vmatpush2.bf16.msra.mxu0 0
    %946 = vmatprep.subr.bf16.mxu0 0
    %947 = vmatpush2.bf16.msra.mxu0 0
    %948 = vmatprep.subr.bf16.mxu0 0
    %949 = vmatpush2.bf16.msra.mxu0 0
    %950 = vmatprep.mubr.bf16.mxu0 0
    %951 = vmatmul.mubr.bf16.gmra.mxu0 %v917
    %v952 = vpop.f32.mrf.mxu0
    %v953 = vadd.f32 0.0, %v952
    %v954 = vpop.f32.mrf.mxu0
    %v955 = vadd.f32 0.0, %v954
    %v956 = vpop.f32.mrf.mxu0
    %v957 = vpop.f32.mrf.mxu0
    %958 = vdwg.mxu0
    %959 = vmatprep.subr.bf16.mxu0 0
    %960 = vmatpush1.bf16.msra.mxu0 %v197
    %961 = vmatprep.subr.bf16.mxu0 0
    %962 = vmatpush1.bf16.msra.mxu0 %v194
    %963 = vmatprep.subr.bf16.mxu0 0
    %964 = vmatpush1.bf16.msra.mxu0 %v191
    %965 = vmatprep.subr.bf16.mxu0 0
    %966 = vmatpush1.bf16.msra.mxu0 %v188
    %967 = vmatprep.subr.bf16.mxu0 0
    %968 = vmatpush1.bf16.msra.mxu0 %v185
    %969 = vmatprep.subr.bf16.mxu0 0
    %970 = vmatpush1.bf16.msra.mxu0 %v182
    %971 = vmatprep.subr.bf16.mxu0 0
    %972 = vmatpush1.bf16.msra.mxu0 %v179
    %973 = vmatprep.subr.bf16.mxu0 0
    %974 = vmatpush1.bf16.msra.mxu0 %v176
    %975 = vmatprep.subr.bf16.mxu0 0
    %976 = vmatpush2.bf16.msra.mxu0 0
    %977 = vmatprep.subr.bf16.mxu0 0
    %978 = vmatpush2.bf16.msra.mxu0 0
    %979 = vmatprep.subr.bf16.mxu0 0
    %980 = vmatpush2.bf16.msra.mxu0 0
    %981 = vmatprep.subr.bf16.mxu0 0
    %982 = vmatpush2.bf16.msra.mxu0 0
    %983 = vmatprep.subr.bf16.mxu0 0
    %984 = vmatpush2.bf16.msra.mxu0 0
    %985 = vmatprep.subr.bf16.mxu0 0
    %986 = vmatpush2.bf16.msra.mxu0 0
    %987 = vmatprep.subr.bf16.mxu0 0
    %988 = vmatpush2.bf16.msra.mxu0 0
    %989 = vmatprep.subr.bf16.mxu0 0
    %990 = vmatpush2.bf16.msra.mxu0 0
    %991 = vmatprep.mubr.bf16.mxu0 0
    %992 = vmatmul.mubr.bf16.gmra.mxu0 %v917
    %v993 = vpop.f32.mrf.mxu0
    %v994 = vadd.f32 0.0, %v993
    %v995 = vpop.f32.mrf.mxu0
    %v996 = vpop.f32.mrf.mxu0
    %v997 = vpop.f32.mrf.mxu0
    %998 = vdwg.mxu0
    %v999 = vadd.f32 %v916, %v953
    %v1000 = vxor.u32 %v999, 2147483648
    %v1001 = vmul.f32 %v1000, 1.442695
    %v1002 = vpow.pop %v1001
    %v1003 = vadd.f32 %v1002, 1.0
    %v1004 = vrcp.pop %v1003
    %v1005 = vmul.f32 1.0, %v1004
    %v1007 = vrot.slane %v916, 2
    %v1009 = vadd.f32 %v1007, %v955
    %v1010 = vxor.u32 %v1009, 2147483648
    %v1011 = vmul.f32 %v1010, 1.442695
    %v1012 = vpow.pop %v1011
    %v1013 = vadd.f32 %v1012, 1.0
    %v1014 = vrcp.pop %v1013
    %v1015 = vmul.f32 1.0, %v1014
    %v1016 = vadd.f32 %v994, %v86
    %v1017 = vmul.f32 %v1005, %v1016
    %v1018 = vrot.slane %v916, 4
    %v1020 = vadd.f32 %v1018, %v1017
    %v1021 = vtanh.pop %v1020
    %v1022 = vsub.f32 %v908, %v1021
    %v1023 = vmul.f32 %v1015, %v1022
    %v1024 = vadd.f32 %v1021, %v1023
    %s1025 = smul.u32 %s912, 2
    %s1026 = scalar_lea.vmem [#allocation8], %s1025
    %1027 = vst [vmem:[%s1026] sm:$0x3] %v1024
    %s1028 = sadd.s32 0, 7
    %s1029 = smul.u32 %s1028, 3
    %s1030 = scalar_lea.vmem [#allocation3], %s1029
    %v1031 = vld [vmem:[%s1030] sm:$0x7]
    %v1032 = vunpack.c.l.bf16 %v1031
    %v1033 = vpack.c.bf16 %v1024, %v1024
    %1034 = vmatprep.subr.bf16.mxu0 %v196
    %1035 = vmatpush1.bf16.msra.mxu0 %v195
    %1036 = vmatprep.subr.bf16.mxu0 %v193
    %1037 = vmatpush1.bf16.msra.mxu0 %v192
    %1038 = vmatprep.subr.bf16.mxu0 %v190
    %1039 = vmatpush1.bf16.msra.mxu0 %v189
    %1040 = vmatprep.subr.bf16.mxu0 %v187
    %1041 = vmatpush1.bf16.msra.mxu0 %v186
    %1042 = vmatprep.subr.bf16.mxu0 %v184
    %1043 = vmatpush1.bf16.msra.mxu0 %v183
    %1044 = vmatprep.subr.bf16.mxu0 %v181
    %1045 = vmatpush1.bf16.msra.mxu0 %v180
    %1046 = vmatprep.subr.bf16.mxu0 %v178
    %1047 = vmatpush1.bf16.msra.mxu0 %v177
    %1048 = vmatprep.subr.bf16.mxu0 %v175
    %1049 = vmatpush1.bf16.msra.mxu0 %v174
    %1050 = vmatprep.subr.bf16.mxu0 0
    %1051 = vmatpush2.bf16.msra.mxu0 0
    %1052 = vmatprep.subr.bf16.mxu0 0
    %1053 = vmatpush2.bf16.msra.mxu0 0
    %1054 = vmatprep.subr.bf16.mxu0 0
    %1055 = vmatpush2.bf16.msra.mxu0 0
    %1056 = vmatprep.subr.bf16.mxu0 0
    %1057 = vmatpush2.bf16.msra.mxu0 0
    %1058 = vmatprep.subr.bf16.mxu0 0
    %1059 = vmatpush2.bf16.msra.mxu0 0
    %1060 = vmatprep.subr.bf16.mxu0 0
    %1061 = vmatpush2.bf16.msra.mxu0 0
    %1062 = vmatprep.subr.bf16.mxu0 0
    %1063 = vmatpush2.bf16.msra.mxu0 0
    %1064 = vmatprep.subr.bf16.mxu0 0
    %1065 = vmatpush2.bf16.msra.mxu0 0
    %1066 = vmatprep.mubr.bf16.mxu0 0
    %1067 = vmatmul.mubr.bf16.gmra.mxu0 %v1033
    %v1068 = vpop.f32.mrf.mxu0
    %v1069 = vadd.f32 0.0, %v1068
    %v1070 = vpop.f32.mrf.mxu0
    %v1071 = vadd.f32 0.0, %v1070
    %v1072 = vpop.f32.mrf.mxu0
    %v1073 = vpop.f32.mrf.mxu0
    %1074 = vdwg.mxu0
    %1075 = vmatprep.subr.bf16.mxu0 0
    %1076 = vmatpush1.bf16.msra.mxu0 %v197
    %1077 = vmatprep.subr.bf16.mxu0 0
    %1078 = vmatpush1.bf16.msra.mxu0 %v194
    %1079 = vmatprep.subr.bf16.mxu0 0
    %1080 = vmatpush1.bf16.msra.mxu0 %v191
    %1081 = vmatprep.subr.bf16.mxu0 0
    %1082 = vmatpush1.bf16.msra.mxu0 %v188
    %1083 = vmatprep.subr.bf16.mxu0 0
    %1084 = vmatpush1.bf16.msra.mxu0 %v185
    %1085 = vmatprep.subr.bf16.mxu0 0
    %1086 = vmatpush1.bf16.msra.mxu0 %v182
    %1087 = vmatprep.subr.bf16.mxu0 0
    %1088 = vmatpush1.bf16.msra.mxu0 %v179
    %1089 = vmatprep.subr.bf16.mxu0 0
    %1090 = vmatpush1.bf16.msra.mxu0 %v176
    %1091 = vmatprep.subr.bf16.mxu0 0
    %1092 = vmatpush2.bf16.msra.mxu0 0
    %1093 = vmatprep.subr.bf16.mxu0 0
    %1094 = vmatpush2.bf16.msra.mxu0 0
    %1095 = vmatprep.subr.bf16.mxu0 0
    %1096 = vmatpush2.bf16.msra.mxu0 0
    %1097 = vmatprep.subr.bf16.mxu0 0
    %1098 = vmatpush2.bf16.msra.mxu0 0
    %1099 = vmatprep.subr.bf16.mxu0 0
    %1100 = vmatpush2.bf16.msra.mxu0 0
    %1101 = vmatprep.subr.bf16.mxu0 0
    %1102 = vmatpush2.bf16.msra.mxu0 0
    %1103 = vmatprep.subr.bf16.mxu0 0
    %1104 = vmatpush2.bf16.msra.mxu0 0
    %1105 = vmatprep.subr.bf16.mxu0 0
    %1106 = vmatpush2.bf16.msra.mxu0 0
    %1107 = vmatprep.mubr.bf16.mxu0 0
    %1108 = vmatmul.mubr.bf16.gmra.mxu0 %v1033
    %v1109 = vpop.f32.mrf.mxu0
    %v1110 = vadd.f32 0.0, %v1109
    %v1111 = vpop.f32.mrf.mxu0
    %v1112 = vpop.f32.mrf.mxu0
    %v1113 = vpop.f32.mrf.mxu0
    %1114 = vdwg.mxu0
    %v1115 = vadd.f32 %v1032, %v1069
    %v1116 = vxor.u32 %v1115, 2147483648
    %v1117 = vmul.f32 %v1116, 1.442695
    %v1118 = vpow.pop %v1117
    %v1119 = vadd.f32 %v1118, 1.0
    %v1120 = vrcp.pop %v1119
    %v1121 = vmul.f32 1.0, %v1120
    %v1123 = vrot.slane %v1032, 2
    %v1125 = vadd.f32 %v1123, %v1071
    %v1126 = vxor.u32 %v1125, 2147483648
    %v1127 = vmul.f32 %v1126, 1.442695
    %v1128 = vpow.pop %v1127
    %v1129 = vadd.f32 %v1128, 1.0
    %v1130 = vrcp.pop %v1129
    %v1131 = vmul.f32 1.0, %v1130
    %v1132 = vadd.f32 %v1110, %v86
    %v1133 = vmul.f32 %v1121, %v1132
    %v1134 = vrot.slane %v1032, 4
    %v1136 = vadd.f32 %v1134, %v1133
    %v1137 = vtanh.pop %v1136
    %v1138 = vsub.f32 %v1024, %v1137
    %v1139 = vmul.f32 %v1131, %v1138
    %v1140 = vadd.f32 %v1137, %v1139
    %s1141 = smul.u32 %s1028, 2
    %s1142 = scalar_lea.vmem [#allocation8], %s1141
    %1143 = vst [vmem:[%s1142] sm:$0x3] %v1140
    %1144 = vst [vmem:[#allocation2] sm:$0x3] %v1140
    // Predicated region
    $region26: #{tpu_custom_call.1} parent=1 // pred_check
      _
    $region27: #{tpu_custom_call.1} parent=1 // pred_check_branch
      %1146 = sbr.rel (0) target = $region29
    $region28: #{tpu_custom_call.1} parent=1 // pred_region
      %s1148 = ssub.s32 256, 256
      %1149 = vsyncadd [#allocation5], %s1148
      %s1150 = sshll.u32 [#allocation8], 4
      %s1151 = int_to_ptr.vmem [resolvable:$true] %s1150
      %1156 = dma.vmem_to_hbm [thread:$0]  %s1151, 256, %s3, [#allocation5], 32, 32, 2
    $region29: #{tpu_custom_call.1} parent=1 // pred_fallthru
      _
    // Predicated region
    $region30: #{tpu_custom_call.1} parent=1 // pred_check
      _
    $region31: #{tpu_custom_call.1} parent=1 // pred_check_branch
      %1158 = sbr.rel (0) target = $region33
    $region32: #{tpu_custom_call.1} parent=1 // pred_region
      %1159 = dma.done [#allocation5], 256
    $region33: #{tpu_custom_call.1} parent=1 // pred_fallthru
      _
    %1160 = vsyncpa [#allocation4], 1
    %1161 = vsyncpa [#allocation7], 1
    %1162 = vsyncpa [#allocation5], 1

</llo_original>
